<compile_context>
chip_gen: v6e
topology: v6e:2x2x1
jax: 0.10.0
libtpu: 0.0.40
codegen_flags: <defaults>
</compile_context>

<pallas_src>
import jax
import jax.numpy as jnp
from jax.experimental import pallas as pl
from jax.experimental.pallas import tpu as pltpu

TRAJ_LENGTH = 1000       # fixed by nn.Linear(1000, hidden_dim) in the module
K_PAD = 1024             # padded reduction dim (1000 -> 1024) for clean MXU passes
HIDDEN_DIM = 2048        # self.hidden_dim
NUM_CLASSES = 4
HIDDEN_TILE = 1024       # tile over the hidden (2048) reduction axis -> 2 steps
MAX_BATCH_TILE = 256     # batch tile if b_dim grows large (multiple of 8)


def _mlp_kernel(x_ref, w1_ref, b1_ref, w2_ref, b2_ref, o_ref):
    """Grid = (batch_tiles, hidden_tiles).  For one hidden tile j:

        h_j    = SiLU(x @ W1[:, j] + b1[j])          (TILE_B, HIDDEN_TILE)
        o_ref += h_j @ W2[j, :]                       (TILE_B, NUM_CLASSES)

    o_ref is resident across j (constant block index), so it doubles as the
    f32 accumulator; it is seeded with b2 at j == 0.
    """
    j = pl.program_id(1)

    @pl.when(j == 0)
    def _():
        o_ref[...] = jnp.broadcast_to(b2_ref[...], o_ref.shape)

    # bf16 x bf16 -> f32 accumulation on the MXU.
    h = jnp.dot(x_ref[...], w1_ref[...], preferred_element_type=jnp.float32)
    h = h + b1_ref[...]
    h = h * jax.nn.sigmoid(h)  # SiLU, in f32 (works on v5e too: no bf16 VPU/EUP needed)

    o_ref[...] += jnp.dot(h, w2_ref[...], preferred_element_type=jnp.float32)


@jax.jit
def new_temporal_classifier_forward(x, time, w1, b1, w2, b2):
    """x: [B, 1000, transition] f32, time: [B] (unused by the torch forward)."""
    del time  # the PyTorch forward never uses `time`
    b_dim = x.shape[0]
    x0 = x[:, :, 0]  # [B, 1000] — glue slicing outside the kernel

    # Zero-pad K 1000 -> 1024 and cast the streamed operands to bf16.
    # (In production, pad/cast W1 once offline; here it is per-call glue.)
    x0p = jnp.pad(x0, ((0, 0), (0, K_PAD - TRAJ_LENGTH))).astype(jnp.bfloat16)
    w1p = jnp.pad(w1, ((0, K_PAD - TRAJ_LENGTH), (0, 0))).astype(jnp.bfloat16)

    tile_b = b_dim if b_dim <= MAX_BATCH_TILE else MAX_BATCH_TILE
    grid = (pl.cdiv(b_dim, tile_b), HIDDEN_DIM // HIDDEN_TILE)

    bytes_accessed = (x0p.size * 2 + w1p.size * 2 + b1.size * 4
                      + w2.size * 4 + b2.size * 4 + b_dim * NUM_CLASSES * 4)
    cost = pl.CostEstimate(
        flops=2 * b_dim * K_PAD * HIDDEN_DIM + 2 * b_dim * HIDDEN_DIM * NUM_CLASSES,
        transcendentals=b_dim * HIDDEN_DIM,
        bytes_accessed=bytes_accessed,
    )

    out = pl.pallas_call(
        _mlp_kernel,
        out_shape=jax.ShapeDtypeStruct((b_dim, NUM_CLASSES), jnp.float32),
        grid_spec=pltpu.PrefetchScalarGridSpec(
            num_scalar_prefetch=0,
            grid=grid,
            in_specs=[
                # x0 tile: [TILE_B, 1024] bf16 (resident across hidden axis)
                pl.BlockSpec((tile_b, K_PAD), lambda i, j: (i, 0)),
                # W1 tile: [1024, HIDDEN_TILE] bf16 (2 MB tile, double-buffered)
                pl.BlockSpec((K_PAD, HIDDEN_TILE), lambda i, j: (0, j)),
                # b1 tile: [1, HIDDEN_TILE] f32
                pl.BlockSpec((1, HIDDEN_TILE), lambda i, j: (0, j)),
                # W2 tile: [HIDDEN_TILE, NUM_CLASSES] f32
                pl.BlockSpec((HIDDEN_TILE, NUM_CLASSES), lambda i, j: (j, 0)),
                # b2: full [1, NUM_CLASSES] f32
                pl.BlockSpec((1, NUM_CLASSES), lambda i, j: (0, 0)),
            ],
            # Output block is constant across j -> stays resident in VMEM and
            # acts as the f32 accumulator (no scratch needed).
            out_specs=pl.BlockSpec((tile_b, NUM_CLASSES), lambda i, j: (i, 0)),
        ),
        compiler_params=pltpu.CompilerParams(
            dimension_semantics=("parallel", "arbitrary"),  # batch ∥, hidden = reduction
        ),
        cost_estimate=cost,
    )(x0p, w1p, b1, w2, b2)
    return out


def _init_params(key):
    """Deterministic init matching nn.Linear shapes (uniform, like PyTorch)."""
    k1, k2, k3, k4 = jax.random.split(key, 4)
    lim1 = 1.0 / (TRAJ_LENGTH ** 0.5)
    lim2 = 1.0 / (HIDDEN_DIM ** 0.5)
    w1 = jax.random.uniform(k1, (TRAJ_LENGTH, HIDDEN_DIM), jnp.float32, -lim1, lim1)
    b1 = jax.random.uniform(k2, (1, HIDDEN_DIM), jnp.float32, -lim1, lim1)
    w2 = jax.random.uniform(k3, (HIDDEN_DIM, NUM_CLASSES), jnp.float32, -lim2, lim2)
    b2 = jax.random.uniform(k4, (1, NUM_CLASSES), jnp.float32, -lim2, lim2)
    return w1, b1, w2, b2


if __name__ == "__main__":
    key = jax.random.PRNGKey(0)
    kp, kx, kt = jax.random.split(key, 3)

    batch = 2
    transition = 4  # trailing dim of x; only channel 0 is used by forward
    x = jax.random.normal(kx, (batch, TRAJ_LENGTH, transition), jnp.float32)
    time = jax.random.normal(kt, (batch,), jnp.float32)  # unused by forward

    w1, b1, w2, b2 = _init_params(kp)

    out = jax.block_until_ready(
        new_temporal_classifier_forward(x, time, w1, b1, w2, b2))
    assert out.shape == (batch, NUM_CLASSES)

    # Reference with matched streaming precision (x0/W1 rounded to bf16, f32
    # accumulation) — checks kernel arithmetic; bf16 streaming is an intended
    # precision tradeoff vs. the pure-f32 module.
    x0 = x[:, :, 0]
    x0_b = x0.astype(jnp.bfloat16).astype(jnp.float32)
    w1_b = w1.astype(jnp.bfloat16).astype(jnp.float32)
    h_ref = x0_b @ w1_b + b1
    h_ref = h_ref * jax.nn.sigmoid(h_ref)
    ref = h_ref @ w2 + b2
    assert jnp.allclose(out, ref, atol=2e-2, rtol=2e-2), "mismatch vs reference"

    # NOTE: ResidualBlock / time_mlp / residual convs are constructed in
    # __init__ but never reached by NewTemporalClassifier.forward, so they are
    # intentionally not implemented.
    print("KERNEL_OK")
</pallas_src>

<mosaic_0001>
module attributes {stable_mosaic.version = 11 : i64} {
  func.func @_mlp_kernel(%arg0: i32, %arg1: i32, %arg2: memref<2x1024xbf16, #tpu.memory_space<vmem>>, %arg3: memref<1024x1024xbf16, #tpu.memory_space<vmem>>, %arg4: memref<1x1024xf32, #tpu.memory_space<vmem>>, %arg5: memref<1024x4xf32, #tpu.memory_space<vmem>>, %arg6: memref<1x4xf32, #tpu.memory_space<vmem>>, %arg7: memref<2x4xf32, #tpu.memory_space<vmem>>) attributes {dimension_semantics = [#tpu.dimension_semantics<parallel>, #tpu.dimension_semantics<arbitrary>], iteration_bounds = array<i64: 1, 2>, scalar_prefetch = 0 : i64, scratch_operands = 0 : i64, tpu.core_type = #tpu.core_type<tc>, window_params = [{transform_indices = @transform_0, window_bounds = array<i64: 2, 1024>}, {transform_indices = @transform_1, window_bounds = array<i64: 1024, 1024>}, {transform_indices = @transform_2, window_bounds = array<i64: 1, 1024>}, {transform_indices = @transform_3, window_bounds = array<i64: 1024, 4>}, {pipeline_mode = #tpu.pipeline_mode<synchronous>, transform_indices = @transform_4, window_bounds = array<i64: 1, 4>}, {transform_indices = @transform_5, window_bounds = array<i64: 2, 4>}]} {
    %c0_i32 = arith.constant 0 : i32
    %0 = arith.cmpi eq, %arg1, %c0_i32 : i32
    %1 = arith.extui %0 : i1 to i32
    %c0_i32_0 = arith.constant 0 : i32
    %2 = arith.cmpi ne, %1, %c0_i32_0 : i32
    scf.if %2 {
      %c0_14 = arith.constant 0 : index
      %c0_15 = arith.constant 0 : index
      %20 = vector.load %arg6[%c0_14, %c0_15] : memref<1x4xf32, #tpu.memory_space<vmem>>, vector<1x4xf32>
      %21 = vector.shape_cast %20 : vector<1x4xf32> to vector<1x4xf32>
      %22 = vector.broadcast %21 : vector<1x4xf32> to vector<2x4xf32>
      %c0_16 = arith.constant 0 : index
      %c0_17 = arith.constant 0 : index
      %23 = vector.load %arg7[%c0_16, %c0_17] : memref<2x4xf32, #tpu.memory_space<vmem>>, vector<2x4xf32>
      tpu.vector_store %arg7[%c0_16, %c0_17], %22 {strides = array<i32>} : memref<2x4xf32, #tpu.memory_space<vmem>>, vector<2x4xf32>,
    } else {
    }
    %c0 = arith.constant 0 : index
    %c0_1 = arith.constant 0 : index
    %3 = vector.load %arg2[%c0, %c0_1] : memref<2x1024xbf16, #tpu.memory_space<vmem>>, vector<2x1024xbf16>
    %c0_2 = arith.constant 0 : index
    %c0_3 = arith.constant 0 : index
    %4 = vector.load %arg3[%c0_2, %c0_3] : memref<1024x1024xbf16, #tpu.memory_space<vmem>>, vector<1024x1024xbf16>
    %cst = arith.constant dense<0.000000e+00> : vector<2x1024xf32>
    %5 = tpu.matmul %3, %4, %cst {dimension_numbers = #tpu.dot_dimension_numbers<[1], [0], [0], [1], [0, 0, 1, 1], [], []>} : vector<2x1024xbf16>, vector<1024x1024xbf16>, vector<2x1024xf32> -> vector<2x1024xf32>
    %c0_4 = arith.constant 0 : index
    %c0_5 = arith.constant 0 : index
    %6 = vector.load %arg4[%c0_4, %c0_5] : memref<1x1024xf32, #tpu.memory_space<vmem>>, vector<1x1024xf32>
    %7 = vector.broadcast %6 : vector<1x1024xf32> to vector<2x1024xf32>
    %8 = arith.addf %5, %7 : vector<2x1024xf32>
    %9 = arith.negf %8 : vector<2x1024xf32>
    %10 = math.exp %9 : vector<2x1024xf32>
    %cst_6 = arith.constant 1.000000e+00 : f32
    %11 = vector.broadcast %cst_6 : f32 to vector<2x1024xf32>
    %12 = arith.addf %11, %10 : vector<2x1024xf32>
    %13 = arith.divf %11, %12 : vector<2x1024xf32>
    %14 = arith.mulf %8, %13 : vector<2x1024xf32>
    %c0_7 = arith.constant 0 : index
    %c0_8 = arith.constant 0 : index
    %15 = vector.load %arg7[%c0_7, %c0_8] : memref<2x4xf32, #tpu.memory_space<vmem>>, vector<2x4xf32>
    %c0_9 = arith.constant 0 : index
    %c0_10 = arith.constant 0 : index
    %16 = vector.load %arg5[%c0_9, %c0_10] : memref<1024x4xf32, #tpu.memory_space<vmem>>, vector<1024x4xf32>
    %cst_11 = arith.constant dense<0.000000e+00> : vector<2x4xf32>
    %17 = tpu.matmul %14, %16, %cst_11 {dimension_numbers = #tpu.dot_dimension_numbers<[1], [0], [0], [1], [0, 0, 1, 1], [], []>} : vector<2x1024xf32>, vector<1024x4xf32>, vector<2x4xf32> -> vector<2x4xf32>
    %18 = arith.addf %15, %17 : vector<2x4xf32>
    %c0_12 = arith.constant 0 : index
    %c0_13 = arith.constant 0 : index
    %19 = vector.load %arg7[%c0_12, %c0_13] : memref<2x4xf32, #tpu.memory_space<vmem>>, vector<2x4xf32>
    tpu.vector_store %arg7[%c0_12, %c0_13], %18 {strides = array<i32>} : memref<2x4xf32, #tpu.memory_space<vmem>>, vector<2x4xf32>,
    return
  }
  func.func @transform_0(%arg0: i32, %arg1: i32) -> (i32, i32) {
    %c0_i32 = arith.constant 0 : i32
    %c0_i32_0 = arith.constant 0 : i32
    return %arg0, %c0_i32 : i32, i32
  }
  func.func @transform_1(%arg0: i32, %arg1: i32) -> (i32, i32) {
    %c0_i32 = arith.constant 0 : i32
    %c0_i32_0 = arith.constant 0 : i32
    return %c0_i32, %arg1 : i32, i32
  }
  func.func @transform_2(%arg0: i32, %arg1: i32) -> (i32, i32) {
    %c0_i32 = arith.constant 0 : i32
    %c0_i32_0 = arith.constant 0 : i32
    return %c0_i32, %arg1 : i32, i32
  }
  func.func @transform_3(%arg0: i32, %arg1: i32) -> (i32, i32) {
    %c0_i32 = arith.constant 0 : i32
    %c0_i32_0 = arith.constant 0 : i32
    return %arg1, %c0_i32 : i32, i32
  }
  func.func @transform_4(%arg0: i32, %arg1: i32) -> (i32, i32) {
    %c0_i32 = arith.constant 0 : i32
    %c0_i32_0 = arith.constant 0 : i32
    %c0_i32_1 = arith.constant 0 : i32
    return %c0_i32, %c0_i32_0 : i32, i32
  }
  func.func @transform_5(%arg0: i32, %arg1: i32) -> (i32, i32) {
    %c0_i32 = arith.constant 0 : i32
    %c0_i32_0 = arith.constant 0 : i32
    return %arg0, %c0_i32 : i32, i32
  }
}

</mosaic_0001>

<llo_original>
// kernel: new_temporal_classifier_forward.1
$region0: #{new_temporal_classifier_forward.1}
  #allocation0 [shape = 'u32[]', space=smem, size = 0x4, offset = 0x4, fixed_abs, tag = 'smem constant byte address 0x4 - core index']
  #allocation1 [shape = 'u32[144,128]{1,0:T(1,128)}', space=vmem, size = 0x12000, scoped, tag = 'internal scratch']
  %s0 = inlined_call_operand.vmem [shape: bf16[2,1024], index: 0, kind: input, shape index: {}]
  %s1 = inlined_call_operand.vmem [shape: bf16[1024,2048], index: 1, kind: input, shape index: {}]
  %s2 = inlined_call_operand.vmem [shape: f32[1,2048], index: 2, kind: input, shape index: {}]
  %s3 = inlined_call_operand.vmem [shape: f32[2048,4], index: 3, kind: input, shape index: {}]
  %s4 = inlined_call_operand.vmem [shape: f32[1,4], index: 4, kind: input, shape index: {}]
  %s5 = inlined_call_operand.hbm [shape: f32[2,4], index: 5, kind: output, shape index: {}]
  %s6 = sld [smem:[#allocation0]]
  $region80: #{new_temporal_classifier_forward.1} parent=0
    _
  %s8 = ssub.s32 1, %s6
  %s9 = scalar_select 0, %s8, %s6
  $region1: #{new_temporal_classifier_forward.1} parent=0
    #allocation2 [shape = 'u8[4194304]{0}', space=vmem, size = 0x400000, scoped, tag = 'input window, operand 1']
    #allocation3 [shape = 'u8[1024]{0}', space=vmem, size = 0x400, scoped, tag = 'output window, operand 0, single buffered']
    #allocation4 [shape = 's32[2]{0}', space=sflag, size = 0x8, scoped, tag = 'scoped memory for new_temporal_classifier_forward.1']
    %10 = vsyncpa [#allocation4], 0
    loop: start=0, step=1, limit=4
    $region2: #{new_temporal_classifier_forward.1} parent=1 // loop_pre_header
      _
    $region3: #{new_temporal_classifier_forward.1} parent=1 // loop_header
      %s12 = sphi 0, %s16
      %p13 = scmp.ge.s32.totalorder %s12, 4
      %s19 = sphi 0, %s31
      %s20 = sphi 0, %s27
      %s21 = sphi 0, %s19
      %s22 = sphi 0, %s20
      %s23 = sphi 0, %s21
      %s24 = sphi 0, %s22
      %s34 = sphi 0, %s36
      %s37 = sphi 0, %s34
      %s38 = sphi 0, %s37
      %s54 = sphi 0, %s38
      %s60 = sphi 0, %s62
      %s63 = sphi 0, %s60
      %s64 = sphi 0, %s63
      %s80 = sphi 0, %s64
      %s86 = sphi 0, %s88
      %s89 = sphi 0, %s86
      %s90 = sphi 0, %s89
      %s106 = sphi 0, %s90
      %s112 = sphi 0, %s114
      %s115 = sphi 0, %s112
      %s116 = sphi 0, %s115
      %s132 = sphi 0, %s116
      %s136 = sphi 0, %s136
      %s138 = sphi 0, %s136
      %s139 = sphi 0, %s138
      %s153 = sphi 0, %s139
      %s159 = sphi 0, %s161
      %s162 = sphi 0, %s159
      %s163 = sphi 0, %s162
      %s179 = sphi 0, %s163
    $region4: #{new_temporal_classifier_forward.1} parent=1 // loop_header_branch
      %15 = sbr.rel (%p13) target = $region8
    $region5: #{new_temporal_classifier_forward.1} parent=1 // loop_body
      %s17 = ssub.s32 %s12, 1
      %s18 = ssub.s32 %s12, 2
      %s25 = sadd.s32 1, %s20
      %p26 = scmp.ge.s32.totalorder %s25, 2
      %s27 = scalar_select %p26, 0, %s25
      %s28 = sadd.s32 1, %s19
      %s29 = scalar_select %p26, %s28, %s19
      %p30 = scmp.ge.s32.totalorder %s29, 1
      %s31 = scalar_select %p30, 0, %s29
      %s32 = ssub.s32 %s19, %s31
      %p33 = scmp.eq.s32.totalorder %s32, 0
      %s35 = sadd.s32 %s34, 1
      %s36 = scalar_select %p33, %s34, %s35
      %p39 = pneg %p33
      %p40 = scmp.eq.s32.totalorder %s12, 1
      %p41 = por %p39, %p40
      %p42 = scmp.ne.s32.totalorder %s34, %s37
      %p43 = scmp.eq.s32.totalorder %s12, 0
      %p44 = por %p42, %p43
      %p45 = scmp.ne.s32.totalorder %s34, %s37
      %p46 = scmp.eq.s32.totalorder %s17, 1
      %p47 = por %p45, %p46
      %p48 = scmp.ne.s32.totalorder %s37, %s38
      %p49 = scmp.eq.s32.totalorder %s17, 0
      %p50 = por %p48, %p49
      %p51 = scmp.ne.s32.totalorder %s37, %s38
      %p52 = scmp.eq.s32.totalorder %s18, 1
      %p53 = por %p51, %p52
      %p55 = scmp.ne.s32.totalorder %s38, %s54
      %p56 = scmp.eq.s32.totalorder %s18, 0
      %p57 = por %p55, %p56
      %s58 = ssub.s32 %s20, %s27
      %p59 = scmp.eq.s32.totalorder %s58, 0
      %s61 = sadd.s32 %s60, 1
      %s62 = scalar_select %p59, %s60, %s61
      %p65 = pneg %p59
      %p66 = scmp.eq.s32.totalorder %s12, 1
      %p67 = por %p65, %p66
      %p68 = scmp.ne.s32.totalorder %s60, %s63
      %p69 = scmp.eq.s32.totalorder %s12, 0
      %p70 = por %p68, %p69
      %p71 = scmp.ne.s32.totalorder %s60, %s63
      %p72 = scmp.eq.s32.totalorder %s17, 1
      %p73 = por %p71, %p72
      %p74 = scmp.ne.s32.totalorder %s63, %s64
      %p75 = scmp.eq.s32.totalorder %s17, 0
      %p76 = por %p74, %p75
      %p77 = scmp.ne.s32.totalorder %s63, %s64
      %p78 = scmp.eq.s32.totalorder %s18, 1
      %p79 = por %p77, %p78
      %p81 = scmp.ne.s32.totalorder %s64, %s80
      %p82 = scmp.eq.s32.totalorder %s18, 0
      %p83 = por %p81, %p82
      %s84 = ssub.s32 %s20, %s27
      %p85 = scmp.eq.s32.totalorder %s84, 0
      %s87 = sadd.s32 %s86, 1
      %s88 = scalar_select %p85, %s86, %s87
      %p91 = pneg %p85
      %p92 = scmp.eq.s32.totalorder %s12, 1
      %p93 = por %p91, %p92
      %p94 = scmp.ne.s32.totalorder %s86, %s89
      %p95 = scmp.eq.s32.totalorder %s12, 0
      %p96 = por %p94, %p95
      %p97 = scmp.ne.s32.totalorder %s86, %s89
      %p98 = scmp.eq.s32.totalorder %s17, 1
      %p99 = por %p97, %p98
      %p100 = scmp.ne.s32.totalorder %s89, %s90
      %p101 = scmp.eq.s32.totalorder %s17, 0
      %p102 = por %p100, %p101
      %p103 = scmp.ne.s32.totalorder %s89, %s90
      %p104 = scmp.eq.s32.totalorder %s18, 1
      %p105 = por %p103, %p104
      %p107 = scmp.ne.s32.totalorder %s90, %s106
      %p108 = scmp.eq.s32.totalorder %s18, 0
      %p109 = por %p107, %p108
      %s110 = ssub.s32 %s20, %s27
      %p111 = scmp.eq.s32.totalorder %s110, 0
      %s113 = sadd.s32 %s112, 1
      %s114 = scalar_select %p111, %s112, %s113
      %p117 = pneg %p111
      %p118 = scmp.eq.s32.totalorder %s12, 1
      %p119 = por %p117, %p118
      %p120 = scmp.ne.s32.totalorder %s112, %s115
      %p121 = scmp.eq.s32.totalorder %s12, 0
      %p122 = por %p120, %p121
      %p123 = scmp.ne.s32.totalorder %s112, %s115
      %p124 = scmp.eq.s32.totalorder %s17, 1
      %p125 = por %p123, %p124
      %p126 = scmp.ne.s32.totalorder %s115, %s116
      %p127 = scmp.eq.s32.totalorder %s17, 0
      %p128 = por %p126, %p127
      %p129 = scmp.ne.s32.totalorder %s115, %s116
      %p130 = scmp.eq.s32.totalorder %s18, 1
      %p131 = por %p129, %p130
      %p133 = scmp.ne.s32.totalorder %s116, %s132
      %p134 = scmp.eq.s32.totalorder %s18, 0
      %p135 = por %p133, %p134
      %s137 = sadd.s32 %s136, 1
      %p140 = scmp.eq.s32.totalorder %s12, 1
      %p141 = scmp.ne.s32.totalorder %s136, %s138
      %p142 = scmp.eq.s32.totalorder %s12, 0
      %p143 = por %p141, %p142
      %p144 = scmp.ne.s32.totalorder %s136, %s138
      %p145 = scmp.eq.s32.totalorder %s17, 1
      %p146 = por %p144, %p145
      %p147 = scmp.ne.s32.totalorder %s138, %s139
      %p148 = scmp.eq.s32.totalorder %s17, 0
      %p149 = por %p147, %p148
      %p150 = scmp.ne.s32.totalorder %s138, %s139
      %p151 = scmp.eq.s32.totalorder %s18, 1
      %p152 = por %p150, %p151
      %p154 = scmp.ne.s32.totalorder %s139, %s153
      %p155 = scmp.eq.s32.totalorder %s18, 0
      %p156 = por %p154, %p155
      %s157 = ssub.s32 %s19, %s31
      %p158 = scmp.eq.s32.totalorder %s157, 0
      %s160 = sadd.s32 %s159, 1
      %s161 = scalar_select %p158, %s159, %s160
      %p164 = pneg %p158
      %p165 = scmp.eq.s32.totalorder %s12, 1
      %p166 = por %p164, %p165
      %p167 = scmp.ne.s32.totalorder %s159, %s162
      %p168 = scmp.eq.s32.totalorder %s12, 0
      %p169 = por %p167, %p168
      %p170 = scmp.ne.s32.totalorder %s159, %s162
      %p171 = scmp.eq.s32.totalorder %s17, 1
      %p172 = por %p170, %p171
      %p173 = scmp.ne.s32.totalorder %s162, %s163
      %p174 = scmp.eq.s32.totalorder %s17, 0
      %p175 = por %p173, %p174
      %p176 = scmp.ne.s32.totalorder %s162, %s163
      %p177 = scmp.eq.s32.totalorder %s18, 1
      %p178 = por %p176, %p177
      %p180 = scmp.ne.s32.totalorder %s163, %s179
      %p181 = scmp.eq.s32.totalorder %s18, 0
      %p182 = por %p180, %p181
      %p183 = scmp.le.s32.totalorder 1, %s12
      %p184 = scmp.lt.s32.totalorder %s12, 3
      %p185 = pnand %p183, %p184
      %p186 = pneg %p185
      // Predicated region
      $region9: #{new_temporal_classifier_forward.1} parent=5 // pred_check
        _
      $region10: #{new_temporal_classifier_forward.1} parent=5 // pred_check_branch
        %188 = sbr.rel (%p185) target = $region12
      $region11: #{new_temporal_classifier_forward.1} parent=5 // pred_region
        %s189 = ssub.s32 %s12, 1
        // Predicated region
        $region13: #{new_temporal_classifier_forward.1} parent=11 // pred_check
          %p190 = pneg %p50
        $region14: #{new_temporal_classifier_forward.1} parent=11 // pred_check_branch
          %192 = sbr.rel (%p190) target = $region16
        $region15: #{new_temporal_classifier_forward.1} parent=11 // pred_region
          %p193 = scmp.lt.s32.totalorder %s21, 0
          %s194 = scalar_select %p193, %s21, 0
          %s195 = smul.addr %s194, 8
          %s196 = scalar_lea.vmem %s0, %s195
        $region16: #{new_temporal_classifier_forward.1} parent=11 // pred_fallthru
          _
        // Predicated region
        $region17: #{new_temporal_classifier_forward.1} parent=11 // pred_check
          %p197 = pneg %p149
        $region18: #{new_temporal_classifier_forward.1} parent=11 // pred_check_branch
          %199 = sbr.rel (%p197) target = $region20
        $region19: #{new_temporal_classifier_forward.1} parent=11 // pred_region
          _
        $region20: #{new_temporal_classifier_forward.1} parent=11 // pred_fallthru
          _
      $region12: #{new_temporal_classifier_forward.1} parent=5 // pred_fallthru
        _
      %p200 = scmp.lt.s32.totalorder %s12, 2
      // Predicated region
      $region21: #{new_temporal_classifier_forward.1} parent=5 // pred_check
        %p201 = pneg %p200
      $region22: #{new_temporal_classifier_forward.1} parent=5 // pred_check_branch
        %203 = sbr.rel (%p201) target = $region24
      $region23: #{new_temporal_classifier_forward.1} parent=5 // pred_region
        // Predicated region
        $region25: #{new_temporal_classifier_forward.1} parent=23 // pred_check
          %p204 = pneg %p70
        $region26: #{new_temporal_classifier_forward.1} parent=23 // pred_check_branch
          %206 = sbr.rel (%p204) target = $region28
        $region27: #{new_temporal_classifier_forward.1} parent=23 // pred_region
          %s207 = sand.u32 %s60, 1
          %s208 = sand.u32 %s60, 1
          %s209 = smul.addr %s208, 4096
          %s210 = scalar_lea.vmem [#allocation2], %s209
          %s211 = smul.u32 8, %s20
          %s212 = smul.addr %s211, 4
          %s213 = scalar_lea.vmem %s1, %s212
          // Predicated region
          $region29: #{new_temporal_classifier_forward.1} parent=27 // pred_check
            _
          $region30: #{new_temporal_classifier_forward.1} parent=27 // pred_check_branch
            %215 = sbr.rel (0) target = $region32
          $region31: #{new_temporal_classifier_forward.1} parent=27 // pred_region
            // Predicated region
            $region33: #{new_temporal_classifier_forward.1} parent=31 // pred_check
              _
            $region34: #{new_temporal_classifier_forward.1} parent=31 // pred_check_branch
              %217 = sbr.rel (0) target = $region36
            $region35: #{new_temporal_classifier_forward.1} parent=31 // pred_region
              loop: start=0, step=1, limit=1
              $region37: #{new_temporal_classifier_forward.1} parent=35 // loop_pre_header
                _
              $region38: #{new_temporal_classifier_forward.1} parent=35 // loop_header
                %s219 = sphi 0, %s223
                %p220 = scmp.ge.s32.totalorder %s219, 1
                %s224 = sphi %s213, %s213
                %s225 = sphi %s210, %s210
              $region39: #{new_temporal_classifier_forward.1} parent=35 // loop_header_branch
                %222 = sbr.rel (%p220) target = $region43
              $region40: #{new_temporal_classifier_forward.1} parent=35 // loop_body
                %v226 = vld [vmem:[%s224] sm:$0xff]
                %227 = vst [vmem:[%s225] sm:$0xff] %v226
                %v228 = vld [vmem:[%s224 + $0x8] sm:$0xff]
                %229 = vst [vmem:[%s225 + $0x8] sm:$0xff] %v228
                %v230 = vld [vmem:[%s224 + $0x10] sm:$0xff]
                %231 = vst [vmem:[%s225 + $0x10] sm:$0xff] %v230
                %v232 = vld [vmem:[%s224 + $0x18] sm:$0xff]
                %233 = vst [vmem:[%s225 + $0x18] sm:$0xff] %v232
                %v234 = vld [vmem:[%s224 + $0x40] sm:$0xff]
                %235 = vst [vmem:[%s225 + $0x20] sm:$0xff] %v234
                %v236 = vld [vmem:[%s224 + $0x48] sm:$0xff]
                %237 = vst [vmem:[%s225 + $0x28] sm:$0xff] %v236
                %v238 = vld [vmem:[%s224 + $0x50] sm:$0xff]
                %239 = vst [vmem:[%s225 + $0x30] sm:$0xff] %v238
                %v240 = vld [vmem:[%s224 + $0x58] sm:$0xff]
                %241 = vst [vmem:[%s225 + $0x38] sm:$0xff] %v240
                %v242 = vld [vmem:[%s224 + $0x80] sm:$0xff]
                %243 = vst [vmem:[%s225 + $0x40] sm:$0xff] %v242
                %v244 = vld [vmem:[%s224 + $0x88] sm:$0xff]
                %245 = vst [vmem:[%s225 + $0x48] sm:$0xff] %v244
                %v246 = vld [vmem:[%s224 + $0x90] sm:$0xff]
                %247 = vst [vmem:[%s225 + $0x50] sm:$0xff] %v246
                %v248 = vld [vmem:[%s224 + $0x98] sm:$0xff]
                %249 = vst [vmem:[%s225 + $0x58] sm:$0xff] %v248
                %v250 = vld [vmem:[%s224 + $0xc0] sm:$0xff]
                %251 = vst [vmem:[%s225 + $0x60] sm:$0xff] %v250
                %v252 = vld [vmem:[%s224 + $0xc8] sm:$0xff]
                %253 = vst [vmem:[%s225 + $0x68] sm:$0xff] %v252
                %v254 = vld [vmem:[%s224 + $0xd0] sm:$0xff]
                %255 = vst [vmem:[%s225 + $0x70] sm:$0xff] %v254
                %v256 = vld [vmem:[%s224 + $0xd8] sm:$0xff]
                %257 = vst [vmem:[%s225 + $0x78] sm:$0xff] %v256
                %v258 = vld [vmem:[%s224 + $0x100] sm:$0xff]
                %259 = vst [vmem:[%s225 + $0x80] sm:$0xff] %v258
                %v260 = vld [vmem:[%s224 + $0x108] sm:$0xff]
                %261 = vst [vmem:[%s225 + $0x88] sm:$0xff] %v260
                %v262 = vld [vmem:[%s224 + $0x110] sm:$0xff]
                %263 = vst [vmem:[%s225 + $0x90] sm:$0xff] %v262
                %v264 = vld [vmem:[%s224 + $0x118] sm:$0xff]
                %265 = vst [vmem:[%s225 + $0x98] sm:$0xff] %v264
                %v266 = vld [vmem:[%s224 + $0x140] sm:$0xff]
                %267 = vst [vmem:[%s225 + $0xa0] sm:$0xff] %v266
                %v268 = vld [vmem:[%s224 + $0x148] sm:$0xff]
                %269 = vst [vmem:[%s225 + $0xa8] sm:$0xff] %v268
                %v270 = vld [vmem:[%s224 + $0x150] sm:$0xff]
                %271 = vst [vmem:[%s225 + $0xb0] sm:$0xff] %v270
                %v272 = vld [vmem:[%s224 + $0x158] sm:$0xff]
                %273 = vst [vmem:[%s225 + $0xb8] sm:$0xff] %v272
                %v274 = vld [vmem:[%s224 + $0x180] sm:$0xff]
                %275 = vst [vmem:[%s225 + $0xc0] sm:$0xff] %v274
                %v276 = vld [vmem:[%s224 + $0x188] sm:$0xff]
                %277 = vst [vmem:[%s225 + $0xc8] sm:$0xff] %v276
                %v278 = vld [vmem:[%s224 + $0x190] sm:$0xff]
                %279 = vst [vmem:[%s225 + $0xd0] sm:$0xff] %v278
                %v280 = vld [vmem:[%s224 + $0x198] sm:$0xff]
                %281 = vst [vmem:[%s225 + $0xd8] sm:$0xff] %v280
                %v282 = vld [vmem:[%s224 + $0x1c0] sm:$0xff]
                %283 = vst [vmem:[%s225 + $0xe0] sm:$0xff] %v282
                %v284 = vld [vmem:[%s224 + $0x1c8] sm:$0xff]
                %285 = vst [vmem:[%s225 + $0xe8] sm:$0xff] %v284
                %v286 = vld [vmem:[%s224 + $0x1d0] sm:$0xff]
                %287 = vst [vmem:[%s225 + $0xf0] sm:$0xff] %v286
                %v288 = vld [vmem:[%s224 + $0x1d8] sm:$0xff]
                %289 = vst [vmem:[%s225 + $0xf8] sm:$0xff] %v288
                %v290 = vld [vmem:[%s224 + $0x200] sm:$0xff]
                %291 = vst [vmem:[%s225 + $0x100] sm:$0xff] %v290
                %v292 = vld [vmem:[%s224 + $0x208] sm:$0xff]
                %293 = vst [vmem:[%s225 + $0x108] sm:$0xff] %v292
                %v294 = vld [vmem:[%s224 + $0x210] sm:$0xff]
                %295 = vst [vmem:[%s225 + $0x110] sm:$0xff] %v294
                %v296 = vld [vmem:[%s224 + $0x218] sm:$0xff]
                %297 = vst [vmem:[%s225 + $0x118] sm:$0xff] %v296
                %v298 = vld [vmem:[%s224 + $0x240] sm:$0xff]
                %299 = vst [vmem:[%s225 + $0x120] sm:$0xff] %v298
                %v300 = vld [vmem:[%s224 + $0x248] sm:$0xff]
                %301 = vst [vmem:[%s225 + $0x128] sm:$0xff] %v300
                %v302 = vld [vmem:[%s224 + $0x250] sm:$0xff]
                %303 = vst [vmem:[%s225 + $0x130] sm:$0xff] %v302
                %v304 = vld [vmem:[%s224 + $0x258] sm:$0xff]
                %305 = vst [vmem:[%s225 + $0x138] sm:$0xff] %v304
                %v306 = vld [vmem:[%s224 + $0x280] sm:$0xff]
                %307 = vst [vmem:[%s225 + $0x140] sm:$0xff] %v306
                %v308 = vld [vmem:[%s224 + $0x288] sm:$0xff]
                %309 = vst [vmem:[%s225 + $0x148] sm:$0xff] %v308
                %v310 = vld [vmem:[%s224 + $0x290] sm:$0xff]
                %311 = vst [vmem:[%s225 + $0x150] sm:$0xff] %v310
                %v312 = vld [vmem:[%s224 + $0x298] sm:$0xff]
                %313 = vst [vmem:[%s225 + $0x158] sm:$0xff] %v312
                %v314 = vld [vmem:[%s224 + $0x2c0] sm:$0xff]
                %315 = vst [vmem:[%s225 + $0x160] sm:$0xff] %v314
                %v316 = vld [vmem:[%s224 + $0x2c8] sm:$0xff]
                %317 = vst [vmem:[%s225 + $0x168] sm:$0xff] %v316
                %v318 = vld [vmem:[%s224 + $0x2d0] sm:$0xff]
                %319 = vst [vmem:[%s225 + $0x170] sm:$0xff] %v318
                %v320 = vld [vmem:[%s224 + $0x2d8] sm:$0xff]
                %321 = vst [vmem:[%s225 + $0x178] sm:$0xff] %v320
                %v322 = vld [vmem:[%s224 + $0x300] sm:$0xff]
                %323 = vst [vmem:[%s225 + $0x180] sm:$0xff] %v322
                %v324 = vld [vmem:[%s224 + $0x308] sm:$0xff]
                %325 = vst [vmem:[%s225 + $0x188] sm:$0xff] %v324
                %v326 = vld [vmem:[%s224 + $0x310] sm:$0xff]
                %327 = vst [vmem:[%s225 + $0x190] sm:$0xff] %v326
                %v328 = vld [vmem:[%s224 + $0x318] sm:$0xff]
                %329 = vst [vmem:[%s225 + $0x198] sm:$0xff] %v328
                %v330 = vld [vmem:[%s224 + $0x340] sm:$0xff]
                %331 = vst [vmem:[%s225 + $0x1a0] sm:$0xff] %v330
                %v332 = vld [vmem:[%s224 + $0x348] sm:$0xff]
                %333 = vst [vmem:[%s225 + $0x1a8] sm:$0xff] %v332
                %v334 = vld [vmem:[%s224 + $0x350] sm:$0xff]
                %335 = vst [vmem:[%s225 + $0x1b0] sm:$0xff] %v334
                %v336 = vld [vmem:[%s224 + $0x358] sm:$0xff]
                %337 = vst [vmem:[%s225 + $0x1b8] sm:$0xff] %v336
                %v338 = vld [vmem:[%s224 + $0x380] sm:$0xff]
                %339 = vst [vmem:[%s225 + $0x1c0] sm:$0xff] %v338
                %v340 = vld [vmem:[%s224 + $0x388] sm:$0xff]
                %341 = vst [vmem:[%s225 + $0x1c8] sm:$0xff] %v340
                %v342 = vld [vmem:[%s224 + $0x390] sm:$0xff]
                %343 = vst [vmem:[%s225 + $0x1d0] sm:$0xff] %v342
                %v344 = vld [vmem:[%s224 + $0x398] sm:$0xff]
                %345 = vst [vmem:[%s225 + $0x1d8] sm:$0xff] %v344
                %v346 = vld [vmem:[%s224 + $0x3c0] sm:$0xff]
                %347 = vst [vmem:[%s225 + $0x1e0] sm:$0xff] %v346
                %v348 = vld [vmem:[%s224 + $0x3c8] sm:$0xff]
                %349 = vst [vmem:[%s225 + $0x1e8] sm:$0xff] %v348
                %v350 = vld [vmem:[%s224 + $0x3d0] sm:$0xff]
                %351 = vst [vmem:[%s225 + $0x1f0] sm:$0xff] %v350
                %v352 = vld [vmem:[%s224 + $0x3d8] sm:$0xff]
                %353 = vst [vmem:[%s225 + $0x1f8] sm:$0xff] %v352
                %v354 = vld [vmem:[%s224 + $0x400] sm:$0xff]
                %355 = vst [vmem:[%s225 + $0x200] sm:$0xff] %v354
                %v356 = vld [vmem:[%s224 + $0x408] sm:$0xff]
                %357 = vst [vmem:[%s225 + $0x208] sm:$0xff] %v356
                %v358 = vld [vmem:[%s224 + $0x410] sm:$0xff]
                %359 = vst [vmem:[%s225 + $0x210] sm:$0xff] %v358
                %v360 = vld [vmem:[%s224 + $0x418] sm:$0xff]
                %361 = vst [vmem:[%s225 + $0x218] sm:$0xff] %v360
                %v362 = vld [vmem:[%s224 + $0x440] sm:$0xff]
                %363 = vst [vmem:[%s225 + $0x220] sm:$0xff] %v362
                %v364 = vld [vmem:[%s224 + $0x448] sm:$0xff]
                %365 = vst [vmem:[%s225 + $0x228] sm:$0xff] %v364
                %v366 = vld [vmem:[%s224 + $0x450] sm:$0xff]
                %367 = vst [vmem:[%s225 + $0x230] sm:$0xff] %v366
                %v368 = vld [vmem:[%s224 + $0x458] sm:$0xff]
                %369 = vst [vmem:[%s225 + $0x238] sm:$0xff] %v368
                %v370 = vld [vmem:[%s224 + $0x480] sm:$0xff]
                %371 = vst [vmem:[%s225 + $0x240] sm:$0xff] %v370
                %v372 = vld [vmem:[%s224 + $0x488] sm:$0xff]
                %373 = vst [vmem:[%s225 + $0x248] sm:$0xff] %v372
                %v374 = vld [vmem:[%s224 + $0x490] sm:$0xff]
                %375 = vst [vmem:[%s225 + $0x250] sm:$0xff] %v374
                %v376 = vld [vmem:[%s224 + $0x498] sm:$0xff]
                %377 = vst [vmem:[%s225 + $0x258] sm:$0xff] %v376
                %v378 = vld [vmem:[%s224 + $0x4c0] sm:$0xff]
                %379 = vst [vmem:[%s225 + $0x260] sm:$0xff] %v378
                %v380 = vld [vmem:[%s224 + $0x4c8] sm:$0xff]
                %381 = vst [vmem:[%s225 + $0x268] sm:$0xff] %v380
                %v382 = vld [vmem:[%s224 + $0x4d0] sm:$0xff]
                %383 = vst [vmem:[%s225 + $0x270] sm:$0xff] %v382
                %v384 = vld [vmem:[%s224 + $0x4d8] sm:$0xff]
                %385 = vst [vmem:[%s225 + $0x278] sm:$0xff] %v384
                %v386 = vld [vmem:[%s224 + $0x500] sm:$0xff]
                %387 = vst [vmem:[%s225 + $0x280] sm:$0xff] %v386
                %v388 = vld [vmem:[%s224 + $0x508] sm:$0xff]
                %389 = vst [vmem:[%s225 + $0x288] sm:$0xff] %v388
                %v390 = vld [vmem:[%s224 + $0x510] sm:$0xff]
                %391 = vst [vmem:[%s225 + $0x290] sm:$0xff] %v390
                %v392 = vld [vmem:[%s224 + $0x518] sm:$0xff]
                %393 = vst [vmem:[%s225 + $0x298] sm:$0xff] %v392
                %v394 = vld [vmem:[%s224 + $0x540] sm:$0xff]
                %395 = vst [vmem:[%s225 + $0x2a0] sm:$0xff] %v394
                %v396 = vld [vmem:[%s224 + $0x548] sm:$0xff]
                %397 = vst [vmem:[%s225 + $0x2a8] sm:$0xff] %v396
                %v398 = vld [vmem:[%s224 + $0x550] sm:$0xff]
                %399 = vst [vmem:[%s225 + $0x2b0] sm:$0xff] %v398
                %v400 = vld [vmem:[%s224 + $0x558] sm:$0xff]
                %401 = vst [vmem:[%s225 + $0x2b8] sm:$0xff] %v400
                %v402 = vld [vmem:[%s224 + $0x580] sm:$0xff]
                %403 = vst [vmem:[%s225 + $0x2c0] sm:$0xff] %v402
                %v404 = vld [vmem:[%s224 + $0x588] sm:$0xff]
                %405 = vst [vmem:[%s225 + $0x2c8] sm:$0xff] %v404
                %v406 = vld [vmem:[%s224 + $0x590] sm:$0xff]
                %407 = vst [vmem:[%s225 + $0x2d0] sm:$0xff] %v406
                %v408 = vld [vmem:[%s224 + $0x598] sm:$0xff]
                %409 = vst [vmem:[%s225 + $0x2d8] sm:$0xff] %v408
                %v410 = vld [vmem:[%s224 + $0x5c0] sm:$0xff]
                %411 = vst [vmem:[%s225 + $0x2e0] sm:$0xff] %v410
                %v412 = vld [vmem:[%s224 + $0x5c8] sm:$0xff]
                %413 = vst [vmem:[%s225 + $0x2e8] sm:$0xff] %v412
                %v414 = vld [vmem:[%s224 + $0x5d0] sm:$0xff]
                %415 = vst [vmem:[%s225 + $0x2f0] sm:$0xff] %v414
                %v416 = vld [vmem:[%s224 + $0x5d8] sm:$0xff]
                %417 = vst [vmem:[%s225 + $0x2f8] sm:$0xff] %v416
                %v418 = vld [vmem:[%s224 + $0x600] sm:$0xff]
                %419 = vst [vmem:[%s225 + $0x300] sm:$0xff] %v418
                %v420 = vld [vmem:[%s224 + $0x608] sm:$0xff]
                %421 = vst [vmem:[%s225 + $0x308] sm:$0xff] %v420
                %v422 = vld [vmem:[%s224 + $0x610] sm:$0xff]
                %423 = vst [vmem:[%s225 + $0x310] sm:$0xff] %v422
                %v424 = vld [vmem:[%s224 + $0x618] sm:$0xff]
                %425 = vst [vmem:[%s225 + $0x318] sm:$0xff] %v424
                %v426 = vld [vmem:[%s224 + $0x640] sm:$0xff]
                %427 = vst [vmem:[%s225 + $0x320] sm:$0xff] %v426
                %v428 = vld [vmem:[%s224 + $0x648] sm:$0xff]
                %429 = vst [vmem:[%s225 + $0x328] sm:$0xff] %v428
                %v430 = vld [vmem:[%s224 + $0x650] sm:$0xff]
                %431 = vst [vmem:[%s225 + $0x330] sm:$0xff] %v430
                %v432 = vld [vmem:[%s224 + $0x658] sm:$0xff]
                %433 = vst [vmem:[%s225 + $0x338] sm:$0xff] %v432
                %v434 = vld [vmem:[%s224 + $0x680] sm:$0xff]
                %435 = vst [vmem:[%s225 + $0x340] sm:$0xff] %v434
                %v436 = vld [vmem:[%s224 + $0x688] sm:$0xff]
                %437 = vst [vmem:[%s225 + $0x348] sm:$0xff] %v436
                %v438 = vld [vmem:[%s224 + $0x690] sm:$0xff]
                %439 = vst [vmem:[%s225 + $0x350] sm:$0xff] %v438
                %v440 = vld [vmem:[%s224 + $0x698] sm:$0xff]
                %441 = vst [vmem:[%s225 + $0x358] sm:$0xff] %v440
                %v442 = vld [vmem:[%s224 + $0x6c0] sm:$0xff]
                %443 = vst [vmem:[%s225 + $0x360] sm:$0xff] %v442
                %v444 = vld [vmem:[%s224 + $0x6c8] sm:$0xff]
                %445 = vst [vmem:[%s225 + $0x368] sm:$0xff] %v444
                %v446 = vld [vmem:[%s224 + $0x6d0] sm:$0xff]
                %447 = vst [vmem:[%s225 + $0x370] sm:$0xff] %v446
                %v448 = vld [vmem:[%s224 + $0x6d8] sm:$0xff]
                %449 = vst [vmem:[%s225 + $0x378] sm:$0xff] %v448
                %v450 = vld [vmem:[%s224 + $0x700] sm:$0xff]
                %451 = vst [vmem:[%s225 + $0x380] sm:$0xff] %v450
                %v452 = vld [vmem:[%s224 + $0x708] sm:$0xff]
                %453 = vst [vmem:[%s225 + $0x388] sm:$0xff] %v452
                %v454 = vld [vmem:[%s224 + $0x710] sm:$0xff]
                %455 = vst [vmem:[%s225 + $0x390] sm:$0xff] %v454
                %v456 = vld [vmem:[%s224 + $0x718] sm:$0xff]
                %457 = vst [vmem:[%s225 + $0x398] sm:$0xff] %v456
                %v458 = vld [vmem:[%s224 + $0x740] sm:$0xff]
                %459 = vst [vmem:[%s225 + $0x3a0] sm:$0xff] %v458
                %v460 = vld [vmem:[%s224 + $0x748] sm:$0xff]
                %461 = vst [vmem:[%s225 + $0x3a8] sm:$0xff] %v460
                %v462 = vld [vmem:[%s224 + $0x750] sm:$0xff]
                %463 = vst [vmem:[%s225 + $0x3b0] sm:$0xff] %v462
                %v464 = vld [vmem:[%s224 + $0x758] sm:$0xff]
                %465 = vst [vmem:[%s225 + $0x3b8] sm:$0xff] %v464
                %v466 = vld [vmem:[%s224 + $0x780] sm:$0xff]
                %467 = vst [vmem:[%s225 + $0x3c0] sm:$0xff] %v466
                %v468 = vld [vmem:[%s224 + $0x788] sm:$0xff]
                %469 = vst [vmem:[%s225 + $0x3c8] sm:$0xff] %v468
                %v470 = vld [vmem:[%s224 + $0x790] sm:$0xff]
                %471 = vst [vmem:[%s225 + $0x3d0] sm:$0xff] %v470
                %v472 = vld [vmem:[%s224 + $0x798] sm:$0xff]
                %473 = vst [vmem:[%s225 + $0x3d8] sm:$0xff] %v472
                %v474 = vld [vmem:[%s224 + $0x7c0] sm:$0xff]
                %475 = vst [vmem:[%s225 + $0x3e0] sm:$0xff] %v474
                %v476 = vld [vmem:[%s224 + $0x7c8] sm:$0xff]
                %477 = vst [vmem:[%s225 + $0x3e8] sm:$0xff] %v476
                %v478 = vld [vmem:[%s224 + $0x7d0] sm:$0xff]
                %479 = vst [vmem:[%s225 + $0x3f0] sm:$0xff] %v478
                %v480 = vld [vmem:[%s224 + $0x7d8] sm:$0xff]
                %481 = vst [vmem:[%s225 + $0x3f8] sm:$0xff] %v480
                %v482 = vld [vmem:[%s224 + $0x800] sm:$0xff]
                %483 = vst [vmem:[%s225 + $0x400] sm:$0xff] %v482
                %v484 = vld [vmem:[%s224 + $0x808] sm:$0xff]
                %485 = vst [vmem:[%s225 + $0x408] sm:$0xff] %v484
                %v486 = vld [vmem:[%s224 + $0x810] sm:$0xff]
                %487 = vst [vmem:[%s225 + $0x410] sm:$0xff] %v486
                %v488 = vld [vmem:[%s224 + $0x818] sm:$0xff]
                %489 = vst [vmem:[%s225 + $0x418] sm:$0xff] %v488
                %v490 = vld [vmem:[%s224 + $0x840] sm:$0xff]
                %491 = vst [vmem:[%s225 + $0x420] sm:$0xff] %v490
                %v492 = vld [vmem:[%s224 + $0x848] sm:$0xff]
                %493 = vst [vmem:[%s225 + $0x428] sm:$0xff] %v492
                %v494 = vld [vmem:[%s224 + $0x850] sm:$0xff]
                %495 = vst [vmem:[%s225 + $0x430] sm:$0xff] %v494
                %v496 = vld [vmem:[%s224 + $0x858] sm:$0xff]
                %497 = vst [vmem:[%s225 + $0x438] sm:$0xff] %v496
                %v498 = vld [vmem:[%s224 + $0x880] sm:$0xff]
                %499 = vst [vmem:[%s225 + $0x440] sm:$0xff] %v498
                %v500 = vld [vmem:[%s224 + $0x888] sm:$0xff]
                %501 = vst [vmem:[%s225 + $0x448] sm:$0xff] %v500
                %v502 = vld [vmem:[%s224 + $0x890] sm:$0xff]
                %503 = vst [vmem:[%s225 + $0x450] sm:$0xff] %v502
                %v504 = vld [vmem:[%s224 + $0x898] sm:$0xff]
                %505 = vst [vmem:[%s225 + $0x458] sm:$0xff] %v504
                %v506 = vld [vmem:[%s224 + $0x8c0] sm:$0xff]
                %507 = vst [vmem:[%s225 + $0x460] sm:$0xff] %v506
                %v508 = vld [vmem:[%s224 + $0x8c8] sm:$0xff]
                %509 = vst [vmem:[%s225 + $0x468] sm:$0xff] %v508
                %v510 = vld [vmem:[%s224 + $0x8d0] sm:$0xff]
                %511 = vst [vmem:[%s225 + $0x470] sm:$0xff] %v510
                %v512 = vld [vmem:[%s224 + $0x8d8] sm:$0xff]
                %513 = vst [vmem:[%s225 + $0x478] sm:$0xff] %v512
                %v514 = vld [vmem:[%s224 + $0x900] sm:$0xff]
                %515 = vst [vmem:[%s225 + $0x480] sm:$0xff] %v514
                %v516 = vld [vmem:[%s224 + $0x908] sm:$0xff]
                %517 = vst [vmem:[%s225 + $0x488] sm:$0xff] %v516
                %v518 = vld [vmem:[%s224 + $0x910] sm:$0xff]
                %519 = vst [vmem:[%s225 + $0x490] sm:$0xff] %v518
                %v520 = vld [vmem:[%s224 + $0x918] sm:$0xff]
                %521 = vst [vmem:[%s225 + $0x498] sm:$0xff] %v520
                %v522 = vld [vmem:[%s224 + $0x940] sm:$0xff]
                %523 = vst [vmem:[%s225 + $0x4a0] sm:$0xff] %v522
                %v524 = vld [vmem:[%s224 + $0x948] sm:$0xff]
                %525 = vst [vmem:[%s225 + $0x4a8] sm:$0xff] %v524
                %v526 = vld [vmem:[%s224 + $0x950] sm:$0xff]
                %527 = vst [vmem:[%s225 + $0x4b0] sm:$0xff] %v526
                %v528 = vld [vmem:[%s224 + $0x958] sm:$0xff]
                %529 = vst [vmem:[%s225 + $0x4b8] sm:$0xff] %v528
                %v530 = vld [vmem:[%s224 + $0x980] sm:$0xff]
                %531 = vst [vmem:[%s225 + $0x4c0] sm:$0xff] %v530
                %v532 = vld [vmem:[%s224 + $0x988] sm:$0xff]
                %533 = vst [vmem:[%s225 + $0x4c8] sm:$0xff] %v532
                %v534 = vld [vmem:[%s224 + $0x990] sm:$0xff]
                %535 = vst [vmem:[%s225 + $0x4d0] sm:$0xff] %v534
                %v536 = vld [vmem:[%s224 + $0x998] sm:$0xff]
                %537 = vst [vmem:[%s225 + $0x4d8] sm:$0xff] %v536
                %v538 = vld [vmem:[%s224 + $0x9c0] sm:$0xff]
                %539 = vst [vmem:[%s225 + $0x4e0] sm:$0xff] %v538
                %v540 = vld [vmem:[%s224 + $0x9c8] sm:$0xff]
                %541 = vst [vmem:[%s225 + $0x4e8] sm:$0xff] %v540
                %v542 = vld [vmem:[%s224 + $0x9d0] sm:$0xff]
                %543 = vst [vmem:[%s225 + $0x4f0] sm:$0xff] %v542
                %v544 = vld [vmem:[%s224 + $0x9d8] sm:$0xff]
                %545 = vst [vmem:[%s225 + $0x4f8] sm:$0xff] %v544
                %v546 = vld [vmem:[%s224 + $0xa00] sm:$0xff]
                %547 = vst [vmem:[%s225 + $0x500] sm:$0xff] %v546
                %v548 = vld [vmem:[%s224 + $0xa08] sm:$0xff]
                %549 = vst [vmem:[%s225 + $0x508] sm:$0xff] %v548
                %v550 = vld [vmem:[%s224 + $0xa10] sm:$0xff]
                %551 = vst [vmem:[%s225 + $0x510] sm:$0xff] %v550
                %v552 = vld [vmem:[%s224 + $0xa18] sm:$0xff]
                %553 = vst [vmem:[%s225 + $0x518] sm:$0xff] %v552
                %v554 = vld [vmem:[%s224 + $0xa40] sm:$0xff]
                %555 = vst [vmem:[%s225 + $0x520] sm:$0xff] %v554
                %v556 = vld [vmem:[%s224 + $0xa48] sm:$0xff]
                %557 = vst [vmem:[%s225 + $0x528] sm:$0xff] %v556
                %v558 = vld [vmem:[%s224 + $0xa50] sm:$0xff]
                %559 = vst [vmem:[%s225 + $0x530] sm:$0xff] %v558
                %v560 = vld [vmem:[%s224 + $0xa58] sm:$0xff]
                %561 = vst [vmem:[%s225 + $0x538] sm:$0xff] %v560
                %v562 = vld [vmem:[%s224 + $0xa80] sm:$0xff]
                %563 = vst [vmem:[%s225 + $0x540] sm:$0xff] %v562
                %v564 = vld [vmem:[%s224 + $0xa88] sm:$0xff]
                %565 = vst [vmem:[%s225 + $0x548] sm:$0xff] %v564
                %v566 = vld [vmem:[%s224 + $0xa90] sm:$0xff]
                %567 = vst [vmem:[%s225 + $0x550] sm:$0xff] %v566
                %v568 = vld [vmem:[%s224 + $0xa98] sm:$0xff]
                %569 = vst [vmem:[%s225 + $0x558] sm:$0xff] %v568
                %v570 = vld [vmem:[%s224 + $0xac0] sm:$0xff]
                %571 = vst [vmem:[%s225 + $0x560] sm:$0xff] %v570
                %v572 = vld [vmem:[%s224 + $0xac8] sm:$0xff]
                %573 = vst [vmem:[%s225 + $0x568] sm:$0xff] %v572
                %v574 = vld [vmem:[%s224 + $0xad0] sm:$0xff]
                %575 = vst [vmem:[%s225 + $0x570] sm:$0xff] %v574
                %v576 = vld [vmem:[%s224 + $0xad8] sm:$0xff]
                %577 = vst [vmem:[%s225 + $0x578] sm:$0xff] %v576
                %v578 = vld [vmem:[%s224 + $0xb00] sm:$0xff]
                %579 = vst [vmem:[%s225 + $0x580] sm:$0xff] %v578
                %v580 = vld [vmem:[%s224 + $0xb08] sm:$0xff]
                %581 = vst [vmem:[%s225 + $0x588] sm:$0xff] %v580
                %v582 = vld [vmem:[%s224 + $0xb10] sm:$0xff]
                %583 = vst [vmem:[%s225 + $0x590] sm:$0xff] %v582
                %v584 = vld [vmem:[%s224 + $0xb18] sm:$0xff]
                %585 = vst [vmem:[%s225 + $0x598] sm:$0xff] %v584
                %v586 = vld [vmem:[%s224 + $0xb40] sm:$0xff]
                %587 = vst [vmem:[%s225 + $0x5a0] sm:$0xff] %v586
                %v588 = vld [vmem:[%s224 + $0xb48] sm:$0xff]
                %589 = vst [vmem:[%s225 + $0x5a8] sm:$0xff] %v588
                %v590 = vld [vmem:[%s224 + $0xb50] sm:$0xff]
                %591 = vst [vmem:[%s225 + $0x5b0] sm:$0xff] %v590
                %v592 = vld [vmem:[%s224 + $0xb58] sm:$0xff]
                %593 = vst [vmem:[%s225 + $0x5b8] sm:$0xff] %v592
                %v594 = vld [vmem:[%s224 + $0xb80] sm:$0xff]
                %595 = vst [vmem:[%s225 + $0x5c0] sm:$0xff] %v594
                %v596 = vld [vmem:[%s224 + $0xb88] sm:$0xff]
                %597 = vst [vmem:[%s225 + $0x5c8] sm:$0xff] %v596
                %v598 = vld [vmem:[%s224 + $0xb90] sm:$0xff]
                %599 = vst [vmem:[%s225 + $0x5d0] sm:$0xff] %v598
                %v600 = vld [vmem:[%s224 + $0xb98] sm:$0xff]
                %601 = vst [vmem:[%s225 + $0x5d8] sm:$0xff] %v600
                %v602 = vld [vmem:[%s224 + $0xbc0] sm:$0xff]
                %603 = vst [vmem:[%s225 + $0x5e0] sm:$0xff] %v602
                %v604 = vld [vmem:[%s224 + $0xbc8] sm:$0xff]
                %605 = vst [vmem:[%s225 + $0x5e8] sm:$0xff] %v604
                %v606 = vld [vmem:[%s224 + $0xbd0] sm:$0xff]
                %607 = vst [vmem:[%s225 + $0x5f0] sm:$0xff] %v606
                %v608 = vld [vmem:[%s224 + $0xbd8] sm:$0xff]
                %609 = vst [vmem:[%s225 + $0x5f8] sm:$0xff] %v608
                %v610 = vld [vmem:[%s224 + $0xc00] sm:$0xff]
                %611 = vst [vmem:[%s225 + $0x600] sm:$0xff] %v610
                %v612 = vld [vmem:[%s224 + $0xc08] sm:$0xff]
                %613 = vst [vmem:[%s225 + $0x608] sm:$0xff] %v612
                %v614 = vld [vmem:[%s224 + $0xc10] sm:$0xff]
                %615 = vst [vmem:[%s225 + $0x610] sm:$0xff] %v614
                %v616 = vld [vmem:[%s224 + $0xc18] sm:$0xff]
                %617 = vst [vmem:[%s225 + $0x618] sm:$0xff] %v616
                %v618 = vld [vmem:[%s224 + $0xc40] sm:$0xff]
                %619 = vst [vmem:[%s225 + $0x620] sm:$0xff] %v618
                %v620 = vld [vmem:[%s224 + $0xc48] sm:$0xff]
                %621 = vst [vmem:[%s225 + $0x628] sm:$0xff] %v620
                %v622 = vld [vmem:[%s224 + $0xc50] sm:$0xff]
                %623 = vst [vmem:[%s225 + $0x630] sm:$0xff] %v622
                %v624 = vld [vmem:[%s224 + $0xc58] sm:$0xff]
                %625 = vst [vmem:[%s225 + $0x638] sm:$0xff] %v624
                %v626 = vld [vmem:[%s224 + $0xc80] sm:$0xff]
                %627 = vst [vmem:[%s225 + $0x640] sm:$0xff] %v626
                %v628 = vld [vmem:[%s224 + $0xc88] sm:$0xff]
                %629 = vst [vmem:[%s225 + $0x648] sm:$0xff] %v628
                %v630 = vld [vmem:[%s224 + $0xc90] sm:$0xff]
                %631 = vst [vmem:[%s225 + $0x650] sm:$0xff] %v630
                %v632 = vld [vmem:[%s224 + $0xc98] sm:$0xff]
                %633 = vst [vmem:[%s225 + $0x658] sm:$0xff] %v632
                %v634 = vld [vmem:[%s224 + $0xcc0] sm:$0xff]
                %635 = vst [vmem:[%s225 + $0x660] sm:$0xff] %v634
                %v636 = vld [vmem:[%s224 + $0xcc8] sm:$0xff]
                %637 = vst [vmem:[%s225 + $0x668] sm:$0xff] %v636
                %v638 = vld [vmem:[%s224 + $0xcd0] sm:$0xff]
                %639 = vst [vmem:[%s225 + $0x670] sm:$0xff] %v638
                %v640 = vld [vmem:[%s224 + $0xcd8] sm:$0xff]
                %641 = vst [vmem:[%s225 + $0x678] sm:$0xff] %v640
                %v642 = vld [vmem:[%s224 + $0xd00] sm:$0xff]
                %643 = vst [vmem:[%s225 + $0x680] sm:$0xff] %v642
                %v644 = vld [vmem:[%s224 + $0xd08] sm:$0xff]
                %645 = vst [vmem:[%s225 + $0x688] sm:$0xff] %v644
                %v646 = vld [vmem:[%s224 + $0xd10] sm:$0xff]
                %647 = vst [vmem:[%s225 + $0x690] sm:$0xff] %v646
                %v648 = vld [vmem:[%s224 + $0xd18] sm:$0xff]
                %649 = vst [vmem:[%s225 + $0x698] sm:$0xff] %v648
                %v650 = vld [vmem:[%s224 + $0xd40] sm:$0xff]
                %651 = vst [vmem:[%s225 + $0x6a0] sm:$0xff] %v650
                %v652 = vld [vmem:[%s224 + $0xd48] sm:$0xff]
                %653 = vst [vmem:[%s225 + $0x6a8] sm:$0xff] %v652
                %v654 = vld [vmem:[%s224 + $0xd50] sm:$0xff]
                %655 = vst [vmem:[%s225 + $0x6b0] sm:$0xff] %v654
                %v656 = vld [vmem:[%s224 + $0xd58] sm:$0xff]
                %657 = vst [vmem:[%s225 + $0x6b8] sm:$0xff] %v656
                %v658 = vld [vmem:[%s224 + $0xd80] sm:$0xff]
                %659 = vst [vmem:[%s225 + $0x6c0] sm:$0xff] %v658
                %v660 = vld [vmem:[%s224 + $0xd88] sm:$0xff]
                %661 = vst [vmem:[%s225 + $0x6c8] sm:$0xff] %v660
                %v662 = vld [vmem:[%s224 + $0xd90] sm:$0xff]
                %663 = vst [vmem:[%s225 + $0x6d0] sm:$0xff] %v662
                %v664 = vld [vmem:[%s224 + $0xd98] sm:$0xff]
                %665 = vst [vmem:[%s225 + $0x6d8] sm:$0xff] %v664
                %v666 = vld [vmem:[%s224 + $0xdc0] sm:$0xff]
                %667 = vst [vmem:[%s225 + $0x6e0] sm:$0xff] %v666
                %v668 = vld [vmem:[%s224 + $0xdc8] sm:$0xff]
                %669 = vst [vmem:[%s225 + $0x6e8] sm:$0xff] %v668
                %v670 = vld [vmem:[%s224 + $0xdd0] sm:$0xff]
                %671 = vst [vmem:[%s225 + $0x6f0] sm:$0xff] %v670
                %v672 = vld [vmem:[%s224 + $0xdd8] sm:$0xff]
                %673 = vst [vmem:[%s225 + $0x6f8] sm:$0xff] %v672
                %v674 = vld [vmem:[%s224 + $0xe00] sm:$0xff]
                %675 = vst [vmem:[%s225 + $0x700] sm:$0xff] %v674
                %v676 = vld [vmem:[%s224 + $0xe08] sm:$0xff]
                %677 = vst [vmem:[%s225 + $0x708] sm:$0xff] %v676
                %v678 = vld [vmem:[%s224 + $0xe10] sm:$0xff]
                %679 = vst [vmem:[%s225 + $0x710] sm:$0xff] %v678
                %v680 = vld [vmem:[%s224 + $0xe18] sm:$0xff]
                %681 = vst [vmem:[%s225 + $0x718] sm:$0xff] %v680
                %v682 = vld [vmem:[%s224 + $0xe40] sm:$0xff]
                %683 = vst [vmem:[%s225 + $0x720] sm:$0xff] %v682
                %v684 = vld [vmem:[%s224 + $0xe48] sm:$0xff]
                %685 = vst [vmem:[%s225 + $0x728] sm:$0xff] %v684
                %v686 = vld [vmem:[%s224 + $0xe50] sm:$0xff]
                %687 = vst [vmem:[%s225 + $0x730] sm:$0xff] %v686
                %v688 = vld [vmem:[%s224 + $0xe58] sm:$0xff]
                %689 = vst [vmem:[%s225 + $0x738] sm:$0xff] %v688
                %v690 = vld [vmem:[%s224 + $0xe80] sm:$0xff]
                %691 = vst [vmem:[%s225 + $0x740] sm:$0xff] %v690
                %v692 = vld [vmem:[%s224 + $0xe88] sm:$0xff]
                %693 = vst [vmem:[%s225 + $0x748] sm:$0xff] %v692
                %v694 = vld [vmem:[%s224 + $0xe90] sm:$0xff]
                %695 = vst [vmem:[%s225 + $0x750] sm:$0xff] %v694
                %v696 = vld [vmem:[%s224 + $0xe98] sm:$0xff]
                %697 = vst [vmem:[%s225 + $0x758] sm:$0xff] %v696
                %v698 = vld [vmem:[%s224 + $0xec0] sm:$0xff]
                %699 = vst [vmem:[%s225 + $0x760] sm:$0xff] %v698
                %v700 = vld [vmem:[%s224 + $0xec8] sm:$0xff]
                %701 = vst [vmem:[%s225 + $0x768] sm:$0xff] %v700
                %v702 = vld [vmem:[%s224 + $0xed0] sm:$0xff]
                %703 = vst [vmem:[%s225 + $0x770] sm:$0xff] %v702
                %v704 = vld [vmem:[%s224 + $0xed8] sm:$0xff]
                %705 = vst [vmem:[%s225 + $0x778] sm:$0xff] %v704
                %v706 = vld [vmem:[%s224 + $0xf00] sm:$0xff]
                %707 = vst [vmem:[%s225 + $0x780] sm:$0xff] %v706
                %v708 = vld [vmem:[%s224 + $0xf08] sm:$0xff]
                %709 = vst [vmem:[%s225 + $0x788] sm:$0xff] %v708
                %v710 = vld [vmem:[%s224 + $0xf10] sm:$0xff]
                %711 = vst [vmem:[%s225 + $0x790] sm:$0xff] %v710
                %v712 = vld [vmem:[%s224 + $0xf18] sm:$0xff]
                %713 = vst [vmem:[%s225 + $0x798] sm:$0xff] %v712
                %v714 = vld [vmem:[%s224 + $0xf40] sm:$0xff]
                %715 = vst [vmem:[%s225 + $0x7a0] sm:$0xff] %v714
                %v716 = vld [vmem:[%s224 + $0xf48] sm:$0xff]
                %717 = vst [vmem:[%s225 + $0x7a8] sm:$0xff] %v716
                %v718 = vld [vmem:[%s224 + $0xf50] sm:$0xff]
                %719 = vst [vmem:[%s225 + $0x7b0] sm:$0xff] %v718
                %v720 = vld [vmem:[%s224 + $0xf58] sm:$0xff]
                %721 = vst [vmem:[%s225 + $0x7b8] sm:$0xff] %v720
                %v722 = vld [vmem:[%s224 + $0xf80] sm:$0xff]
                %723 = vst [vmem:[%s225 + $0x7c0] sm:$0xff] %v722
                %v724 = vld [vmem:[%s224 + $0xf88] sm:$0xff]
                %725 = vst [vmem:[%s225 + $0x7c8] sm:$0xff] %v724
                %v726 = vld [vmem:[%s224 + $0xf90] sm:$0xff]
                %727 = vst [vmem:[%s225 + $0x7d0] sm:$0xff] %v726
                %v728 = vld [vmem:[%s224 + $0xf98] sm:$0xff]
                %729 = vst [vmem:[%s225 + $0x7d8] sm:$0xff] %v728
                %v730 = vld [vmem:[%s224 + $0xfc0] sm:$0xff]
                %731 = vst [vmem:[%s225 + $0x7e0] sm:$0xff] %v730
                %v732 = vld [vmem:[%s224 + $0xfc8] sm:$0xff]
                %733 = vst [vmem:[%s225 + $0x7e8] sm:$0xff] %v732
                %v734 = vld [vmem:[%s224 + $0xfd0] sm:$0xff]
                %735 = vst [vmem:[%s225 + $0x7f0] sm:$0xff] %v734
                %v736 = vld [vmem:[%s224 + $0xfd8] sm:$0xff]
                %737 = vst [vmem:[%s225 + $0x7f8] sm:$0xff] %v736
                %v738 = vld [vmem:[%s224 + $0x1000] sm:$0xff]
                %739 = vst [vmem:[%s225 + $0x800] sm:$0xff] %v738
                %v740 = vld [vmem:[%s224 + $0x1008] sm:$0xff]
                %741 = vst [vmem:[%s225 + $0x808] sm:$0xff] %v740
                %v742 = vld [vmem:[%s224 + $0x1010] sm:$0xff]
                %743 = vst [vmem:[%s225 + $0x810] sm:$0xff] %v742
                %v744 = vld [vmem:[%s224 + $0x1018] sm:$0xff]
                %745 = vst [vmem:[%s225 + $0x818] sm:$0xff] %v744
                %v746 = vld [vmem:[%s224 + $0x1040] sm:$0xff]
                %747 = vst [vmem:[%s225 + $0x820] sm:$0xff] %v746
                %v748 = vld [vmem:[%s224 + $0x1048] sm:$0xff]
                %749 = vst [vmem:[%s225 + $0x828] sm:$0xff] %v748
                %v750 = vld [vmem:[%s224 + $0x1050] sm:$0xff]
                %751 = vst [vmem:[%s225 + $0x830] sm:$0xff] %v750
                %v752 = vld [vmem:[%s224 + $0x1058] sm:$0xff]
                %753 = vst [vmem:[%s225 + $0x838] sm:$0xff] %v752
                %v754 = vld [vmem:[%s224 + $0x1080] sm:$0xff]
                %755 = vst [vmem:[%s225 + $0x840] sm:$0xff] %v754
                %v756 = vld [vmem:[%s224 + $0x1088] sm:$0xff]
                %757 = vst [vmem:[%s225 + $0x848] sm:$0xff] %v756
                %v758 = vld [vmem:[%s224 + $0x1090] sm:$0xff]
                %759 = vst [vmem:[%s225 + $0x850] sm:$0xff] %v758
                %v760 = vld [vmem:[%s224 + $0x1098] sm:$0xff]
                %761 = vst [vmem:[%s225 + $0x858] sm:$0xff] %v760
                %v762 = vld [vmem:[%s224 + $0x10c0] sm:$0xff]
                %763 = vst [vmem:[%s225 + $0x860] sm:$0xff] %v762
                %v764 = vld [vmem:[%s224 + $0x10c8] sm:$0xff]
                %765 = vst [vmem:[%s225 + $0x868] sm:$0xff] %v764
                %v766 = vld [vmem:[%s224 + $0x10d0] sm:$0xff]
                %767 = vst [vmem:[%s225 + $0x870] sm:$0xff] %v766
                %v768 = vld [vmem:[%s224 + $0x10d8] sm:$0xff]
                %769 = vst [vmem:[%s225 + $0x878] sm:$0xff] %v768
                %v770 = vld [vmem:[%s224 + $0x1100] sm:$0xff]
                %771 = vst [vmem:[%s225 + $0x880] sm:$0xff] %v770
                %v772 = vld [vmem:[%s224 + $0x1108] sm:$0xff]
                %773 = vst [vmem:[%s225 + $0x888] sm:$0xff] %v772
                %v774 = vld [vmem:[%s224 + $0x1110] sm:$0xff]
                %775 = vst [vmem:[%s225 + $0x890] sm:$0xff] %v774
                %v776 = vld [vmem:[%s224 + $0x1118] sm:$0xff]
                %777 = vst [vmem:[%s225 + $0x898] sm:$0xff] %v776
                %v778 = vld [vmem:[%s224 + $0x1140] sm:$0xff]
                %779 = vst [vmem:[%s225 + $0x8a0] sm:$0xff] %v778
                %v780 = vld [vmem:[%s224 + $0x1148] sm:$0xff]
                %781 = vst [vmem:[%s225 + $0x8a8] sm:$0xff] %v780
                %v782 = vld [vmem:[%s224 + $0x1150] sm:$0xff]
                %783 = vst [vmem:[%s225 + $0x8b0] sm:$0xff] %v782
                %v784 = vld [vmem:[%s224 + $0x1158] sm:$0xff]
                %785 = vst [vmem:[%s225 + $0x8b8] sm:$0xff] %v784
                %v786 = vld [vmem:[%s224 + $0x1180] sm:$0xff]
                %787 = vst [vmem:[%s225 + $0x8c0] sm:$0xff] %v786
                %v788 = vld [vmem:[%s224 + $0x1188] sm:$0xff]
                %789 = vst [vmem:[%s225 + $0x8c8] sm:$0xff] %v788
                %v790 = vld [vmem:[%s224 + $0x1190] sm:$0xff]
                %791 = vst [vmem:[%s225 + $0x8d0] sm:$0xff] %v790
                %v792 = vld [vmem:[%s224 + $0x1198] sm:$0xff]
                %793 = vst [vmem:[%s225 + $0x8d8] sm:$0xff] %v792
                %v794 = vld [vmem:[%s224 + $0x11c0] sm:$0xff]
                %795 = vst [vmem:[%s225 + $0x8e0] sm:$0xff] %v794
                %v796 = vld [vmem:[%s224 + $0x11c8] sm:$0xff]
                %797 = vst [vmem:[%s225 + $0x8e8] sm:$0xff] %v796
                %v798 = vld [vmem:[%s224 + $0x11d0] sm:$0xff]
                %799 = vst [vmem:[%s225 + $0x8f0] sm:$0xff] %v798
                %v800 = vld [vmem:[%s224 + $0x11d8] sm:$0xff]
                %801 = vst [vmem:[%s225 + $0x8f8] sm:$0xff] %v800
                %v802 = vld [vmem:[%s224 + $0x1200] sm:$0xff]
                %803 = vst [vmem:[%s225 + $0x900] sm:$0xff] %v802
                %v804 = vld [vmem:[%s224 + $0x1208] sm:$0xff]
                %805 = vst [vmem:[%s225 + $0x908] sm:$0xff] %v804
                %v806 = vld [vmem:[%s224 + $0x1210] sm:$0xff]
                %807 = vst [vmem:[%s225 + $0x910] sm:$0xff] %v806
                %v808 = vld [vmem:[%s224 + $0x1218] sm:$0xff]
                %809 = vst [vmem:[%s225 + $0x918] sm:$0xff] %v808
                %v810 = vld [vmem:[%s224 + $0x1240] sm:$0xff]
                %811 = vst [vmem:[%s225 + $0x920] sm:$0xff] %v810
                %v812 = vld [vmem:[%s224 + $0x1248] sm:$0xff]
                %813 = vst [vmem:[%s225 + $0x928] sm:$0xff] %v812
                %v814 = vld [vmem:[%s224 + $0x1250] sm:$0xff]
                %815 = vst [vmem:[%s225 + $0x930] sm:$0xff] %v814
                %v816 = vld [vmem:[%s224 + $0x1258] sm:$0xff]
                %817 = vst [vmem:[%s225 + $0x938] sm:$0xff] %v816
                %v818 = vld [vmem:[%s224 + $0x1280] sm:$0xff]
                %819 = vst [vmem:[%s225 + $0x940] sm:$0xff] %v818
                %v820 = vld [vmem:[%s224 + $0x1288] sm:$0xff]
                %821 = vst [vmem:[%s225 + $0x948] sm:$0xff] %v820
                %v822 = vld [vmem:[%s224 + $0x1290] sm:$0xff]
                %823 = vst [vmem:[%s225 + $0x950] sm:$0xff] %v822
                %v824 = vld [vmem:[%s224 + $0x1298] sm:$0xff]
                %825 = vst [vmem:[%s225 + $0x958] sm:$0xff] %v824
                %v826 = vld [vmem:[%s224 + $0x12c0] sm:$0xff]
                %827 = vst [vmem:[%s225 + $0x960] sm:$0xff] %v826
                %v828 = vld [vmem:[%s224 + $0x12c8] sm:$0xff]
                %829 = vst [vmem:[%s225 + $0x968] sm:$0xff] %v828
                %v830 = vld [vmem:[%s224 + $0x12d0] sm:$0xff]
                %831 = vst [vmem:[%s225 + $0x970] sm:$0xff] %v830
                %v832 = vld [vmem:[%s224 + $0x12d8] sm:$0xff]
                %833 = vst [vmem:[%s225 + $0x978] sm:$0xff] %v832
                %v834 = vld [vmem:[%s224 + $0x1300] sm:$0xff]
                %835 = vst [vmem:[%s225 + $0x980] sm:$0xff] %v834
                %v836 = vld [vmem:[%s224 + $0x1308] sm:$0xff]
                %837 = vst [vmem:[%s225 + $0x988] sm:$0xff] %v836
                %v838 = vld [vmem:[%s224 + $0x1310] sm:$0xff]
                %839 = vst [vmem:[%s225 + $0x990] sm:$0xff] %v838
                %v840 = vld [vmem:[%s224 + $0x1318] sm:$0xff]
                %841 = vst [vmem:[%s225 + $0x998] sm:$0xff] %v840
                %v842 = vld [vmem:[%s224 + $0x1340] sm:$0xff]
                %843 = vst [vmem:[%s225 + $0x9a0] sm:$0xff] %v842
                %v844 = vld [vmem:[%s224 + $0x1348] sm:$0xff]
                %845 = vst [vmem:[%s225 + $0x9a8] sm:$0xff] %v844
                %v846 = vld [vmem:[%s224 + $0x1350] sm:$0xff]
                %847 = vst [vmem:[%s225 + $0x9b0] sm:$0xff] %v846
                %v848 = vld [vmem:[%s224 + $0x1358] sm:$0xff]
                %849 = vst [vmem:[%s225 + $0x9b8] sm:$0xff] %v848
                %v850 = vld [vmem:[%s224 + $0x1380] sm:$0xff]
                %851 = vst [vmem:[%s225 + $0x9c0] sm:$0xff] %v850
                %v852 = vld [vmem:[%s224 + $0x1388] sm:$0xff]
                %853 = vst [vmem:[%s225 + $0x9c8] sm:$0xff] %v852
                %v854 = vld [vmem:[%s224 + $0x1390] sm:$0xff]
                %855 = vst [vmem:[%s225 + $0x9d0] sm:$0xff] %v854
                %v856 = vld [vmem:[%s224 + $0x1398] sm:$0xff]
                %857 = vst [vmem:[%s225 + $0x9d8] sm:$0xff] %v856
                %v858 = vld [vmem:[%s224 + $0x13c0] sm:$0xff]
                %859 = vst [vmem:[%s225 + $0x9e0] sm:$0xff] %v858
                %v860 = vld [vmem:[%s224 + $0x13c8] sm:$0xff]
                %861 = vst [vmem:[%s225 + $0x9e8] sm:$0xff] %v860
                %v862 = vld [vmem:[%s224 + $0x13d0] sm:$0xff]
                %863 = vst [vmem:[%s225 + $0x9f0] sm:$0xff] %v862
                %v864 = vld [vmem:[%s224 + $0x13d8] sm:$0xff]
                %865 = vst [vmem:[%s225 + $0x9f8] sm:$0xff] %v864
                %v866 = vld [vmem:[%s224 + $0x1400] sm:$0xff]
                %867 = vst [vmem:[%s225 + $0xa00] sm:$0xff] %v866
                %v868 = vld [vmem:[%s224 + $0x1408] sm:$0xff]
                %869 = vst [vmem:[%s225 + $0xa08] sm:$0xff] %v868
                %v870 = vld [vmem:[%s224 + $0x1410] sm:$0xff]
                %871 = vst [vmem:[%s225 + $0xa10] sm:$0xff] %v870
                %v872 = vld [vmem:[%s224 + $0x1418] sm:$0xff]
                %873 = vst [vmem:[%s225 + $0xa18] sm:$0xff] %v872
                %v874 = vld [vmem:[%s224 + $0x1440] sm:$0xff]
                %875 = vst [vmem:[%s225 + $0xa20] sm:$0xff] %v874
                %v876 = vld [vmem:[%s224 + $0x1448] sm:$0xff]
                %877 = vst [vmem:[%s225 + $0xa28] sm:$0xff] %v876
                %v878 = vld [vmem:[%s224 + $0x1450] sm:$0xff]
                %879 = vst [vmem:[%s225 + $0xa30] sm:$0xff] %v878
                %v880 = vld [vmem:[%s224 + $0x1458] sm:$0xff]
                %881 = vst [vmem:[%s225 + $0xa38] sm:$0xff] %v880
                %v882 = vld [vmem:[%s224 + $0x1480] sm:$0xff]
                %883 = vst [vmem:[%s225 + $0xa40] sm:$0xff] %v882
                %v884 = vld [vmem:[%s224 + $0x1488] sm:$0xff]
                %885 = vst [vmem:[%s225 + $0xa48] sm:$0xff] %v884
                %v886 = vld [vmem:[%s224 + $0x1490] sm:$0xff]
                %887 = vst [vmem:[%s225 + $0xa50] sm:$0xff] %v886
                %v888 = vld [vmem:[%s224 + $0x1498] sm:$0xff]
                %889 = vst [vmem:[%s225 + $0xa58] sm:$0xff] %v888
                %v890 = vld [vmem:[%s224 + $0x14c0] sm:$0xff]
                %891 = vst [vmem:[%s225 + $0xa60] sm:$0xff] %v890
                %v892 = vld [vmem:[%s224 + $0x14c8] sm:$0xff]
                %893 = vst [vmem:[%s225 + $0xa68] sm:$0xff] %v892
                %v894 = vld [vmem:[%s224 + $0x14d0] sm:$0xff]
                %895 = vst [vmem:[%s225 + $0xa70] sm:$0xff] %v894
                %v896 = vld [vmem:[%s224 + $0x14d8] sm:$0xff]
                %897 = vst [vmem:[%s225 + $0xa78] sm:$0xff] %v896
                %v898 = vld [vmem:[%s224 + $0x1500] sm:$0xff]
                %899 = vst [vmem:[%s225 + $0xa80] sm:$0xff] %v898
                %v900 = vld [vmem:[%s224 + $0x1508] sm:$0xff]
                %901 = vst [vmem:[%s225 + $0xa88] sm:$0xff] %v900
                %v902 = vld [vmem:[%s224 + $0x1510] sm:$0xff]
                %903 = vst [vmem:[%s225 + $0xa90] sm:$0xff] %v902
                %v904 = vld [vmem:[%s224 + $0x1518] sm:$0xff]
                %905 = vst [vmem:[%s225 + $0xa98] sm:$0xff] %v904
                %v906 = vld [vmem:[%s224 + $0x1540] sm:$0xff]
                %907 = vst [vmem:[%s225 + $0xaa0] sm:$0xff] %v906
                %v908 = vld [vmem:[%s224 + $0x1548] sm:$0xff]
                %909 = vst [vmem:[%s225 + $0xaa8] sm:$0xff] %v908
                %v910 = vld [vmem:[%s224 + $0x1550] sm:$0xff]
                %911 = vst [vmem:[%s225 + $0xab0] sm:$0xff] %v910
                %v912 = vld [vmem:[%s224 + $0x1558] sm:$0xff]
                %913 = vst [vmem:[%s225 + $0xab8] sm:$0xff] %v912
                %v914 = vld [vmem:[%s224 + $0x1580] sm:$0xff]
                %915 = vst [vmem:[%s225 + $0xac0] sm:$0xff] %v914
                %v916 = vld [vmem:[%s224 + $0x1588] sm:$0xff]
                %917 = vst [vmem:[%s225 + $0xac8] sm:$0xff] %v916
                %v918 = vld [vmem:[%s224 + $0x1590] sm:$0xff]
                %919 = vst [vmem:[%s225 + $0xad0] sm:$0xff] %v918
                %v920 = vld [vmem:[%s224 + $0x1598] sm:$0xff]
                %921 = vst [vmem:[%s225 + $0xad8] sm:$0xff] %v920
                %v922 = vld [vmem:[%s224 + $0x15c0] sm:$0xff]
                %923 = vst [vmem:[%s225 + $0xae0] sm:$0xff] %v922
                %v924 = vld [vmem:[%s224 + $0x15c8] sm:$0xff]
                %925 = vst [vmem:[%s225 + $0xae8] sm:$0xff] %v924
                %v926 = vld [vmem:[%s224 + $0x15d0] sm:$0xff]
                %927 = vst [vmem:[%s225 + $0xaf0] sm:$0xff] %v926
                %v928 = vld [vmem:[%s224 + $0x15d8] sm:$0xff]
                %929 = vst [vmem:[%s225 + $0xaf8] sm:$0xff] %v928
                %v930 = vld [vmem:[%s224 + $0x1600] sm:$0xff]
                %931 = vst [vmem:[%s225 + $0xb00] sm:$0xff] %v930
                %v932 = vld [vmem:[%s224 + $0x1608] sm:$0xff]
                %933 = vst [vmem:[%s225 + $0xb08] sm:$0xff] %v932
                %v934 = vld [vmem:[%s224 + $0x1610] sm:$0xff]
                %935 = vst [vmem:[%s225 + $0xb10] sm:$0xff] %v934
                %v936 = vld [vmem:[%s224 + $0x1618] sm:$0xff]
                %937 = vst [vmem:[%s225 + $0xb18] sm:$0xff] %v936
                %v938 = vld [vmem:[%s224 + $0x1640] sm:$0xff]
                %939 = vst [vmem:[%s225 + $0xb20] sm:$0xff] %v938
                %v940 = vld [vmem:[%s224 + $0x1648] sm:$0xff]
                %941 = vst [vmem:[%s225 + $0xb28] sm:$0xff] %v940
                %v942 = vld [vmem:[%s224 + $0x1650] sm:$0xff]
                %943 = vst [vmem:[%s225 + $0xb30] sm:$0xff] %v942
                %v944 = vld [vmem:[%s224 + $0x1658] sm:$0xff]
                %945 = vst [vmem:[%s225 + $0xb38] sm:$0xff] %v944
                %v946 = vld [vmem:[%s224 + $0x1680] sm:$0xff]
                %947 = vst [vmem:[%s225 + $0xb40] sm:$0xff] %v946
                %v948 = vld [vmem:[%s224 + $0x1688] sm:$0xff]
                %949 = vst [vmem:[%s225 + $0xb48] sm:$0xff] %v948
                %v950 = vld [vmem:[%s224 + $0x1690] sm:$0xff]
                %951 = vst [vmem:[%s225 + $0xb50] sm:$0xff] %v950
                %v952 = vld [vmem:[%s224 + $0x1698] sm:$0xff]
                %953 = vst [vmem:[%s225 + $0xb58] sm:$0xff] %v952
                %v954 = vld [vmem:[%s224 + $0x16c0] sm:$0xff]
                %955 = vst [vmem:[%s225 + $0xb60] sm:$0xff] %v954
                %v956 = vld [vmem:[%s224 + $0x16c8] sm:$0xff]
                %957 = vst [vmem:[%s225 + $0xb68] sm:$0xff] %v956
                %v958 = vld [vmem:[%s224 + $0x16d0] sm:$0xff]
                %959 = vst [vmem:[%s225 + $0xb70] sm:$0xff] %v958
                %v960 = vld [vmem:[%s224 + $0x16d8] sm:$0xff]
                %961 = vst [vmem:[%s225 + $0xb78] sm:$0xff] %v960
                %v962 = vld [vmem:[%s224 + $0x1700] sm:$0xff]
                %963 = vst [vmem:[%s225 + $0xb80] sm:$0xff] %v962
                %v964 = vld [vmem:[%s224 + $0x1708] sm:$0xff]
                %965 = vst [vmem:[%s225 + $0xb88] sm:$0xff] %v964
                %v966 = vld [vmem:[%s224 + $0x1710] sm:$0xff]
                %967 = vst [vmem:[%s225 + $0xb90] sm:$0xff] %v966
                %v968 = vld [vmem:[%s224 + $0x1718] sm:$0xff]
                %969 = vst [vmem:[%s225 + $0xb98] sm:$0xff] %v968
                %v970 = vld [vmem:[%s224 + $0x1740] sm:$0xff]
                %971 = vst [vmem:[%s225 + $0xba0] sm:$0xff] %v970
                %v972 = vld [vmem:[%s224 + $0x1748] sm:$0xff]
                %973 = vst [vmem:[%s225 + $0xba8] sm:$0xff] %v972
                %v974 = vld [vmem:[%s224 + $0x1750] sm:$0xff]
                %975 = vst [vmem:[%s225 + $0xbb0] sm:$0xff] %v974
                %v976 = vld [vmem:[%s224 + $0x1758] sm:$0xff]
                %977 = vst [vmem:[%s225 + $0xbb8] sm:$0xff] %v976
                %v978 = vld [vmem:[%s224 + $0x1780] sm:$0xff]
                %979 = vst [vmem:[%s225 + $0xbc0] sm:$0xff] %v978
                %v980 = vld [vmem:[%s224 + $0x1788] sm:$0xff]
                %981 = vst [vmem:[%s225 + $0xbc8] sm:$0xff] %v980
                %v982 = vld [vmem:[%s224 + $0x1790] sm:$0xff]
                %983 = vst [vmem:[%s225 + $0xbd0] sm:$0xff] %v982
                %v984 = vld [vmem:[%s224 + $0x1798] sm:$0xff]
                %985 = vst [vmem:[%s225 + $0xbd8] sm:$0xff] %v984
                %v986 = vld [vmem:[%s224 + $0x17c0] sm:$0xff]
                %987 = vst [vmem:[%s225 + $0xbe0] sm:$0xff] %v986
                %v988 = vld [vmem:[%s224 + $0x17c8] sm:$0xff]
                %989 = vst [vmem:[%s225 + $0xbe8] sm:$0xff] %v988
                %v990 = vld [vmem:[%s224 + $0x17d0] sm:$0xff]
                %991 = vst [vmem:[%s225 + $0xbf0] sm:$0xff] %v990
                %v992 = vld [vmem:[%s224 + $0x17d8] sm:$0xff]
                %993 = vst [vmem:[%s225 + $0xbf8] sm:$0xff] %v992
                %v994 = vld [vmem:[%s224 + $0x1800] sm:$0xff]
                %995 = vst [vmem:[%s225 + $0xc00] sm:$0xff] %v994
                %v996 = vld [vmem:[%s224 + $0x1808] sm:$0xff]
                %997 = vst [vmem:[%s225 + $0xc08] sm:$0xff] %v996
                %v998 = vld [vmem:[%s224 + $0x1810] sm:$0xff]
                %999 = vst [vmem:[%s225 + $0xc10] sm:$0xff] %v998
                %v1000 = vld [vmem:[%s224 + $0x1818] sm:$0xff]
                %1001 = vst [vmem:[%s225 + $0xc18] sm:$0xff] %v1000
                %v1002 = vld [vmem:[%s224 + $0x1840] sm:$0xff]
                %1003 = vst [vmem:[%s225 + $0xc20] sm:$0xff] %v1002
                %v1004 = vld [vmem:[%s224 + $0x1848] sm:$0xff]
                %1005 = vst [vmem:[%s225 + $0xc28] sm:$0xff] %v1004
                %v1006 = vld [vmem:[%s224 + $0x1850] sm:$0xff]
                %1007 = vst [vmem:[%s225 + $0xc30] sm:$0xff] %v1006
                %v1008 = vld [vmem:[%s224 + $0x1858] sm:$0xff]
                %1009 = vst [vmem:[%s225 + $0xc38] sm:$0xff] %v1008
                %v1010 = vld [vmem:[%s224 + $0x1880] sm:$0xff]
                %1011 = vst [vmem:[%s225 + $0xc40] sm:$0xff] %v1010
                %v1012 = vld [vmem:[%s224 + $0x1888] sm:$0xff]
                %1013 = vst [vmem:[%s225 + $0xc48] sm:$0xff] %v1012
                %v1014 = vld [vmem:[%s224 + $0x1890] sm:$0xff]
                %1015 = vst [vmem:[%s225 + $0xc50] sm:$0xff] %v1014
                %v1016 = vld [vmem:[%s224 + $0x1898] sm:$0xff]
                %1017 = vst [vmem:[%s225 + $0xc58] sm:$0xff] %v1016
                %v1018 = vld [vmem:[%s224 + $0x18c0] sm:$0xff]
                %1019 = vst [vmem:[%s225 + $0xc60] sm:$0xff] %v1018
                %v1020 = vld [vmem:[%s224 + $0x18c8] sm:$0xff]
                %1021 = vst [vmem:[%s225 + $0xc68] sm:$0xff] %v1020
                %v1022 = vld [vmem:[%s224 + $0x18d0] sm:$0xff]
                %1023 = vst [vmem:[%s225 + $0xc70] sm:$0xff] %v1022
                %v1024 = vld [vmem:[%s224 + $0x18d8] sm:$0xff]
                %1025 = vst [vmem:[%s225 + $0xc78] sm:$0xff] %v1024
                %v1026 = vld [vmem:[%s224 + $0x1900] sm:$0xff]
                %1027 = vst [vmem:[%s225 + $0xc80] sm:$0xff] %v1026
                %v1028 = vld [vmem:[%s224 + $0x1908] sm:$0xff]
                %1029 = vst [vmem:[%s225 + $0xc88] sm:$0xff] %v1028
                %v1030 = vld [vmem:[%s224 + $0x1910] sm:$0xff]
                %1031 = vst [vmem:[%s225 + $0xc90] sm:$0xff] %v1030
                %v1032 = vld [vmem:[%s224 + $0x1918] sm:$0xff]
                %1033 = vst [vmem:[%s225 + $0xc98] sm:$0xff] %v1032
                %v1034 = vld [vmem:[%s224 + $0x1940] sm:$0xff]
                %1035 = vst [vmem:[%s225 + $0xca0] sm:$0xff] %v1034
                %v1036 = vld [vmem:[%s224 + $0x1948] sm:$0xff]
                %1037 = vst [vmem:[%s225 + $0xca8] sm:$0xff] %v1036
                %v1038 = vld [vmem:[%s224 + $0x1950] sm:$0xff]
                %1039 = vst [vmem:[%s225 + $0xcb0] sm:$0xff] %v1038
                %v1040 = vld [vmem:[%s224 + $0x1958] sm:$0xff]
                %1041 = vst [vmem:[%s225 + $0xcb8] sm:$0xff] %v1040
                %v1042 = vld [vmem:[%s224 + $0x1980] sm:$0xff]
                %1043 = vst [vmem:[%s225 + $0xcc0] sm:$0xff] %v1042
                %v1044 = vld [vmem:[%s224 + $0x1988] sm:$0xff]
                %1045 = vst [vmem:[%s225 + $0xcc8] sm:$0xff] %v1044
                %v1046 = vld [vmem:[%s224 + $0x1990] sm:$0xff]
                %1047 = vst [vmem:[%s225 + $0xcd0] sm:$0xff] %v1046
                %v1048 = vld [vmem:[%s224 + $0x1998] sm:$0xff]
                %1049 = vst [vmem:[%s225 + $0xcd8] sm:$0xff] %v1048
                %v1050 = vld [vmem:[%s224 + $0x19c0] sm:$0xff]
                %1051 = vst [vmem:[%s225 + $0xce0] sm:$0xff] %v1050
                %v1052 = vld [vmem:[%s224 + $0x19c8] sm:$0xff]
                %1053 = vst [vmem:[%s225 + $0xce8] sm:$0xff] %v1052
                %v1054 = vld [vmem:[%s224 + $0x19d0] sm:$0xff]
                %1055 = vst [vmem:[%s225 + $0xcf0] sm:$0xff] %v1054
                %v1056 = vld [vmem:[%s224 + $0x19d8] sm:$0xff]
                %1057 = vst [vmem:[%s225 + $0xcf8] sm:$0xff] %v1056
                %v1058 = vld [vmem:[%s224 + $0x1a00] sm:$0xff]
                %1059 = vst [vmem:[%s225 + $0xd00] sm:$0xff] %v1058
                %v1060 = vld [vmem:[%s224 + $0x1a08] sm:$0xff]
                %1061 = vst [vmem:[%s225 + $0xd08] sm:$0xff] %v1060
                %v1062 = vld [vmem:[%s224 + $0x1a10] sm:$0xff]
                %1063 = vst [vmem:[%s225 + $0xd10] sm:$0xff] %v1062
                %v1064 = vld [vmem:[%s224 + $0x1a18] sm:$0xff]
                %1065 = vst [vmem:[%s225 + $0xd18] sm:$0xff] %v1064
                %v1066 = vld [vmem:[%s224 + $0x1a40] sm:$0xff]
                %1067 = vst [vmem:[%s225 + $0xd20] sm:$0xff] %v1066
                %v1068 = vld [vmem:[%s224 + $0x1a48] sm:$0xff]
                %1069 = vst [vmem:[%s225 + $0xd28] sm:$0xff] %v1068
                %v1070 = vld [vmem:[%s224 + $0x1a50] sm:$0xff]
                %1071 = vst [vmem:[%s225 + $0xd30] sm:$0xff] %v1070
                %v1072 = vld [vmem:[%s224 + $0x1a58] sm:$0xff]
                %1073 = vst [vmem:[%s225 + $0xd38] sm:$0xff] %v1072
                %v1074 = vld [vmem:[%s224 + $0x1a80] sm:$0xff]
                %1075 = vst [vmem:[%s225 + $0xd40] sm:$0xff] %v1074
                %v1076 = vld [vmem:[%s224 + $0x1a88] sm:$0xff]
                %1077 = vst [vmem:[%s225 + $0xd48] sm:$0xff] %v1076
                %v1078 = vld [vmem:[%s224 + $0x1a90] sm:$0xff]
                %1079 = vst [vmem:[%s225 + $0xd50] sm:$0xff] %v1078
                %v1080 = vld [vmem:[%s224 + $0x1a98] sm:$0xff]
                %1081 = vst [vmem:[%s225 + $0xd58] sm:$0xff] %v1080
                %v1082 = vld [vmem:[%s224 + $0x1ac0] sm:$0xff]
                %1083 = vst [vmem:[%s225 + $0xd60] sm:$0xff] %v1082
                %v1084 = vld [vmem:[%s224 + $0x1ac8] sm:$0xff]
                %1085 = vst [vmem:[%s225 + $0xd68] sm:$0xff] %v1084
                %v1086 = vld [vmem:[%s224 + $0x1ad0] sm:$0xff]
                %1087 = vst [vmem:[%s225 + $0xd70] sm:$0xff] %v1086
                %v1088 = vld [vmem:[%s224 + $0x1ad8] sm:$0xff]
                %1089 = vst [vmem:[%s225 + $0xd78] sm:$0xff] %v1088
                %v1090 = vld [vmem:[%s224 + $0x1b00] sm:$0xff]
                %1091 = vst [vmem:[%s225 + $0xd80] sm:$0xff] %v1090
                %v1092 = vld [vmem:[%s224 + $0x1b08] sm:$0xff]
                %1093 = vst [vmem:[%s225 + $0xd88] sm:$0xff] %v1092
                %v1094 = vld [vmem:[%s224 + $0x1b10] sm:$0xff]
                %1095 = vst [vmem:[%s225 + $0xd90] sm:$0xff] %v1094
                %v1096 = vld [vmem:[%s224 + $0x1b18] sm:$0xff]
                %1097 = vst [vmem:[%s225 + $0xd98] sm:$0xff] %v1096
                %v1098 = vld [vmem:[%s224 + $0x1b40] sm:$0xff]
                %1099 = vst [vmem:[%s225 + $0xda0] sm:$0xff] %v1098
                %v1100 = vld [vmem:[%s224 + $0x1b48] sm:$0xff]
                %1101 = vst [vmem:[%s225 + $0xda8] sm:$0xff] %v1100
                %v1102 = vld [vmem:[%s224 + $0x1b50] sm:$0xff]
                %1103 = vst [vmem:[%s225 + $0xdb0] sm:$0xff] %v1102
                %v1104 = vld [vmem:[%s224 + $0x1b58] sm:$0xff]
                %1105 = vst [vmem:[%s225 + $0xdb8] sm:$0xff] %v1104
                %v1106 = vld [vmem:[%s224 + $0x1b80] sm:$0xff]
                %1107 = vst [vmem:[%s225 + $0xdc0] sm:$0xff] %v1106
                %v1108 = vld [vmem:[%s224 + $0x1b88] sm:$0xff]
                %1109 = vst [vmem:[%s225 + $0xdc8] sm:$0xff] %v1108
                %v1110 = vld [vmem:[%s224 + $0x1b90] sm:$0xff]
                %1111 = vst [vmem:[%s225 + $0xdd0] sm:$0xff] %v1110
                %v1112 = vld [vmem:[%s224 + $0x1b98] sm:$0xff]
                %1113 = vst [vmem:[%s225 + $0xdd8] sm:$0xff] %v1112
                %v1114 = vld [vmem:[%s224 + $0x1bc0] sm:$0xff]
                %1115 = vst [vmem:[%s225 + $0xde0] sm:$0xff] %v1114
                %v1116 = vld [vmem:[%s224 + $0x1bc8] sm:$0xff]
                %1117 = vst [vmem:[%s225 + $0xde8] sm:$0xff] %v1116
                %v1118 = vld [vmem:[%s224 + $0x1bd0] sm:$0xff]
                %1119 = vst [vmem:[%s225 + $0xdf0] sm:$0xff] %v1118
                %v1120 = vld [vmem:[%s224 + $0x1bd8] sm:$0xff]
                %1121 = vst [vmem:[%s225 + $0xdf8] sm:$0xff] %v1120
                %v1122 = vld [vmem:[%s224 + $0x1c00] sm:$0xff]
                %1123 = vst [vmem:[%s225 + $0xe00] sm:$0xff] %v1122
                %v1124 = vld [vmem:[%s224 + $0x1c08] sm:$0xff]
                %1125 = vst [vmem:[%s225 + $0xe08] sm:$0xff] %v1124
                %v1126 = vld [vmem:[%s224 + $0x1c10] sm:$0xff]
                %1127 = vst [vmem:[%s225 + $0xe10] sm:$0xff] %v1126
                %v1128 = vld [vmem:[%s224 + $0x1c18] sm:$0xff]
                %1129 = vst [vmem:[%s225 + $0xe18] sm:$0xff] %v1128
                %v1130 = vld [vmem:[%s224 + $0x1c40] sm:$0xff]
                %1131 = vst [vmem:[%s225 + $0xe20] sm:$0xff] %v1130
                %v1132 = vld [vmem:[%s224 + $0x1c48] sm:$0xff]
                %1133 = vst [vmem:[%s225 + $0xe28] sm:$0xff] %v1132
                %v1134 = vld [vmem:[%s224 + $0x1c50] sm:$0xff]
                %1135 = vst [vmem:[%s225 + $0xe30] sm:$0xff] %v1134
                %v1136 = vld [vmem:[%s224 + $0x1c58] sm:$0xff]
                %1137 = vst [vmem:[%s225 + $0xe38] sm:$0xff] %v1136
                %v1138 = vld [vmem:[%s224 + $0x1c80] sm:$0xff]
                %1139 = vst [vmem:[%s225 + $0xe40] sm:$0xff] %v1138
                %v1140 = vld [vmem:[%s224 + $0x1c88] sm:$0xff]
                %1141 = vst [vmem:[%s225 + $0xe48] sm:$0xff] %v1140
                %v1142 = vld [vmem:[%s224 + $0x1c90] sm:$0xff]
                %1143 = vst [vmem:[%s225 + $0xe50] sm:$0xff] %v1142
                %v1144 = vld [vmem:[%s224 + $0x1c98] sm:$0xff]
                %1145 = vst [vmem:[%s225 + $0xe58] sm:$0xff] %v1144
                %v1146 = vld [vmem:[%s224 + $0x1cc0] sm:$0xff]
                %1147 = vst [vmem:[%s225 + $0xe60] sm:$0xff] %v1146
                %v1148 = vld [vmem:[%s224 + $0x1cc8] sm:$0xff]
                %1149 = vst [vmem:[%s225 + $0xe68] sm:$0xff] %v1148
                %v1150 = vld [vmem:[%s224 + $0x1cd0] sm:$0xff]
                %1151 = vst [vmem:[%s225 + $0xe70] sm:$0xff] %v1150
                %v1152 = vld [vmem:[%s224 + $0x1cd8] sm:$0xff]
                %1153 = vst [vmem:[%s225 + $0xe78] sm:$0xff] %v1152
                %v1154 = vld [vmem:[%s224 + $0x1d00] sm:$0xff]
                %1155 = vst [vmem:[%s225 + $0xe80] sm:$0xff] %v1154
                %v1156 = vld [vmem:[%s224 + $0x1d08] sm:$0xff]
                %1157 = vst [vmem:[%s225 + $0xe88] sm:$0xff] %v1156
                %v1158 = vld [vmem:[%s224 + $0x1d10] sm:$0xff]
                %1159 = vst [vmem:[%s225 + $0xe90] sm:$0xff] %v1158
                %v1160 = vld [vmem:[%s224 + $0x1d18] sm:$0xff]
                %1161 = vst [vmem:[%s225 + $0xe98] sm:$0xff] %v1160
                %v1162 = vld [vmem:[%s224 + $0x1d40] sm:$0xff]
                %1163 = vst [vmem:[%s225 + $0xea0] sm:$0xff] %v1162
                %v1164 = vld [vmem:[%s224 + $0x1d48] sm:$0xff]
                %1165 = vst [vmem:[%s225 + $0xea8] sm:$0xff] %v1164
                %v1166 = vld [vmem:[%s224 + $0x1d50] sm:$0xff]
                %1167 = vst [vmem:[%s225 + $0xeb0] sm:$0xff] %v1166
                %v1168 = vld [vmem:[%s224 + $0x1d58] sm:$0xff]
                %1169 = vst [vmem:[%s225 + $0xeb8] sm:$0xff] %v1168
                %v1170 = vld [vmem:[%s224 + $0x1d80] sm:$0xff]
                %1171 = vst [vmem:[%s225 + $0xec0] sm:$0xff] %v1170
                %v1172 = vld [vmem:[%s224 + $0x1d88] sm:$0xff]
                %1173 = vst [vmem:[%s225 + $0xec8] sm:$0xff] %v1172
                %v1174 = vld [vmem:[%s224 + $0x1d90] sm:$0xff]
                %1175 = vst [vmem:[%s225 + $0xed0] sm:$0xff] %v1174
                %v1176 = vld [vmem:[%s224 + $0x1d98] sm:$0xff]
                %1177 = vst [vmem:[%s225 + $0xed8] sm:$0xff] %v1176
                %v1178 = vld [vmem:[%s224 + $0x1dc0] sm:$0xff]
                %1179 = vst [vmem:[%s225 + $0xee0] sm:$0xff] %v1178
                %v1180 = vld [vmem:[%s224 + $0x1dc8] sm:$0xff]
                %1181 = vst [vmem:[%s225 + $0xee8] sm:$0xff] %v1180
                %v1182 = vld [vmem:[%s224 + $0x1dd0] sm:$0xff]
                %1183 = vst [vmem:[%s225 + $0xef0] sm:$0xff] %v1182
                %v1184 = vld [vmem:[%s224 + $0x1dd8] sm:$0xff]
                %1185 = vst [vmem:[%s225 + $0xef8] sm:$0xff] %v1184
                %v1186 = vld [vmem:[%s224 + $0x1e00] sm:$0xff]
                %1187 = vst [vmem:[%s225 + $0xf00] sm:$0xff] %v1186
                %v1188 = vld [vmem:[%s224 + $0x1e08] sm:$0xff]
                %1189 = vst [vmem:[%s225 + $0xf08] sm:$0xff] %v1188
                %v1190 = vld [vmem:[%s224 + $0x1e10] sm:$0xff]
                %1191 = vst [vmem:[%s225 + $0xf10] sm:$0xff] %v1190
                %v1192 = vld [vmem:[%s224 + $0x1e18] sm:$0xff]
                %1193 = vst [vmem:[%s225 + $0xf18] sm:$0xff] %v1192
                %v1194 = vld [vmem:[%s224 + $0x1e40] sm:$0xff]
                %1195 = vst [vmem:[%s225 + $0xf20] sm:$0xff] %v1194
                %v1196 = vld [vmem:[%s224 + $0x1e48] sm:$0xff]
                %1197 = vst [vmem:[%s225 + $0xf28] sm:$0xff] %v1196
                %v1198 = vld [vmem:[%s224 + $0x1e50] sm:$0xff]
                %1199 = vst [vmem:[%s225 + $0xf30] sm:$0xff] %v1198
                %v1200 = vld [vmem:[%s224 + $0x1e58] sm:$0xff]
                %1201 = vst [vmem:[%s225 + $0xf38] sm:$0xff] %v1200
                %v1202 = vld [vmem:[%s224 + $0x1e80] sm:$0xff]
                %1203 = vst [vmem:[%s225 + $0xf40] sm:$0xff] %v1202
                %v1204 = vld [vmem:[%s224 + $0x1e88] sm:$0xff]
                %1205 = vst [vmem:[%s225 + $0xf48] sm:$0xff] %v1204
                %v1206 = vld [vmem:[%s224 + $0x1e90] sm:$0xff]
                %1207 = vst [vmem:[%s225 + $0xf50] sm:$0xff] %v1206
                %v1208 = vld [vmem:[%s224 + $0x1e98] sm:$0xff]
                %1209 = vst [vmem:[%s225 + $0xf58] sm:$0xff] %v1208
                %v1210 = vld [vmem:[%s224 + $0x1ec0] sm:$0xff]
                %1211 = vst [vmem:[%s225 + $0xf60] sm:$0xff] %v1210
                %v1212 = vld [vmem:[%s224 + $0x1ec8] sm:$0xff]
                %1213 = vst [vmem:[%s225 + $0xf68] sm:$0xff] %v1212
                %v1214 = vld [vmem:[%s224 + $0x1ed0] sm:$0xff]
                %1215 = vst [vmem:[%s225 + $0xf70] sm:$0xff] %v1214
                %v1216 = vld [vmem:[%s224 + $0x1ed8] sm:$0xff]
                %1217 = vst [vmem:[%s225 + $0xf78] sm:$0xff] %v1216
                %v1218 = vld [vmem:[%s224 + $0x1f00] sm:$0xff]
                %1219 = vst [vmem:[%s225 + $0xf80] sm:$0xff] %v1218
                %v1220 = vld [vmem:[%s224 + $0x1f08] sm:$0xff]
                %1221 = vst [vmem:[%s225 + $0xf88] sm:$0xff] %v1220
                %v1222 = vld [vmem:[%s224 + $0x1f10] sm:$0xff]
                %1223 = vst [vmem:[%s225 + $0xf90] sm:$0xff] %v1222
                %v1224 = vld [vmem:[%s224 + $0x1f18] sm:$0xff]
                %1225 = vst [vmem:[%s225 + $0xf98] sm:$0xff] %v1224
                %v1226 = vld [vmem:[%s224 + $0x1f40] sm:$0xff]
                %1227 = vst [vmem:[%s225 + $0xfa0] sm:$0xff] %v1226
                %v1228 = vld [vmem:[%s224 + $0x1f48] sm:$0xff]
                %1229 = vst [vmem:[%s225 + $0xfa8] sm:$0xff] %v1228
                %v1230 = vld [vmem:[%s224 + $0x1f50] sm:$0xff]
                %1231 = vst [vmem:[%s225 + $0xfb0] sm:$0xff] %v1230
                %v1232 = vld [vmem:[%s224 + $0x1f58] sm:$0xff]
                %1233 = vst [vmem:[%s225 + $0xfb8] sm:$0xff] %v1232
                %v1234 = vld [vmem:[%s224 + $0x1f80] sm:$0xff]
                %1235 = vst [vmem:[%s225 + $0xfc0] sm:$0xff] %v1234
                %v1236 = vld [vmem:[%s224 + $0x1f88] sm:$0xff]
                %1237 = vst [vmem:[%s225 + $0xfc8] sm:$0xff] %v1236
                %v1238 = vld [vmem:[%s224 + $0x1f90] sm:$0xff]
                %1239 = vst [vmem:[%s225 + $0xfd0] sm:$0xff] %v1238
                %v1240 = vld [vmem:[%s224 + $0x1f98] sm:$0xff]
                %1241 = vst [vmem:[%s225 + $0xfd8] sm:$0xff] %v1240
                %v1242 = vld [vmem:[%s224 + $0x1fc0] sm:$0xff]
                %1243 = vst [vmem:[%s225 + $0xfe0] sm:$0xff] %v1242
                %v1244 = vld [vmem:[%s224 + $0x1fc8] sm:$0xff]
                %1245 = vst [vmem:[%s225 + $0xfe8] sm:$0xff] %v1244
                %v1246 = vld [vmem:[%s224 + $0x1fd0] sm:$0xff]
                %1247 = vst [vmem:[%s225 + $0xff0] sm:$0xff] %v1246
                %v1248 = vld [vmem:[%s224 + $0x1fd8] sm:$0xff]
                %1249 = vst [vmem:[%s225 + $0xff8] sm:$0xff] %v1248
              $region41: #{new_temporal_classifier_forward.1} parent=35 // loop_footer
                %s223 = sadd.s32 1, %s219
              $region42: #{new_temporal_classifier_forward.1} parent=35 // loop_footer_branch
                %218 = sbr.rel target = $region38
              $region43: #{new_temporal_classifier_forward.1} parent=35 // loop_exit
                _
            $region36: #{new_temporal_classifier_forward.1} parent=31 // pred_fallthru
              _
            // Predicated region
            $region44: #{new_temporal_classifier_forward.1} parent=31 // pred_check
              _
            $region45: #{new_temporal_classifier_forward.1} parent=31 // pred_check_branch
              %1251 = sbr.rel target = $region47
            $region46: #{new_temporal_classifier_forward.1} parent=31 // pred_region
              _
            $region47: #{new_temporal_classifier_forward.1} parent=31 // pred_fallthru
              _
          $region32: #{new_temporal_classifier_forward.1} parent=27 // pred_fallthru
            _
          %1252 = vnop
        $region28: #{new_temporal_classifier_forward.1} parent=23 // pred_fallthru
          _
        // Predicated region
        $region48: #{new_temporal_classifier_forward.1} parent=23 // pred_check
          %p1253 = pneg %p96
        $region49: #{new_temporal_classifier_forward.1} parent=23 // pred_check_branch
          %1255 = sbr.rel (%p1253) target = $region51
        $region50: #{new_temporal_classifier_forward.1} parent=23 // pred_region
          %s1256 = smul.u32 8, %s20
          %p1257 = scmp.lt.s32.totalorder %s1256, 15
          %s1258 = scalar_select %p1257, %s1256, 15
          %s1259 = scalar_lea.vmem %s2, %s1258
          %s1260 = smul.u32 8, %s20
        $region51: #{new_temporal_classifier_forward.1} parent=23 // pred_fallthru
          _
        // Predicated region
        $region52: #{new_temporal_classifier_forward.1} parent=23 // pred_check
          %p1261 = pneg %p122
        $region53: #{new_temporal_classifier_forward.1} parent=23 // pred_check_branch
          %1263 = sbr.rel (%p1261) target = $region55
        $region54: #{new_temporal_classifier_forward.1} parent=23 // pred_region
          %s1264 = smul.u32 128, %s20
          %p1265 = scmp.lt.s32.totalorder %s1264, 255
          %s1266 = scalar_select %p1265, %s1264, 255
          %s1267 = smul.addr %s1266, 8
          %s1268 = scalar_lea.vmem %s3, %s1267
          %s1269 = smul.u32 128, %s20
        $region55: #{new_temporal_classifier_forward.1} parent=23 // pred_fallthru
          _
      $region24: #{new_temporal_classifier_forward.1} parent=5 // pred_fallthru
        _
      %p1270 = scmp.le.s32.totalorder 1, %s12
      %p1271 = scmp.lt.s32.totalorder %s12, 3
      %p1272 = pnand %p1270, %p1271
      %p1273 = pneg %p1272
      // Predicated region
      $region56: #{new_temporal_classifier_forward.1} parent=5 // pred_check
        _
      $region57: #{new_temporal_classifier_forward.1} parent=5 // pred_check_branch
        %1275 = sbr.rel (%p1272) target = $region59
      $region58: #{new_temporal_classifier_forward.1} parent=5 // pred_region
        %s1276 = ssub.s32 %s12, 1
        %s1277 = sand.u32 %s63, 1
        %s1278 = sand.u32 %s63, 1
        %s1279 = smul.addr %s1278, 4096
        %s1280 = scalar_lea.vmem [#allocation2], %s1279
        // Predicated region
        $region60: #{new_temporal_classifier_forward.1} parent=58 // pred_check
          %p1281 = pneg %p76
        $region61: #{new_temporal_classifier_forward.1} parent=58 // pred_check_branch
          %1283 = sbr.rel (%p1281) target = $region63
        $region62: #{new_temporal_classifier_forward.1} parent=58 // pred_region
          _
        $region63: #{new_temporal_classifier_forward.1} parent=58 // pred_fallthru
          _
        %p1284 = scmp.lt.s32.totalorder %s21, 0
        %s1285 = scalar_select %p1284, %s21, 0
        %s1286 = smul.addr %s1285, 8
        %s1287 = scalar_lea.vmem %s0, %s1286
        %p1288 = pneg %p50
        %p1289 = pneg %p47
        %s1290 = sand.u32 %s63, 1
        %s1291 = sand.u32 %s63, 1
        %s1292 = smul.addr %s1291, 4096
        %s1293 = scalar_lea.vmem [#allocation2], %s1292
        %p1294 = pneg %p76
        %p1295 = pneg %p73
        %s1296 = smul.u32 8, %s22
        %p1297 = scmp.lt.s32.totalorder %s1296, 15
        %s1298 = scalar_select %p1297, %s1296, 15
        %s1299 = scalar_lea.vmem %s2, %s1298
        %p1300 = pneg %p102
        %p1301 = pneg %p99
        %s1302 = smul.u32 128, %s22
        %p1303 = scmp.lt.s32.totalorder %s1302, 255
        %s1304 = scalar_select %p1303, %s1302, 255
        %s1305 = smul.addr %s1304, 8
        %s1306 = scalar_lea.vmem %s3, %s1305
        %p1307 = pneg %p128
        %p1308 = pneg %p125
        %p1309 = pneg %p149
        %p1310 = pneg %p146
        %p1311 = pneg %p175
        %p1312 = pneg %p172
        %p1313 = scmp.lt.s32.totalorder %s21, 0
        %s1314 = scalar_select %p1313, %s21, 0
        %s1315 = smul.addr %s1314, 8
        %s1316 = scalar_lea.vmem %s0, %s1315
        %s1317 = smul.u32 8, %s22
        %s1318 = smul.u32 8, %s22
        %p1319 = scmp.lt.s32.totalorder %s1318, 15
        %s1320 = scalar_select %p1319, %s1318, 15
        %s1321 = scalar_lea.vmem %s2, %s1320
        %s1322 = smul.u32 8, %s22
        %s1323 = smul.u32 128, %s22
        %p1324 = scmp.lt.s32.totalorder %s1323, 255
        %s1325 = scalar_select %p1324, %s1323, 255
        %s1326 = smul.addr %s1325, 8
        %s1327 = scalar_lea.vmem %s3, %s1326
        %s1328 = smul.u32 128, %s22
        %p1329 = scmp.eq.s32.totalorder %s22, 0
        // Predicated region
        $region64: #{new_temporal_classifier_forward.1} parent=58 // pred_check
          %p1330 = pneg %p1329
        $region65: #{new_temporal_classifier_forward.1} parent=58 // pred_check_branch
          %1332 = sbr.rel (%p1330) target = $region67
        $region66: #{new_temporal_classifier_forward.1} parent=58 // pred_region
          %v1333 = vld [vmem:[%s4] sm:$0x1]
          %v1335 = vlaneseq
          %v1336 = vshrl.u32 %v1335, 7
          %v1337 = vsub.s32 0, %v1336
          %v1338 = vrot.slane %v1333, %v1337
          %vm1340 = vcmask 25600
          %1341 = vst.msk [vmem:[#allocation3] sm:$0x3] %vm1340, %v1338
        $region67: #{new_temporal_classifier_forward.1} parent=58 // pred_fallthru
          _
        %v1342 = vld [vmem:[%s1316] sm:$0xff]
        %v1343 = vld [vmem:[%s1280] sm:$0xff]
        %v1344 = vld [vmem:[%s1280 + $0x8] sm:$0xff]
        %v1345 = vld [vmem:[%s1280 + $0x10] sm:$0xff]
        %v1346 = vld [vmem:[%s1280 + $0x18] sm:$0xff]
        %v1347 = vld [vmem:[%s1280 + $0x20] sm:$0xff]
        %v1348 = vld [vmem:[%s1280 + $0x28] sm:$0xff]
        %v1349 = vld [vmem:[%s1280 + $0x30] sm:$0xff]
        %v1350 = vld [vmem:[%s1280 + $0x38] sm:$0xff]
        %v1351 = vld [vmem:[%s1280 + $0x40] sm:$0xff]
        %v1352 = vld [vmem:[%s1280 + $0x48] sm:$0xff]
        %v1353 = vld [vmem:[%s1280 + $0x50] sm:$0xff]
        %v1354 = vld [vmem:[%s1280 + $0x58] sm:$0xff]
        %v1355 = vld [vmem:[%s1280 + $0x60] sm:$0xff]
        %v1356 = vld [vmem:[%s1280 + $0x68] sm:$0xff]
        %v1357 = vld [vmem:[%s1280 + $0x70] sm:$0xff]
        %v1358 = vld [vmem:[%s1280 + $0x78] sm:$0xff]
        %v1359 = vld [vmem:[%s1280 + $0x80] sm:$0xff]
        %v1360 = vld [vmem:[%s1280 + $0x88] sm:$0xff]
        %v1361 = vld [vmem:[%s1280 + $0x90] sm:$0xff]
        %v1362 = vld [vmem:[%s1280 + $0x98] sm:$0xff]
        %v1363 = vld [vmem:[%s1280 + $0xa0] sm:$0xff]
        %v1364 = vld [vmem:[%s1280 + $0xa8] sm:$0xff]
        %v1365 = vld [vmem:[%s1280 + $0xb0] sm:$0xff]
        %v1366 = vld [vmem:[%s1280 + $0xb8] sm:$0xff]
        %v1367 = vld [vmem:[%s1280 + $0xc0] sm:$0xff]
        %v1368 = vld [vmem:[%s1280 + $0xc8] sm:$0xff]
        %v1369 = vld [vmem:[%s1280 + $0xd0] sm:$0xff]
        %v1370 = vld [vmem:[%s1280 + $0xd8] sm:$0xff]
        %v1371 = vld [vmem:[%s1280 + $0xe0] sm:$0xff]
        %v1372 = vld [vmem:[%s1280 + $0xe8] sm:$0xff]
        %v1373 = vld [vmem:[%s1280 + $0xf0] sm:$0xff]
        %v1374 = vld [vmem:[%s1280 + $0xf8] sm:$0xff]
        %v1375 = vld [vmem:[%s1280 + $0x100] sm:$0xff]
        %v1376 = vld [vmem:[%s1280 + $0x108] sm:$0xff]
        %v1377 = vld [vmem:[%s1280 + $0x110] sm:$0xff]
        %v1378 = vld [vmem:[%s1280 + $0x118] sm:$0xff]
        %v1379 = vld [vmem:[%s1280 + $0x120] sm:$0xff]
        %v1380 = vld [vmem:[%s1280 + $0x128] sm:$0xff]
        %v1381 = vld [vmem:[%s1280 + $0x130] sm:$0xff]
        %v1382 = vld [vmem:[%s1280 + $0x138] sm:$0xff]
        %v1383 = vld [vmem:[%s1280 + $0x140] sm:$0xff]
        %v1384 = vld [vmem:[%s1280 + $0x148] sm:$0xff]
        %v1385 = vld [vmem:[%s1280 + $0x150] sm:$0xff]
        %v1386 = vld [vmem:[%s1280 + $0x158] sm:$0xff]
        %v1387 = vld [vmem:[%s1280 + $0x160] sm:$0xff]
        %v1388 = vld [vmem:[%s1280 + $0x168] sm:$0xff]
        %v1389 = vld [vmem:[%s1280 + $0x170] sm:$0xff]
        %v1390 = vld [vmem:[%s1280 + $0x178] sm:$0xff]
        %v1391 = vld [vmem:[%s1280 + $0x180] sm:$0xff]
        %v1392 = vld [vmem:[%s1280 + $0x188] sm:$0xff]
        %v1393 = vld [vmem:[%s1280 + $0x190] sm:$0xff]
        %v1394 = vld [vmem:[%s1280 + $0x198] sm:$0xff]
        %v1395 = vld [vmem:[%s1280 + $0x1a0] sm:$0xff]
        %v1396 = vld [vmem:[%s1280 + $0x1a8] sm:$0xff]
        %v1397 = vld [vmem:[%s1280 + $0x1b0] sm:$0xff]
        %v1398 = vld [vmem:[%s1280 + $0x1b8] sm:$0xff]
        %v1399 = vld [vmem:[%s1280 + $0x1c0] sm:$0xff]
        %v1400 = vld [vmem:[%s1280 + $0x1c8] sm:$0xff]
        %v1401 = vld [vmem:[%s1280 + $0x1d0] sm:$0xff]
        %v1402 = vld [vmem:[%s1280 + $0x1d8] sm:$0xff]
        %v1403 = vld [vmem:[%s1280 + $0x1e0] sm:$0xff]
        %v1404 = vld [vmem:[%s1280 + $0x1e8] sm:$0xff]
        %v1405 = vld [vmem:[%s1280 + $0x1f0] sm:$0xff]
        %v1406 = vld [vmem:[%s1280 + $0x1f8] sm:$0xff]
        %v1407 = vld [vmem:[%s1280 + $0x200] sm:$0xff]
        %v1408 = vld [vmem:[%s1280 + $0x208] sm:$0xff]
        %v1409 = vld [vmem:[%s1280 + $0x210] sm:$0xff]
        %v1410 = vld [vmem:[%s1280 + $0x218] sm:$0xff]
        %v1411 = vld [vmem:[%s1280 + $0x220] sm:$0xff]
        %v1412 = vld [vmem:[%s1280 + $0x228] sm:$0xff]
        %v1413 = vld [vmem:[%s1280 + $0x230] sm:$0xff]
        %v1414 = vld [vmem:[%s1280 + $0x238] sm:$0xff]
        %v1415 = vld [vmem:[%s1280 + $0x240] sm:$0xff]
        %v1416 = vld [vmem:[%s1280 + $0x248] sm:$0xff]
        %v1417 = vld [vmem:[%s1280 + $0x250] sm:$0xff]
        %v1418 = vld [vmem:[%s1280 + $0x258] sm:$0xff]
        %v1419 = vld [vmem:[%s1280 + $0x260] sm:$0xff]
        %v1420 = vld [vmem:[%s1280 + $0x268] sm:$0xff]
        %v1421 = vld [vmem:[%s1280 + $0x270] sm:$0xff]
        %v1422 = vld [vmem:[%s1280 + $0x278] sm:$0xff]
        %v1423 = vld [vmem:[%s1280 + $0x280] sm:$0xff]
        %v1424 = vld [vmem:[%s1280 + $0x288] sm:$0xff]
        %v1425 = vld [vmem:[%s1280 + $0x290] sm:$0xff]
        %v1426 = vld [vmem:[%s1280 + $0x298] sm:$0xff]
        %v1427 = vld [vmem:[%s1280 + $0x2a0] sm:$0xff]
        %v1428 = vld [vmem:[%s1280 + $0x2a8] sm:$0xff]
        %v1429 = vld [vmem:[%s1280 + $0x2b0] sm:$0xff]
        %v1430 = vld [vmem:[%s1280 + $0x2b8] sm:$0xff]
        %v1431 = vld [vmem:[%s1280 + $0x2c0] sm:$0xff]
        %v1432 = vld [vmem:[%s1280 + $0x2c8] sm:$0xff]
        %v1433 = vld [vmem:[%s1280 + $0x2d0] sm:$0xff]
        %v1434 = vld [vmem:[%s1280 + $0x2d8] sm:$0xff]
        %v1435 = vld [vmem:[%s1280 + $0x2e0] sm:$0xff]
        %v1436 = vld [vmem:[%s1280 + $0x2e8] sm:$0xff]
        %v1437 = vld [vmem:[%s1280 + $0x2f0] sm:$0xff]
        %v1438 = vld [vmem:[%s1280 + $0x2f8] sm:$0xff]
        %v1439 = vld [vmem:[%s1280 + $0x300] sm:$0xff]
        %v1440 = vld [vmem:[%s1280 + $0x308] sm:$0xff]
        %v1441 = vld [vmem:[%s1280 + $0x310] sm:$0xff]
        %v1442 = vld [vmem:[%s1280 + $0x318] sm:$0xff]
        %v1443 = vld [vmem:[%s1280 + $0x320] sm:$0xff]
        %v1444 = vld [vmem:[%s1280 + $0x328] sm:$0xff]
        %v1445 = vld [vmem:[%s1280 + $0x330] sm:$0xff]
        %v1446 = vld [vmem:[%s1280 + $0x338] sm:$0xff]
        %v1447 = vld [vmem:[%s1280 + $0x340] sm:$0xff]
        %v1448 = vld [vmem:[%s1280 + $0x348] sm:$0xff]
        %v1449 = vld [vmem:[%s1280 + $0x350] sm:$0xff]
        %v1450 = vld [vmem:[%s1280 + $0x358] sm:$0xff]
        %v1451 = vld [vmem:[%s1280 + $0x360] sm:$0xff]
        %v1452 = vld [vmem:[%s1280 + $0x368] sm:$0xff]
        %v1453 = vld [vmem:[%s1280 + $0x370] sm:$0xff]
        %v1454 = vld [vmem:[%s1280 + $0x378] sm:$0xff]
        %v1455 = vld [vmem:[%s1280 + $0x380] sm:$0xff]
        %v1456 = vld [vmem:[%s1280 + $0x388] sm:$0xff]
        %v1457 = vld [vmem:[%s1280 + $0x390] sm:$0xff]
        %v1458 = vld [vmem:[%s1280 + $0x398] sm:$0xff]
        %v1459 = vld [vmem:[%s1280 + $0x3a0] sm:$0xff]
        %v1460 = vld [vmem:[%s1280 + $0x3a8] sm:$0xff]
        %v1461 = vld [vmem:[%s1280 + $0x3b0] sm:$0xff]
        %v1462 = vld [vmem:[%s1280 + $0x3b8] sm:$0xff]
        %v1463 = vld [vmem:[%s1280 + $0x3c0] sm:$0xff]
        %v1464 = vld [vmem:[%s1280 + $0x3c8] sm:$0xff]
        %v1465 = vld [vmem:[%s1280 + $0x3d0] sm:$0xff]
        %v1466 = vld [vmem:[%s1280 + $0x3d8] sm:$0xff]
        %v1467 = vld [vmem:[%s1280 + $0x3e0] sm:$0xff]
        %v1468 = vld [vmem:[%s1280 + $0x3e8] sm:$0xff]
        %v1469 = vld [vmem:[%s1280 + $0x3f0] sm:$0xff]
        %v1470 = vld [vmem:[%s1280 + $0x3f8] sm:$0xff]
        %v1471 = vld [vmem:[%s1280 + $0x400] sm:$0xff]
        %v1472 = vld [vmem:[%s1280 + $0x408] sm:$0xff]
        %v1473 = vld [vmem:[%s1280 + $0x410] sm:$0xff]
        %v1474 = vld [vmem:[%s1280 + $0x418] sm:$0xff]
        %v1475 = vld [vmem:[%s1280 + $0x420] sm:$0xff]
        %v1476 = vld [vmem:[%s1280 + $0x428] sm:$0xff]
        %v1477 = vld [vmem:[%s1280 + $0x430] sm:$0xff]
        %v1478 = vld [vmem:[%s1280 + $0x438] sm:$0xff]
        %v1479 = vld [vmem:[%s1280 + $0x440] sm:$0xff]
        %v1480 = vld [vmem:[%s1280 + $0x448] sm:$0xff]
        %v1481 = vld [vmem:[%s1280 + $0x450] sm:$0xff]
        %v1482 = vld [vmem:[%s1280 + $0x458] sm:$0xff]
        %v1483 = vld [vmem:[%s1280 + $0x460] sm:$0xff]
        %v1484 = vld [vmem:[%s1280 + $0x468] sm:$0xff]
        %v1485 = vld [vmem:[%s1280 + $0x470] sm:$0xff]
        %v1486 = vld [vmem:[%s1280 + $0x478] sm:$0xff]
        %v1487 = vld [vmem:[%s1280 + $0x480] sm:$0xff]
        %v1488 = vld [vmem:[%s1280 + $0x488] sm:$0xff]
        %v1489 = vld [vmem:[%s1280 + $0x490] sm:$0xff]
        %v1490 = vld [vmem:[%s1280 + $0x498] sm:$0xff]
        %v1491 = vld [vmem:[%s1280 + $0x4a0] sm:$0xff]
        %v1492 = vld [vmem:[%s1280 + $0x4a8] sm:$0xff]
        %v1493 = vld [vmem:[%s1280 + $0x4b0] sm:$0xff]
        %v1494 = vld [vmem:[%s1280 + $0x4b8] sm:$0xff]
        %v1495 = vld [vmem:[%s1280 + $0x4c0] sm:$0xff]
        %v1496 = vld [vmem:[%s1280 + $0x4c8] sm:$0xff]
        %v1497 = vld [vmem:[%s1280 + $0x4d0] sm:$0xff]
        %v1498 = vld [vmem:[%s1280 + $0x4d8] sm:$0xff]
        %v1499 = vld [vmem:[%s1280 + $0x4e0] sm:$0xff]
        %v1500 = vld [vmem:[%s1280 + $0x4e8] sm:$0xff]
        %v1501 = vld [vmem:[%s1280 + $0x4f0] sm:$0xff]
        %v1502 = vld [vmem:[%s1280 + $0x4f8] sm:$0xff]
        %v1503 = vld [vmem:[%s1280 + $0x500] sm:$0xff]
        %v1504 = vld [vmem:[%s1280 + $0x508] sm:$0xff]
        %v1505 = vld [vmem:[%s1280 + $0x510] sm:$0xff]
        %v1506 = vld [vmem:[%s1280 + $0x518] sm:$0xff]
        %v1507 = vld [vmem:[%s1280 + $0x520] sm:$0xff]
        %v1508 = vld [vmem:[%s1280 + $0x528] sm:$0xff]
        %v1509 = vld [vmem:[%s1280 + $0x530] sm:$0xff]
        %v1510 = vld [vmem:[%s1280 + $0x538] sm:$0xff]
        %v1511 = vld [vmem:[%s1280 + $0x540] sm:$0xff]
        %v1512 = vld [vmem:[%s1280 + $0x548] sm:$0xff]
        %v1513 = vld [vmem:[%s1280 + $0x550] sm:$0xff]
        %v1514 = vld [vmem:[%s1280 + $0x558] sm:$0xff]
        %v1515 = vld [vmem:[%s1280 + $0x560] sm:$0xff]
        %v1516 = vld [vmem:[%s1280 + $0x568] sm:$0xff]
        %v1517 = vld [vmem:[%s1280 + $0x570] sm:$0xff]
        %v1518 = vld [vmem:[%s1280 + $0x578] sm:$0xff]
        %v1519 = vld [vmem:[%s1280 + $0x580] sm:$0xff]
        %v1520 = vld [vmem:[%s1280 + $0x588] sm:$0xff]
        %v1521 = vld [vmem:[%s1280 + $0x590] sm:$0xff]
        %v1522 = vld [vmem:[%s1280 + $0x598] sm:$0xff]
        %v1523 = vld [vmem:[%s1280 + $0x5a0] sm:$0xff]
        %v1524 = vld [vmem:[%s1280 + $0x5a8] sm:$0xff]
        %v1525 = vld [vmem:[%s1280 + $0x5b0] sm:$0xff]
        %v1526 = vld [vmem:[%s1280 + $0x5b8] sm:$0xff]
        %v1527 = vld [vmem:[%s1280 + $0x5c0] sm:$0xff]
        %v1528 = vld [vmem:[%s1280 + $0x5c8] sm:$0xff]
        %v1529 = vld [vmem:[%s1280 + $0x5d0] sm:$0xff]
        %v1530 = vld [vmem:[%s1280 + $0x5d8] sm:$0xff]
        %v1531 = vld [vmem:[%s1280 + $0x5e0] sm:$0xff]
        %v1532 = vld [vmem:[%s1280 + $0x5e8] sm:$0xff]
        %v1533 = vld [vmem:[%s1280 + $0x5f0] sm:$0xff]
        %v1534 = vld [vmem:[%s1280 + $0x5f8] sm:$0xff]
        %v1535 = vld [vmem:[%s1280 + $0x600] sm:$0xff]
        %v1536 = vld [vmem:[%s1280 + $0x608] sm:$0xff]
        %v1537 = vld [vmem:[%s1280 + $0x610] sm:$0xff]
        %v1538 = vld [vmem:[%s1280 + $0x618] sm:$0xff]
        %v1539 = vld [vmem:[%s1280 + $0x620] sm:$0xff]
        %v1540 = vld [vmem:[%s1280 + $0x628] sm:$0xff]
        %v1541 = vld [vmem:[%s1280 + $0x630] sm:$0xff]
        %v1542 = vld [vmem:[%s1280 + $0x638] sm:$0xff]
        %v1543 = vld [vmem:[%s1280 + $0x640] sm:$0xff]
        %v1544 = vld [vmem:[%s1280 + $0x648] sm:$0xff]
        %v1545 = vld [vmem:[%s1280 + $0x650] sm:$0xff]
        %v1546 = vld [vmem:[%s1280 + $0x658] sm:$0xff]
        %v1547 = vld [vmem:[%s1280 + $0x660] sm:$0xff]
        %v1548 = vld [vmem:[%s1280 + $0x668] sm:$0xff]
        %v1549 = vld [vmem:[%s1280 + $0x670] sm:$0xff]
        %v1550 = vld [vmem:[%s1280 + $0x678] sm:$0xff]
        %v1551 = vld [vmem:[%s1280 + $0x680] sm:$0xff]
        %v1552 = vld [vmem:[%s1280 + $0x688] sm:$0xff]
        %v1553 = vld [vmem:[%s1280 + $0x690] sm:$0xff]
        %v1554 = vld [vmem:[%s1280 + $0x698] sm:$0xff]
        %v1555 = vld [vmem:[%s1280 + $0x6a0] sm:$0xff]
        %v1556 = vld [vmem:[%s1280 + $0x6a8] sm:$0xff]
        %v1557 = vld [vmem:[%s1280 + $0x6b0] sm:$0xff]
        %v1558 = vld [vmem:[%s1280 + $0x6b8] sm:$0xff]
        %v1559 = vld [vmem:[%s1280 + $0x6c0] sm:$0xff]
        %v1560 = vld [vmem:[%s1280 + $0x6c8] sm:$0xff]
        %v1561 = vld [vmem:[%s1280 + $0x6d0] sm:$0xff]
        %v1562 = vld [vmem:[%s1280 + $0x6d8] sm:$0xff]
        %v1563 = vld [vmem:[%s1280 + $0x6e0] sm:$0xff]
        %v1564 = vld [vmem:[%s1280 + $0x6e8] sm:$0xff]
        %v1565 = vld [vmem:[%s1280 + $0x6f0] sm:$0xff]
        %v1566 = vld [vmem:[%s1280 + $0x6f8] sm:$0xff]
        %v1567 = vld [vmem:[%s1280 + $0x700] sm:$0xff]
        %v1568 = vld [vmem:[%s1280 + $0x708] sm:$0xff]
        %v1569 = vld [vmem:[%s1280 + $0x710] sm:$0xff]
        %v1570 = vld [vmem:[%s1280 + $0x718] sm:$0xff]
        %v1571 = vld [vmem:[%s1280 + $0x720] sm:$0xff]
        %v1572 = vld [vmem:[%s1280 + $0x728] sm:$0xff]
        %v1573 = vld [vmem:[%s1280 + $0x730] sm:$0xff]
        %v1574 = vld [vmem:[%s1280 + $0x738] sm:$0xff]
        %v1575 = vld [vmem:[%s1280 + $0x740] sm:$0xff]
        %v1576 = vld [vmem:[%s1280 + $0x748] sm:$0xff]
        %v1577 = vld [vmem:[%s1280 + $0x750] sm:$0xff]
        %v1578 = vld [vmem:[%s1280 + $0x758] sm:$0xff]
        %v1579 = vld [vmem:[%s1280 + $0x760] sm:$0xff]
        %v1580 = vld [vmem:[%s1280 + $0x768] sm:$0xff]
        %v1581 = vld [vmem:[%s1280 + $0x770] sm:$0xff]
        %v1582 = vld [vmem:[%s1280 + $0x778] sm:$0xff]
        %v1583 = vld [vmem:[%s1280 + $0x780] sm:$0xff]
        %v1584 = vld [vmem:[%s1280 + $0x788] sm:$0xff]
        %v1585 = vld [vmem:[%s1280 + $0x790] sm:$0xff]
        %v1586 = vld [vmem:[%s1280 + $0x798] sm:$0xff]
        %v1587 = vld [vmem:[%s1280 + $0x7a0] sm:$0xff]
        %v1588 = vld [vmem:[%s1280 + $0x7a8] sm:$0xff]
        %v1589 = vld [vmem:[%s1280 + $0x7b0] sm:$0xff]
        %v1590 = vld [vmem:[%s1280 + $0x7b8] sm:$0xff]
        %v1591 = vld [vmem:[%s1280 + $0x7c0] sm:$0xff]
        %v1592 = vld [vmem:[%s1280 + $0x7c8] sm:$0xff]
        %v1593 = vld [vmem:[%s1280 + $0x7d0] sm:$0xff]
        %v1594 = vld [vmem:[%s1280 + $0x7d8] sm:$0xff]
        %v1595 = vld [vmem:[%s1280 + $0x7e0] sm:$0xff]
        %v1596 = vld [vmem:[%s1280 + $0x7e8] sm:$0xff]
        %v1597 = vld [vmem:[%s1280 + $0x7f0] sm:$0xff]
        %v1598 = vld [vmem:[%s1280 + $0x7f8] sm:$0xff]
        %v1599 = vld [vmem:[%s1280 + $0x800] sm:$0xff]
        %v1600 = vld [vmem:[%s1280 + $0x808] sm:$0xff]
        %v1601 = vld [vmem:[%s1280 + $0x810] sm:$0xff]
        %v1602 = vld [vmem:[%s1280 + $0x818] sm:$0xff]
        %v1603 = vld [vmem:[%s1280 + $0x820] sm:$0xff]
        %v1604 = vld [vmem:[%s1280 + $0x828] sm:$0xff]
        %v1605 = vld [vmem:[%s1280 + $0x830] sm:$0xff]
        %v1606 = vld [vmem:[%s1280 + $0x838] sm:$0xff]
        %v1607 = vld [vmem:[%s1280 + $0x840] sm:$0xff]
        %v1608 = vld [vmem:[%s1280 + $0x848] sm:$0xff]
        %v1609 = vld [vmem:[%s1280 + $0x850] sm:$0xff]
        %v1610 = vld [vmem:[%s1280 + $0x858] sm:$0xff]
        %v1611 = vld [vmem:[%s1280 + $0x860] sm:$0xff]
        %v1612 = vld [vmem:[%s1280 + $0x868] sm:$0xff]
        %v1613 = vld [vmem:[%s1280 + $0x870] sm:$0xff]
        %v1614 = vld [vmem:[%s1280 + $0x878] sm:$0xff]
        %v1615 = vld [vmem:[%s1280 + $0x880] sm:$0xff]
        %v1616 = vld [vmem:[%s1280 + $0x888] sm:$0xff]
        %v1617 = vld [vmem:[%s1280 + $0x890] sm:$0xff]
        %v1618 = vld [vmem:[%s1280 + $0x898] sm:$0xff]
        %v1619 = vld [vmem:[%s1280 + $0x8a0] sm:$0xff]
        %v1620 = vld [vmem:[%s1280 + $0x8a8] sm:$0xff]
        %v1621 = vld [vmem:[%s1280 + $0x8b0] sm:$0xff]
        %v1622 = vld [vmem:[%s1280 + $0x8b8] sm:$0xff]
        %v1623 = vld [vmem:[%s1280 + $0x8c0] sm:$0xff]
        %v1624 = vld [vmem:[%s1280 + $0x8c8] sm:$0xff]
        %v1625 = vld [vmem:[%s1280 + $0x8d0] sm:$0xff]
        %v1626 = vld [vmem:[%s1280 + $0x8d8] sm:$0xff]
        %v1627 = vld [vmem:[%s1280 + $0x8e0] sm:$0xff]
        %v1628 = vld [vmem:[%s1280 + $0x8e8] sm:$0xff]
        %v1629 = vld [vmem:[%s1280 + $0x8f0] sm:$0xff]
        %v1630 = vld [vmem:[%s1280 + $0x8f8] sm:$0xff]
        %v1631 = vld [vmem:[%s1280 + $0x900] sm:$0xff]
        %v1632 = vld [vmem:[%s1280 + $0x908] sm:$0xff]
        %v1633 = vld [vmem:[%s1280 + $0x910] sm:$0xff]
        %v1634 = vld [vmem:[%s1280 + $0x918] sm:$0xff]
        %v1635 = vld [vmem:[%s1280 + $0x920] sm:$0xff]
        %v1636 = vld [vmem:[%s1280 + $0x928] sm:$0xff]
        %v1637 = vld [vmem:[%s1280 + $0x930] sm:$0xff]
        %v1638 = vld [vmem:[%s1280 + $0x938] sm:$0xff]
        %v1639 = vld [vmem:[%s1280 + $0x940] sm:$0xff]
        %v1640 = vld [vmem:[%s1280 + $0x948] sm:$0xff]
        %v1641 = vld [vmem:[%s1280 + $0x950] sm:$0xff]
        %v1642 = vld [vmem:[%s1280 + $0x958] sm:$0xff]
        %v1643 = vld [vmem:[%s1280 + $0x960] sm:$0xff]
        %v1644 = vld [vmem:[%s1280 + $0x968] sm:$0xff]
        %v1645 = vld [vmem:[%s1280 + $0x970] sm:$0xff]
        %v1646 = vld [vmem:[%s1280 + $0x978] sm:$0xff]
        %v1647 = vld [vmem:[%s1280 + $0x980] sm:$0xff]
        %v1648 = vld [vmem:[%s1280 + $0x988] sm:$0xff]
        %v1649 = vld [vmem:[%s1280 + $0x990] sm:$0xff]
        %v1650 = vld [vmem:[%s1280 + $0x998] sm:$0xff]
        %v1651 = vld [vmem:[%s1280 + $0x9a0] sm:$0xff]
        %v1652 = vld [vmem:[%s1280 + $0x9a8] sm:$0xff]
        %v1653 = vld [vmem:[%s1280 + $0x9b0] sm:$0xff]
        %v1654 = vld [vmem:[%s1280 + $0x9b8] sm:$0xff]
        %v1655 = vld [vmem:[%s1280 + $0x9c0] sm:$0xff]
        %v1656 = vld [vmem:[%s1280 + $0x9c8] sm:$0xff]
        %v1657 = vld [vmem:[%s1280 + $0x9d0] sm:$0xff]
        %v1658 = vld [vmem:[%s1280 + $0x9d8] sm:$0xff]
        %v1659 = vld [vmem:[%s1280 + $0x9e0] sm:$0xff]
        %v1660 = vld [vmem:[%s1280 + $0x9e8] sm:$0xff]
        %v1661 = vld [vmem:[%s1280 + $0x9f0] sm:$0xff]
        %v1662 = vld [vmem:[%s1280 + $0x9f8] sm:$0xff]
        %v1663 = vld [vmem:[%s1280 + $0xa00] sm:$0xff]
        %v1664 = vld [vmem:[%s1280 + $0xa08] sm:$0xff]
        %v1665 = vld [vmem:[%s1280 + $0xa10] sm:$0xff]
        %v1666 = vld [vmem:[%s1280 + $0xa18] sm:$0xff]
        %v1667 = vld [vmem:[%s1280 + $0xa20] sm:$0xff]
        %v1668 = vld [vmem:[%s1280 + $0xa28] sm:$0xff]
        %v1669 = vld [vmem:[%s1280 + $0xa30] sm:$0xff]
        %v1670 = vld [vmem:[%s1280 + $0xa38] sm:$0xff]
        %v1671 = vld [vmem:[%s1280 + $0xa40] sm:$0xff]
        %v1672 = vld [vmem:[%s1280 + $0xa48] sm:$0xff]
        %v1673 = vld [vmem:[%s1280 + $0xa50] sm:$0xff]
        %v1674 = vld [vmem:[%s1280 + $0xa58] sm:$0xff]
        %v1675 = vld [vmem:[%s1280 + $0xa60] sm:$0xff]
        %v1676 = vld [vmem:[%s1280 + $0xa68] sm:$0xff]
        %v1677 = vld [vmem:[%s1280 + $0xa70] sm:$0xff]
        %v1678 = vld [vmem:[%s1280 + $0xa78] sm:$0xff]
        %v1679 = vld [vmem:[%s1280 + $0xa80] sm:$0xff]
        %v1680 = vld [vmem:[%s1280 + $0xa88] sm:$0xff]
        %v1681 = vld [vmem:[%s1280 + $0xa90] sm:$0xff]
        %v1682 = vld [vmem:[%s1280 + $0xa98] sm:$0xff]
        %v1683 = vld [vmem:[%s1280 + $0xaa0] sm:$0xff]
        %v1684 = vld [vmem:[%s1280 + $0xaa8] sm:$0xff]
        %v1685 = vld [vmem:[%s1280 + $0xab0] sm:$0xff]
        %v1686 = vld [vmem:[%s1280 + $0xab8] sm:$0xff]
        %v1687 = vld [vmem:[%s1280 + $0xac0] sm:$0xff]
        %v1688 = vld [vmem:[%s1280 + $0xac8] sm:$0xff]
        %v1689 = vld [vmem:[%s1280 + $0xad0] sm:$0xff]
        %v1690 = vld [vmem:[%s1280 + $0xad8] sm:$0xff]
        %v1691 = vld [vmem:[%s1280 + $0xae0] sm:$0xff]
        %v1692 = vld [vmem:[%s1280 + $0xae8] sm:$0xff]
        %v1693 = vld [vmem:[%s1280 + $0xaf0] sm:$0xff]
        %v1694 = vld [vmem:[%s1280 + $0xaf8] sm:$0xff]
        %v1695 = vld [vmem:[%s1280 + $0xb00] sm:$0xff]
        %v1696 = vld [vmem:[%s1280 + $0xb08] sm:$0xff]
        %v1697 = vld [vmem:[%s1280 + $0xb10] sm:$0xff]
        %v1698 = vld [vmem:[%s1280 + $0xb18] sm:$0xff]
        %v1699 = vld [vmem:[%s1280 + $0xb20] sm:$0xff]
        %v1700 = vld [vmem:[%s1280 + $0xb28] sm:$0xff]
        %v1701 = vld [vmem:[%s1280 + $0xb30] sm:$0xff]
        %v1702 = vld [vmem:[%s1280 + $0xb38] sm:$0xff]
        %v1703 = vld [vmem:[%s1280 + $0xb40] sm:$0xff]
        %v1704 = vld [vmem:[%s1280 + $0xb48] sm:$0xff]
        %v1705 = vld [vmem:[%s1280 + $0xb50] sm:$0xff]
        %v1706 = vld [vmem:[%s1280 + $0xb58] sm:$0xff]
        %v1707 = vld [vmem:[%s1280 + $0xb60] sm:$0xff]
        %v1708 = vld [vmem:[%s1280 + $0xb68] sm:$0xff]
        %v1709 = vld [vmem:[%s1280 + $0xb70] sm:$0xff]
        %v1710 = vld [vmem:[%s1280 + $0xb78] sm:$0xff]
        %v1711 = vld [vmem:[%s1280 + $0xb80] sm:$0xff]
        %v1712 = vld [vmem:[%s1280 + $0xb88] sm:$0xff]
        %v1713 = vld [vmem:[%s1280 + $0xb90] sm:$0xff]
        %v1714 = vld [vmem:[%s1280 + $0xb98] sm:$0xff]
        %v1715 = vld [vmem:[%s1280 + $0xba0] sm:$0xff]
        %v1716 = vld [vmem:[%s1280 + $0xba8] sm:$0xff]
        %v1717 = vld [vmem:[%s1280 + $0xbb0] sm:$0xff]
        %v1718 = vld [vmem:[%s1280 + $0xbb8] sm:$0xff]
        %v1719 = vld [vmem:[%s1280 + $0xbc0] sm:$0xff]
        %v1720 = vld [vmem:[%s1280 + $0xbc8] sm:$0xff]
        %v1721 = vld [vmem:[%s1280 + $0xbd0] sm:$0xff]
        %v1722 = vld [vmem:[%s1280 + $0xbd8] sm:$0xff]
        %v1723 = vld [vmem:[%s1280 + $0xbe0] sm:$0xff]
        %v1724 = vld [vmem:[%s1280 + $0xbe8] sm:$0xff]
        %v1725 = vld [vmem:[%s1280 + $0xbf0] sm:$0xff]
        %v1726 = vld [vmem:[%s1280 + $0xbf8] sm:$0xff]
        %v1727 = vld [vmem:[%s1280 + $0xc00] sm:$0xff]
        %v1728 = vld [vmem:[%s1280 + $0xc08] sm:$0xff]
        %v1729 = vld [vmem:[%s1280 + $0xc10] sm:$0xff]
        %v1730 = vld [vmem:[%s1280 + $0xc18] sm:$0xff]
        %v1731 = vld [vmem:[%s1280 + $0xc20] sm:$0xff]
        %v1732 = vld [vmem:[%s1280 + $0xc28] sm:$0xff]
        %v1733 = vld [vmem:[%s1280 + $0xc30] sm:$0xff]
        %v1734 = vld [vmem:[%s1280 + $0xc38] sm:$0xff]
        %v1735 = vld [vmem:[%s1280 + $0xc40] sm:$0xff]
        %v1736 = vld [vmem:[%s1280 + $0xc48] sm:$0xff]
        %v1737 = vld [vmem:[%s1280 + $0xc50] sm:$0xff]
        %v1738 = vld [vmem:[%s1280 + $0xc58] sm:$0xff]
        %v1739 = vld [vmem:[%s1280 + $0xc60] sm:$0xff]
        %v1740 = vld [vmem:[%s1280 + $0xc68] sm:$0xff]
        %v1741 = vld [vmem:[%s1280 + $0xc70] sm:$0xff]
        %v1742 = vld [vmem:[%s1280 + $0xc78] sm:$0xff]
        %v1743 = vld [vmem:[%s1280 + $0xc80] sm:$0xff]
        %v1744 = vld [vmem:[%s1280 + $0xc88] sm:$0xff]
        %v1745 = vld [vmem:[%s1280 + $0xc90] sm:$0xff]
        %v1746 = vld [vmem:[%s1280 + $0xc98] sm:$0xff]
        %v1747 = vld [vmem:[%s1280 + $0xca0] sm:$0xff]
        %v1748 = vld [vmem:[%s1280 + $0xca8] sm:$0xff]
        %v1749 = vld [vmem:[%s1280 + $0xcb0] sm:$0xff]
        %v1750 = vld [vmem:[%s1280 + $0xcb8] sm:$0xff]
        %v1751 = vld [vmem:[%s1280 + $0xcc0] sm:$0xff]
        %v1752 = vld [vmem:[%s1280 + $0xcc8] sm:$0xff]
        %v1753 = vld [vmem:[%s1280 + $0xcd0] sm:$0xff]
        %v1754 = vld [vmem:[%s1280 + $0xcd8] sm:$0xff]
        %v1755 = vld [vmem:[%s1280 + $0xce0] sm:$0xff]
        %v1756 = vld [vmem:[%s1280 + $0xce8] sm:$0xff]
        %v1757 = vld [vmem:[%s1280 + $0xcf0] sm:$0xff]
        %v1758 = vld [vmem:[%s1280 + $0xcf8] sm:$0xff]
        %v1759 = vld [vmem:[%s1280 + $0xd00] sm:$0xff]
        %v1760 = vld [vmem:[%s1280 + $0xd08] sm:$0xff]
        %v1761 = vld [vmem:[%s1280 + $0xd10] sm:$0xff]
        %v1762 = vld [vmem:[%s1280 + $0xd18] sm:$0xff]
        %v1763 = vld [vmem:[%s1280 + $0xd20] sm:$0xff]
        %v1764 = vld [vmem:[%s1280 + $0xd28] sm:$0xff]
        %v1765 = vld [vmem:[%s1280 + $0xd30] sm:$0xff]
        %v1766 = vld [vmem:[%s1280 + $0xd38] sm:$0xff]
        %v1767 = vld [vmem:[%s1280 + $0xd40] sm:$0xff]
        %v1768 = vld [vmem:[%s1280 + $0xd48] sm:$0xff]
        %v1769 = vld [vmem:[%s1280 + $0xd50] sm:$0xff]
        %v1770 = vld [vmem:[%s1280 + $0xd58] sm:$0xff]
        %v1771 = vld [vmem:[%s1280 + $0xd60] sm:$0xff]
        %v1772 = vld [vmem:[%s1280 + $0xd68] sm:$0xff]
        %v1773 = vld [vmem:[%s1280 + $0xd70] sm:$0xff]
        %v1774 = vld [vmem:[%s1280 + $0xd78] sm:$0xff]
        %v1775 = vld [vmem:[%s1280 + $0xd80] sm:$0xff]
        %v1776 = vld [vmem:[%s1280 + $0xd88] sm:$0xff]
        %v1777 = vld [vmem:[%s1280 + $0xd90] sm:$0xff]
        %v1778 = vld [vmem:[%s1280 + $0xd98] sm:$0xff]
        %v1779 = vld [vmem:[%s1280 + $0xda0] sm:$0xff]
        %v1780 = vld [vmem:[%s1280 + $0xda8] sm:$0xff]
        %v1781 = vld [vmem:[%s1280 + $0xdb0] sm:$0xff]
        %v1782 = vld [vmem:[%s1280 + $0xdb8] sm:$0xff]
        %v1783 = vld [vmem:[%s1280 + $0xdc0] sm:$0xff]
        %v1784 = vld [vmem:[%s1280 + $0xdc8] sm:$0xff]
        %v1785 = vld [vmem:[%s1280 + $0xdd0] sm:$0xff]
        %v1786 = vld [vmem:[%s1280 + $0xdd8] sm:$0xff]
        %v1787 = vld [vmem:[%s1280 + $0xde0] sm:$0xff]
        %v1788 = vld [vmem:[%s1280 + $0xde8] sm:$0xff]
        %v1789 = vld [vmem:[%s1280 + $0xdf0] sm:$0xff]
        %v1790 = vld [vmem:[%s1280 + $0xdf8] sm:$0xff]
        %v1791 = vld [vmem:[%s1280 + $0xe00] sm:$0xff]
        %v1792 = vld [vmem:[%s1280 + $0xe08] sm:$0xff]
        %v1793 = vld [vmem:[%s1280 + $0xe10] sm:$0xff]
        %v1794 = vld [vmem:[%s1280 + $0xe18] sm:$0xff]
        %v1795 = vld [vmem:[%s1280 + $0xe20] sm:$0xff]
        %v1796 = vld [vmem:[%s1280 + $0xe28] sm:$0xff]
        %v1797 = vld [vmem:[%s1280 + $0xe30] sm:$0xff]
        %v1798 = vld [vmem:[%s1280 + $0xe38] sm:$0xff]
        %v1799 = vld [vmem:[%s1280 + $0xe40] sm:$0xff]
        %v1800 = vld [vmem:[%s1280 + $0xe48] sm:$0xff]
        %v1801 = vld [vmem:[%s1280 + $0xe50] sm:$0xff]
        %v1802 = vld [vmem:[%s1280 + $0xe58] sm:$0xff]
        %v1803 = vld [vmem:[%s1280 + $0xe60] sm:$0xff]
        %v1804 = vld [vmem:[%s1280 + $0xe68] sm:$0xff]
        %v1805 = vld [vmem:[%s1280 + $0xe70] sm:$0xff]
        %v1806 = vld [vmem:[%s1280 + $0xe78] sm:$0xff]
        %v1807 = vld [vmem:[%s1280 + $0xe80] sm:$0xff]
        %v1808 = vld [vmem:[%s1280 + $0xe88] sm:$0xff]
        %v1809 = vld [vmem:[%s1280 + $0xe90] sm:$0xff]
        %v1810 = vld [vmem:[%s1280 + $0xe98] sm:$0xff]
        %v1811 = vld [vmem:[%s1280 + $0xea0] sm:$0xff]
        %v1812 = vld [vmem:[%s1280 + $0xea8] sm:$0xff]
        %v1813 = vld [vmem:[%s1280 + $0xeb0] sm:$0xff]
        %v1814 = vld [vmem:[%s1280 + $0xeb8] sm:$0xff]
        %v1815 = vld [vmem:[%s1280 + $0xec0] sm:$0xff]
        %v1816 = vld [vmem:[%s1280 + $0xec8] sm:$0xff]
        %v1817 = vld [vmem:[%s1280 + $0xed0] sm:$0xff]
        %v1818 = vld [vmem:[%s1280 + $0xed8] sm:$0xff]
        %v1819 = vld [vmem:[%s1280 + $0xee0] sm:$0xff]
        %v1820 = vld [vmem:[%s1280 + $0xee8] sm:$0xff]
        %v1821 = vld [vmem:[%s1280 + $0xef0] sm:$0xff]
        %v1822 = vld [vmem:[%s1280 + $0xef8] sm:$0xff]
        %v1823 = vld [vmem:[%s1280 + $0xf00] sm:$0xff]
        %v1824 = vld [vmem:[%s1280 + $0xf08] sm:$0xff]
        %v1825 = vld [vmem:[%s1280 + $0xf10] sm:$0xff]
        %v1826 = vld [vmem:[%s1280 + $0xf18] sm:$0xff]
        %v1827 = vld [vmem:[%s1280 + $0xf20] sm:$0xff]
        %v1828 = vld [vmem:[%s1280 + $0xf28] sm:$0xff]
        %v1829 = vld [vmem:[%s1280 + $0xf30] sm:$0xff]
        %v1830 = vld [vmem:[%s1280 + $0xf38] sm:$0xff]
        %v1831 = vld [vmem:[%s1280 + $0xf40] sm:$0xff]
        %v1832 = vld [vmem:[%s1280 + $0xf48] sm:$0xff]
        %v1833 = vld [vmem:[%s1280 + $0xf50] sm:$0xff]
        %v1834 = vld [vmem:[%s1280 + $0xf58] sm:$0xff]
        %v1835 = vld [vmem:[%s1280 + $0xf60] sm:$0xff]
        %v1836 = vld [vmem:[%s1280 + $0xf68] sm:$0xff]
        %v1837 = vld [vmem:[%s1280 + $0xf70] sm:$0xff]
        %v1838 = vld [vmem:[%s1280 + $0xf78] sm:$0xff]
        %v1839 = vld [vmem:[%s1280 + $0xf80] sm:$0xff]
        %v1840 = vld [vmem:[%s1280 + $0xf88] sm:$0xff]
        %v1841 = vld [vmem:[%s1280 + $0xf90] sm:$0xff]
        %v1842 = vld [vmem:[%s1280 + $0xf98] sm:$0xff]
        %v1843 = vld [vmem:[%s1280 + $0xfa0] sm:$0xff]
        %v1844 = vld [vmem:[%s1280 + $0xfa8] sm:$0xff]
        %v1845 = vld [vmem:[%s1280 + $0xfb0] sm:$0xff]
        %v1846 = vld [vmem:[%s1280 + $0xfb8] sm:$0xff]
        %v1847 = vld [vmem:[%s1280 + $0xfc0] sm:$0xff]
        %v1848 = vld [vmem:[%s1280 + $0xfc8] sm:$0xff]
        %v1849 = vld [vmem:[%s1280 + $0xfd0] sm:$0xff]
        %v1850 = vld [vmem:[%s1280 + $0xfd8] sm:$0xff]
        %v1851 = vld [vmem:[%s1280 + $0xfe0] sm:$0xff]
        %v1852 = vld [vmem:[%s1280 + $0xfe8] sm:$0xff]
        %v1853 = vld [vmem:[%s1280 + $0xff0] sm:$0xff]
        %v1854 = vld [vmem:[%s1280 + $0xff8] sm:$0xff]
        %v1855 = vld [vmem:[%s1321] sm:$0xff]
        %v1857 = vlaneseq
        %v1858 = vshrl.u32 %v1857, 7
        %v1859 = vsub.s32 0, %v1858
        %v1860 = vrot.slane %v1855, %v1859
        %v1861 = vlaneseq
        %v1862 = vshrl.u32 %v1861, 7
        %v1863 = vsub.s32 1, %v1862
        %v1864 = vrot.slane %v1855, %v1863
        %v1865 = vlaneseq
        %v1866 = vshrl.u32 %v1865, 7
        %v1867 = vsub.s32 2, %v1866
        %v1868 = vrot.slane %v1855, %v1867
        %v1869 = vlaneseq
        %v1870 = vshrl.u32 %v1869, 7
        %v1871 = vsub.s32 3, %v1870
        %v1872 = vrot.slane %v1855, %v1871
        %v1873 = vlaneseq
        %v1874 = vshrl.u32 %v1873, 7
        %v1875 = vsub.s32 4, %v1874
        %v1876 = vrot.slane %v1855, %v1875
        %v1877 = vlaneseq
        %v1878 = vshrl.u32 %v1877, 7
        %v1879 = vsub.s32 5, %v1878
        %v1880 = vrot.slane %v1855, %v1879
        %v1881 = vlaneseq
        %v1882 = vshrl.u32 %v1881, 7
        %v1883 = vsub.s32 6, %v1882
        %v1884 = vrot.slane %v1855, %v1883
        %v1885 = vlaneseq
        %v1886 = vshrl.u32 %v1885, 7
        %v1887 = vsub.s32 7, %v1886
        %v1888 = vrot.slane %v1855, %v1887
        %v1898 = vcombine.high %v1342, %v1342
        %v1900 = vunpack.c.l.s4 1966171168
        %v1901 = vunpack.c.0.s8 %v1900
        %v1902 = vlaneseq
        %v1903 = vshrl.u32 %v1902, 7
        %v1904 = vsub.s32 %v1901, %v1903
        %v1905 = vrot.slane %v1342, %v1904
        %v1907 = vunpack.c.l.s4 1966171168
        %v1908 = vunpack.c.0.s8 %v1907
        %v1909 = vlaneseq
        %v1910 = vshrl.u32 %v1909, 7
        %v1911 = vsub.s32 %v1908, %v1910
        %v1912 = vrot.slane %v1898, %v1911
        %v1913 = vcombine.high %v1905, %v1905
        %v1914 = vcombine.high %v1912, %v1912
        %v1916 = vunpack.c.l.s4 1966171168
        %v1917 = vunpack.c.0.s8 %v1916
        %v1918 = vlaneseq
        %v1919 = vshrl.u32 %v1918, 7
        %v1920 = vsub.s32 %v1917, %v1919
        %v1921 = vrot.slane %v1905, %v1920
        %v1923 = vunpack.c.l.s4 1966171168
        %v1924 = vunpack.c.0.s8 %v1923
        %v1925 = vlaneseq
        %v1926 = vshrl.u32 %v1925, 7
        %v1927 = vsub.s32 %v1924, %v1926
        %v1928 = vrot.slane %v1912, %v1927
        %v1930 = vunpack.c.l.s4 1966171168
        %v1931 = vunpack.c.0.s8 %v1930
        %v1932 = vlaneseq
        %v1933 = vshrl.u32 %v1932, 7
        %v1934 = vsub.s32 %v1931, %v1933
        %v1935 = vrot.slane %v1913, %v1934
        %v1937 = vunpack.c.l.s4 1966171168
        %v1938 = vunpack.c.0.s8 %v1937
        %v1939 = vlaneseq
        %v1940 = vshrl.u32 %v1939, 7
        %v1941 = vsub.s32 %v1938, %v1940
        %v1942 = vrot.slane %v1914, %v1941
        %v1943 = vcombine.high %v1921, %v1921
        %v1944 = vcombine.high %v1928, %v1928
        %v1945 = vcombine.high %v1935, %v1935
        %v1946 = vcombine.high %v1942, %v1942
        %v2467 = vunpack.c.l.b16 %v1343
        %v2468 = vunpack.c.h.b16 %v1343
        %v2469 = vunpack.c.l.b16 %v1344
        %v2470 = vunpack.c.h.b16 %v1344
        %v2471 = vunpack.c.l.b16 %v1345
        %v2472 = vunpack.c.h.b16 %v1345
        %v2473 = vunpack.c.l.b16 %v1346
        %v2474 = vunpack.c.h.b16 %v1346
        %v2475 = vunpack.c.l.b16 %v1347
        %v2476 = vunpack.c.h.b16 %v1347
        %v2477 = vunpack.c.l.b16 %v1348
        %v2478 = vunpack.c.h.b16 %v1348
        %v2479 = vunpack.c.l.b16 %v1349
        %v2480 = vunpack.c.h.b16 %v1349
        %v2481 = vunpack.c.l.b16 %v1350
        %v2482 = vunpack.c.h.b16 %v1350
        %v2483 = vunpack.c.l.b16 %v1351
        %v2484 = vunpack.c.h.b16 %v1351
        %v2485 = vunpack.c.l.b16 %v1352
        %v2486 = vunpack.c.h.b16 %v1352
        %v2487 = vunpack.c.l.b16 %v1353
        %v2488 = vunpack.c.h.b16 %v1353
        %v2489 = vunpack.c.l.b16 %v1354
        %v2490 = vunpack.c.h.b16 %v1354
        %v2491 = vunpack.c.l.b16 %v1355
        %v2492 = vunpack.c.h.b16 %v1355
        %v2493 = vunpack.c.l.b16 %v1356
        %v2494 = vunpack.c.h.b16 %v1356
        %v2495 = vunpack.c.l.b16 %v1357
        %v2496 = vunpack.c.h.b16 %v1357
        %v2497 = vunpack.c.l.b16 %v1358
        %v2498 = vunpack.c.h.b16 %v1358
        %v2499 = vunpack.c.l.b16 %v1359
        %v2500 = vunpack.c.h.b16 %v1359
        %v2501 = vunpack.c.l.b16 %v1360
        %v2502 = vunpack.c.h.b16 %v1360
        %v2503 = vunpack.c.l.b16 %v1361
        %v2504 = vunpack.c.h.b16 %v1361
        %v2505 = vunpack.c.l.b16 %v1362
        %v2506 = vunpack.c.h.b16 %v1362
        %v2507 = vunpack.c.l.b16 %v1363
        %v2508 = vunpack.c.h.b16 %v1363
        %v2509 = vunpack.c.l.b16 %v1364
        %v2510 = vunpack.c.h.b16 %v1364
        %v2511 = vunpack.c.l.b16 %v1365
        %v2512 = vunpack.c.h.b16 %v1365
        %v2513 = vunpack.c.l.b16 %v1366
        %v2514 = vunpack.c.h.b16 %v1366
        %v2515 = vunpack.c.l.b16 %v1367
        %v2516 = vunpack.c.h.b16 %v1367
        %v2517 = vunpack.c.l.b16 %v1368
        %v2518 = vunpack.c.h.b16 %v1368
        %v2519 = vunpack.c.l.b16 %v1369
        %v2520 = vunpack.c.h.b16 %v1369
        %v2521 = vunpack.c.l.b16 %v1370
        %v2522 = vunpack.c.h.b16 %v1370
        %v2523 = vunpack.c.l.b16 %v1371
        %v2524 = vunpack.c.h.b16 %v1371
        %v2525 = vunpack.c.l.b16 %v1372
        %v2526 = vunpack.c.h.b16 %v1372
        %v2527 = vunpack.c.l.b16 %v1373
        %v2528 = vunpack.c.h.b16 %v1373
        %v2529 = vunpack.c.l.b16 %v1374
        %v2530 = vunpack.c.h.b16 %v1374
        %v2531 = vunpack.c.l.b16 %v1375
        %v2532 = vunpack.c.h.b16 %v1375
        %v2533 = vunpack.c.l.b16 %v1376
        %v2534 = vunpack.c.h.b16 %v1376
        %v2535 = vunpack.c.l.b16 %v1377
        %v2536 = vunpack.c.h.b16 %v1377
        %v2537 = vunpack.c.l.b16 %v1378
        %v2538 = vunpack.c.h.b16 %v1378
        %v2539 = vunpack.c.l.b16 %v1379
        %v2540 = vunpack.c.h.b16 %v1379
        %v2541 = vunpack.c.l.b16 %v1380
        %v2542 = vunpack.c.h.b16 %v1380
        %v2543 = vunpack.c.l.b16 %v1381
        %v2544 = vunpack.c.h.b16 %v1381
        %v2545 = vunpack.c.l.b16 %v1382
        %v2546 = vunpack.c.h.b16 %v1382
        %v2547 = vunpack.c.l.b16 %v1383
        %v2548 = vunpack.c.h.b16 %v1383
        %v2549 = vunpack.c.l.b16 %v1384
        %v2550 = vunpack.c.h.b16 %v1384
        %v2551 = vunpack.c.l.b16 %v1385
        %v2552 = vunpack.c.h.b16 %v1385
        %v2553 = vunpack.c.l.b16 %v1386
        %v2554 = vunpack.c.h.b16 %v1386
        %v2555 = vunpack.c.l.b16 %v1387
        %v2556 = vunpack.c.h.b16 %v1387
        %v2557 = vunpack.c.l.b16 %v1388
        %v2558 = vunpack.c.h.b16 %v1388
        %v2559 = vunpack.c.l.b16 %v1389
        %v2560 = vunpack.c.h.b16 %v1389
        %v2561 = vunpack.c.l.b16 %v1390
        %v2562 = vunpack.c.h.b16 %v1390
        %v2563 = vunpack.c.l.b16 %v1391
        %v2564 = vunpack.c.h.b16 %v1391
        %v2565 = vunpack.c.l.b16 %v1392
        %v2566 = vunpack.c.h.b16 %v1392
        %v2567 = vunpack.c.l.b16 %v1393
        %v2568 = vunpack.c.h.b16 %v1393
        %v2569 = vunpack.c.l.b16 %v1394
        %v2570 = vunpack.c.h.b16 %v1394
        %v2571 = vunpack.c.l.b16 %v1395
        %v2572 = vunpack.c.h.b16 %v1395
        %v2573 = vunpack.c.l.b16 %v1396
        %v2574 = vunpack.c.h.b16 %v1396
        %v2575 = vunpack.c.l.b16 %v1397
        %v2576 = vunpack.c.h.b16 %v1397
        %v2577 = vunpack.c.l.b16 %v1398
        %v2578 = vunpack.c.h.b16 %v1398
        %v2579 = vunpack.c.l.b16 %v1399
        %v2580 = vunpack.c.h.b16 %v1399
        %v2581 = vunpack.c.l.b16 %v1400
        %v2582 = vunpack.c.h.b16 %v1400
        %v2583 = vunpack.c.l.b16 %v1401
        %v2584 = vunpack.c.h.b16 %v1401
        %v2585 = vunpack.c.l.b16 %v1402
        %v2586 = vunpack.c.h.b16 %v1402
        %v2587 = vunpack.c.l.b16 %v1403
        %v2588 = vunpack.c.h.b16 %v1403
        %v2589 = vunpack.c.l.b16 %v1404
        %v2590 = vunpack.c.h.b16 %v1404
        %v2591 = vunpack.c.l.b16 %v1405
        %v2592 = vunpack.c.h.b16 %v1405
        %v2593 = vunpack.c.l.b16 %v1406
        %v2594 = vunpack.c.h.b16 %v1406
        %v2595 = vunpack.c.l.b16 %v1407
        %v2596 = vunpack.c.h.b16 %v1407
        %v2597 = vunpack.c.l.b16 %v1408
        %v2598 = vunpack.c.h.b16 %v1408
        %v2599 = vunpack.c.l.b16 %v1409
        %v2600 = vunpack.c.h.b16 %v1409
        %v2601 = vunpack.c.l.b16 %v1410
        %v2602 = vunpack.c.h.b16 %v1410
        %v2603 = vunpack.c.l.b16 %v1411
        %v2604 = vunpack.c.h.b16 %v1411
        %v2605 = vunpack.c.l.b16 %v1412
        %v2606 = vunpack.c.h.b16 %v1412
        %v2607 = vunpack.c.l.b16 %v1413
        %v2608 = vunpack.c.h.b16 %v1413
        %v2609 = vunpack.c.l.b16 %v1414
        %v2610 = vunpack.c.h.b16 %v1414
        %v2611 = vunpack.c.l.b16 %v1415
        %v2612 = vunpack.c.h.b16 %v1415
        %v2613 = vunpack.c.l.b16 %v1416
        %v2614 = vunpack.c.h.b16 %v1416
        %v2615 = vunpack.c.l.b16 %v1417
        %v2616 = vunpack.c.h.b16 %v1417
        %v2617 = vunpack.c.l.b16 %v1418
        %v2618 = vunpack.c.h.b16 %v1418
        %v2619 = vunpack.c.l.b16 %v1419
        %v2620 = vunpack.c.h.b16 %v1419
        %v2621 = vunpack.c.l.b16 %v1420
        %v2622 = vunpack.c.h.b16 %v1420
        %v2623 = vunpack.c.l.b16 %v1421
        %v2624 = vunpack.c.h.b16 %v1421
        %v2625 = vunpack.c.l.b16 %v1422
        %v2626 = vunpack.c.h.b16 %v1422
        %v2627 = vunpack.c.l.b16 %v1423
        %v2628 = vunpack.c.h.b16 %v1423
        %v2629 = vunpack.c.l.b16 %v1424
        %v2630 = vunpack.c.h.b16 %v1424
        %v2631 = vunpack.c.l.b16 %v1425
        %v2632 = vunpack.c.h.b16 %v1425
        %v2633 = vunpack.c.l.b16 %v1426
        %v2634 = vunpack.c.h.b16 %v1426
        %v2635 = vunpack.c.l.b16 %v1427
        %v2636 = vunpack.c.h.b16 %v1427
        %v2637 = vunpack.c.l.b16 %v1428
        %v2638 = vunpack.c.h.b16 %v1428
        %v2639 = vunpack.c.l.b16 %v1429
        %v2640 = vunpack.c.h.b16 %v1429
        %v2641 = vunpack.c.l.b16 %v1430
        %v2642 = vunpack.c.h.b16 %v1430
        %v2643 = vunpack.c.l.b16 %v1431
        %v2644 = vunpack.c.h.b16 %v1431
        %v2645 = vunpack.c.l.b16 %v1432
        %v2646 = vunpack.c.h.b16 %v1432
        %v2647 = vunpack.c.l.b16 %v1433
        %v2648 = vunpack.c.h.b16 %v1433
        %v2649 = vunpack.c.l.b16 %v1434
        %v2650 = vunpack.c.h.b16 %v1434
        %v2651 = vunpack.c.l.b16 %v1435
        %v2652 = vunpack.c.h.b16 %v1435
        %v2653 = vunpack.c.l.b16 %v1436
        %v2654 = vunpack.c.h.b16 %v1436
        %v2655 = vunpack.c.l.b16 %v1437
        %v2656 = vunpack.c.h.b16 %v1437
        %v2657 = vunpack.c.l.b16 %v1438
        %v2658 = vunpack.c.h.b16 %v1438
        %v2659 = vunpack.c.l.b16 %v1439
        %v2660 = vunpack.c.h.b16 %v1439
        %v2661 = vunpack.c.l.b16 %v1440
        %v2662 = vunpack.c.h.b16 %v1440
        %v2663 = vunpack.c.l.b16 %v1441
        %v2664 = vunpack.c.h.b16 %v1441
        %v2665 = vunpack.c.l.b16 %v1442
        %v2666 = vunpack.c.h.b16 %v1442
        %v2667 = vunpack.c.l.b16 %v1443
        %v2668 = vunpack.c.h.b16 %v1443
        %v2669 = vunpack.c.l.b16 %v1444
        %v2670 = vunpack.c.h.b16 %v1444
        %v2671 = vunpack.c.l.b16 %v1445
        %v2672 = vunpack.c.h.b16 %v1445
        %v2673 = vunpack.c.l.b16 %v1446
        %v2674 = vunpack.c.h.b16 %v1446
        %v2675 = vunpack.c.l.b16 %v1447
        %v2676 = vunpack.c.h.b16 %v1447
        %v2677 = vunpack.c.l.b16 %v1448
        %v2678 = vunpack.c.h.b16 %v1448
        %v2679 = vunpack.c.l.b16 %v1449
        %v2680 = vunpack.c.h.b16 %v1449
        %v2681 = vunpack.c.l.b16 %v1450
        %v2682 = vunpack.c.h.b16 %v1450
        %v2683 = vunpack.c.l.b16 %v1451
        %v2684 = vunpack.c.h.b16 %v1451
        %v2685 = vunpack.c.l.b16 %v1452
        %v2686 = vunpack.c.h.b16 %v1452
        %v2687 = vunpack.c.l.b16 %v1453
        %v2688 = vunpack.c.h.b16 %v1453
        %v2689 = vunpack.c.l.b16 %v1454
        %v2690 = vunpack.c.h.b16 %v1454
        %v2691 = vunpack.c.l.b16 %v1455
        %v2692 = vunpack.c.h.b16 %v1455
        %v2693 = vunpack.c.l.b16 %v1456
        %v2694 = vunpack.c.h.b16 %v1456
        %v2695 = vunpack.c.l.b16 %v1457
        %v2696 = vunpack.c.h.b16 %v1457
        %v2697 = vunpack.c.l.b16 %v1458
        %v2698 = vunpack.c.h.b16 %v1458
        %v2699 = vunpack.c.l.b16 %v1459
        %v2700 = vunpack.c.h.b16 %v1459
        %v2701 = vunpack.c.l.b16 %v1460
        %v2702 = vunpack.c.h.b16 %v1460
        %v2703 = vunpack.c.l.b16 %v1461
        %v2704 = vunpack.c.h.b16 %v1461
        %v2705 = vunpack.c.l.b16 %v1462
        %v2706 = vunpack.c.h.b16 %v1462
        %v2707 = vunpack.c.l.b16 %v1463
        %v2708 = vunpack.c.h.b16 %v1463
        %v2709 = vunpack.c.l.b16 %v1464
        %v2710 = vunpack.c.h.b16 %v1464
        %v2711 = vunpack.c.l.b16 %v1465
        %v2712 = vunpack.c.h.b16 %v1465
        %v2713 = vunpack.c.l.b16 %v1466
        %v2714 = vunpack.c.h.b16 %v1466
        %v2715 = vunpack.c.l.b16 %v1467
        %v2716 = vunpack.c.h.b16 %v1467
        %v2717 = vunpack.c.l.b16 %v1468
        %v2718 = vunpack.c.h.b16 %v1468
        %v2719 = vunpack.c.l.b16 %v1469
        %v2720 = vunpack.c.h.b16 %v1469
        %v2721 = vunpack.c.l.b16 %v1470
        %v2722 = vunpack.c.h.b16 %v1470
        %v2723 = vunpack.c.l.b16 %v1471
        %v2724 = vunpack.c.h.b16 %v1471
        %v2725 = vunpack.c.l.b16 %v1472
        %v2726 = vunpack.c.h.b16 %v1472
        %v2727 = vunpack.c.l.b16 %v1473
        %v2728 = vunpack.c.h.b16 %v1473
        %v2729 = vunpack.c.l.b16 %v1474
        %v2730 = vunpack.c.h.b16 %v1474
        %v2731 = vunpack.c.l.b16 %v1475
        %v2732 = vunpack.c.h.b16 %v1475
        %v2733 = vunpack.c.l.b16 %v1476
        %v2734 = vunpack.c.h.b16 %v1476
        %v2735 = vunpack.c.l.b16 %v1477
        %v2736 = vunpack.c.h.b16 %v1477
        %v2737 = vunpack.c.l.b16 %v1478
        %v2738 = vunpack.c.h.b16 %v1478
        %v2739 = vunpack.c.l.b16 %v1479
        %v2740 = vunpack.c.h.b16 %v1479
        %v2741 = vunpack.c.l.b16 %v1480
        %v2742 = vunpack.c.h.b16 %v1480
        %v2743 = vunpack.c.l.b16 %v1481
        %v2744 = vunpack.c.h.b16 %v1481
        %v2745 = vunpack.c.l.b16 %v1482
        %v2746 = vunpack.c.h.b16 %v1482
        %v2747 = vunpack.c.l.b16 %v1483
        %v2748 = vunpack.c.h.b16 %v1483
        %v2749 = vunpack.c.l.b16 %v1484
        %v2750 = vunpack.c.h.b16 %v1484
        %v2751 = vunpack.c.l.b16 %v1485
        %v2752 = vunpack.c.h.b16 %v1485
        %v2753 = vunpack.c.l.b16 %v1486
        %v2754 = vunpack.c.h.b16 %v1486
        %v2755 = vunpack.c.l.b16 %v1487
        %v2756 = vunpack.c.h.b16 %v1487
        %v2757 = vunpack.c.l.b16 %v1488
        %v2758 = vunpack.c.h.b16 %v1488
        %v2759 = vunpack.c.l.b16 %v1489
        %v2760 = vunpack.c.h.b16 %v1489
        %v2761 = vunpack.c.l.b16 %v1490
        %v2762 = vunpack.c.h.b16 %v1490
        %v2763 = vunpack.c.l.b16 %v1491
        %v2764 = vunpack.c.h.b16 %v1491
        %v2765 = vunpack.c.l.b16 %v1492
        %v2766 = vunpack.c.h.b16 %v1492
        %v2767 = vunpack.c.l.b16 %v1493
        %v2768 = vunpack.c.h.b16 %v1493
        %v2769 = vunpack.c.l.b16 %v1494
        %v2770 = vunpack.c.h.b16 %v1494
        %v2771 = vunpack.c.l.b16 %v1495
        %v2772 = vunpack.c.h.b16 %v1495
        %v2773 = vunpack.c.l.b16 %v1496
        %v2774 = vunpack.c.h.b16 %v1496
        %v2775 = vunpack.c.l.b16 %v1497
        %v2776 = vunpack.c.h.b16 %v1497
        %v2777 = vunpack.c.l.b16 %v1498
        %v2778 = vunpack.c.h.b16 %v1498
        %v2779 = vunpack.c.l.b16 %v1499
        %v2780 = vunpack.c.h.b16 %v1499
        %v2781 = vunpack.c.l.b16 %v1500
        %v2782 = vunpack.c.h.b16 %v1500
        %v2783 = vunpack.c.l.b16 %v1501
        %v2784 = vunpack.c.h.b16 %v1501
        %v2785 = vunpack.c.l.b16 %v1502
        %v2786 = vunpack.c.h.b16 %v1502
        %v2787 = vunpack.c.l.b16 %v1503
        %v2788 = vunpack.c.h.b16 %v1503
        %v2789 = vunpack.c.l.b16 %v1504
        %v2790 = vunpack.c.h.b16 %v1504
        %v2791 = vunpack.c.l.b16 %v1505
        %v2792 = vunpack.c.h.b16 %v1505
        %v2793 = vunpack.c.l.b16 %v1506
        %v2794 = vunpack.c.h.b16 %v1506
        %v2795 = vunpack.c.l.b16 %v1507
        %v2796 = vunpack.c.h.b16 %v1507
        %v2797 = vunpack.c.l.b16 %v1508
        %v2798 = vunpack.c.h.b16 %v1508
        %v2799 = vunpack.c.l.b16 %v1509
        %v2800 = vunpack.c.h.b16 %v1509
        %v2801 = vunpack.c.l.b16 %v1510
        %v2802 = vunpack.c.h.b16 %v1510
        %v2803 = vunpack.c.l.b16 %v1511
        %v2804 = vunpack.c.h.b16 %v1511
        %v2805 = vunpack.c.l.b16 %v1512
        %v2806 = vunpack.c.h.b16 %v1512
        %v2807 = vunpack.c.l.b16 %v1513
        %v2808 = vunpack.c.h.b16 %v1513
        %v2809 = vunpack.c.l.b16 %v1514
        %v2810 = vunpack.c.h.b16 %v1514
        %v2811 = vunpack.c.l.b16 %v1515
        %v2812 = vunpack.c.h.b16 %v1515
        %v2813 = vunpack.c.l.b16 %v1516
        %v2814 = vunpack.c.h.b16 %v1516
        %v2815 = vunpack.c.l.b16 %v1517
        %v2816 = vunpack.c.h.b16 %v1517
        %v2817 = vunpack.c.l.b16 %v1518
        %v2818 = vunpack.c.h.b16 %v1518
        %v2819 = vunpack.c.l.b16 %v1519
        %v2820 = vunpack.c.h.b16 %v1519
        %v2821 = vunpack.c.l.b16 %v1520
        %v2822 = vunpack.c.h.b16 %v1520
        %v2823 = vunpack.c.l.b16 %v1521
        %v2824 = vunpack.c.h.b16 %v1521
        %v2825 = vunpack.c.l.b16 %v1522
        %v2826 = vunpack.c.h.b16 %v1522
        %v2827 = vunpack.c.l.b16 %v1523
        %v2828 = vunpack.c.h.b16 %v1523
        %v2829 = vunpack.c.l.b16 %v1524
        %v2830 = vunpack.c.h.b16 %v1524
        %v2831 = vunpack.c.l.b16 %v1525
        %v2832 = vunpack.c.h.b16 %v1525
        %v2833 = vunpack.c.l.b16 %v1526
        %v2834 = vunpack.c.h.b16 %v1526
        %v2835 = vunpack.c.l.b16 %v1527
        %v2836 = vunpack.c.h.b16 %v1527
        %v2837 = vunpack.c.l.b16 %v1528
        %v2838 = vunpack.c.h.b16 %v1528
        %v2839 = vunpack.c.l.b16 %v1529
        %v2840 = vunpack.c.h.b16 %v1529
        %v2841 = vunpack.c.l.b16 %v1530
        %v2842 = vunpack.c.h.b16 %v1530
        %v2843 = vunpack.c.l.b16 %v1531
        %v2844 = vunpack.c.h.b16 %v1531
        %v2845 = vunpack.c.l.b16 %v1532
        %v2846 = vunpack.c.h.b16 %v1532
        %v2847 = vunpack.c.l.b16 %v1533
        %v2848 = vunpack.c.h.b16 %v1533
        %v2849 = vunpack.c.l.b16 %v1534
        %v2850 = vunpack.c.h.b16 %v1534
        %v2851 = vunpack.c.l.b16 %v1535
        %v2852 = vunpack.c.h.b16 %v1535
        %v2853 = vunpack.c.l.b16 %v1536
        %v2854 = vunpack.c.h.b16 %v1536
        %v2855 = vunpack.c.l.b16 %v1537
        %v2856 = vunpack.c.h.b16 %v1537
        %v2857 = vunpack.c.l.b16 %v1538
        %v2858 = vunpack.c.h.b16 %v1538
        %v2859 = vunpack.c.l.b16 %v1539
        %v2860 = vunpack.c.h.b16 %v1539
        %v2861 = vunpack.c.l.b16 %v1540
        %v2862 = vunpack.c.h.b16 %v1540
        %v2863 = vunpack.c.l.b16 %v1541
        %v2864 = vunpack.c.h.b16 %v1541
        %v2865 = vunpack.c.l.b16 %v1542
        %v2866 = vunpack.c.h.b16 %v1542
        %v2867 = vunpack.c.l.b16 %v1543
        %v2868 = vunpack.c.h.b16 %v1543
        %v2869 = vunpack.c.l.b16 %v1544
        %v2870 = vunpack.c.h.b16 %v1544
        %v2871 = vunpack.c.l.b16 %v1545
        %v2872 = vunpack.c.h.b16 %v1545
        %v2873 = vunpack.c.l.b16 %v1546
        %v2874 = vunpack.c.h.b16 %v1546
        %v2875 = vunpack.c.l.b16 %v1547
        %v2876 = vunpack.c.h.b16 %v1547
        %v2877 = vunpack.c.l.b16 %v1548
        %v2878 = vunpack.c.h.b16 %v1548
        %v2879 = vunpack.c.l.b16 %v1549
        %v2880 = vunpack.c.h.b16 %v1549
        %v2881 = vunpack.c.l.b16 %v1550
        %v2882 = vunpack.c.h.b16 %v1550
        %v2883 = vunpack.c.l.b16 %v1551
        %v2884 = vunpack.c.h.b16 %v1551
        %v2885 = vunpack.c.l.b16 %v1552
        %v2886 = vunpack.c.h.b16 %v1552
        %v2887 = vunpack.c.l.b16 %v1553
        %v2888 = vunpack.c.h.b16 %v1553
        %v2889 = vunpack.c.l.b16 %v1554
        %v2890 = vunpack.c.h.b16 %v1554
        %v2891 = vunpack.c.l.b16 %v1555
        %v2892 = vunpack.c.h.b16 %v1555
        %v2893 = vunpack.c.l.b16 %v1556
        %v2894 = vunpack.c.h.b16 %v1556
        %v2895 = vunpack.c.l.b16 %v1557
        %v2896 = vunpack.c.h.b16 %v1557
        %v2897 = vunpack.c.l.b16 %v1558
        %v2898 = vunpack.c.h.b16 %v1558
        %v2899 = vunpack.c.l.b16 %v1559
        %v2900 = vunpack.c.h.b16 %v1559
        %v2901 = vunpack.c.l.b16 %v1560
        %v2902 = vunpack.c.h.b16 %v1560
        %v2903 = vunpack.c.l.b16 %v1561
        %v2904 = vunpack.c.h.b16 %v1561
        %v2905 = vunpack.c.l.b16 %v1562
        %v2906 = vunpack.c.h.b16 %v1562
        %v2907 = vunpack.c.l.b16 %v1563
        %v2908 = vunpack.c.h.b16 %v1563
        %v2909 = vunpack.c.l.b16 %v1564
        %v2910 = vunpack.c.h.b16 %v1564
        %v2911 = vunpack.c.l.b16 %v1565
        %v2912 = vunpack.c.h.b16 %v1565
        %v2913 = vunpack.c.l.b16 %v1566
        %v2914 = vunpack.c.h.b16 %v1566
        %v2915 = vunpack.c.l.b16 %v1567
        %v2916 = vunpack.c.h.b16 %v1567
        %v2917 = vunpack.c.l.b16 %v1568
        %v2918 = vunpack.c.h.b16 %v1568
        %v2919 = vunpack.c.l.b16 %v1569
        %v2920 = vunpack.c.h.b16 %v1569
        %v2921 = vunpack.c.l.b16 %v1570
        %v2922 = vunpack.c.h.b16 %v1570
        %v2923 = vunpack.c.l.b16 %v1571
        %v2924 = vunpack.c.h.b16 %v1571
        %v2925 = vunpack.c.l.b16 %v1572
        %v2926 = vunpack.c.h.b16 %v1572
        %v2927 = vunpack.c.l.b16 %v1573
        %v2928 = vunpack.c.h.b16 %v1573
        %v2929 = vunpack.c.l.b16 %v1574
        %v2930 = vunpack.c.h.b16 %v1574
        %v2931 = vunpack.c.l.b16 %v1575
        %v2932 = vunpack.c.h.b16 %v1575
        %v2933 = vunpack.c.l.b16 %v1576
        %v2934 = vunpack.c.h.b16 %v1576
        %v2935 = vunpack.c.l.b16 %v1577
        %v2936 = vunpack.c.h.b16 %v1577
        %v2937 = vunpack.c.l.b16 %v1578
        %v2938 = vunpack.c.h.b16 %v1578
        %v2939 = vunpack.c.l.b16 %v1579
        %v2940 = vunpack.c.h.b16 %v1579
        %v2941 = vunpack.c.l.b16 %v1580
        %v2942 = vunpack.c.h.b16 %v1580
        %v2943 = vunpack.c.l.b16 %v1581
        %v2944 = vunpack.c.h.b16 %v1581
        %v2945 = vunpack.c.l.b16 %v1582
        %v2946 = vunpack.c.h.b16 %v1582
        %v2947 = vunpack.c.l.b16 %v1583
        %v2948 = vunpack.c.h.b16 %v1583
        %v2949 = vunpack.c.l.b16 %v1584
        %v2950 = vunpack.c.h.b16 %v1584
        %v2951 = vunpack.c.l.b16 %v1585
        %v2952 = vunpack.c.h.b16 %v1585
        %v2953 = vunpack.c.l.b16 %v1586
        %v2954 = vunpack.c.h.b16 %v1586
        %v2955 = vunpack.c.l.b16 %v1587
        %v2956 = vunpack.c.h.b16 %v1587
        %v2957 = vunpack.c.l.b16 %v1588
        %v2958 = vunpack.c.h.b16 %v1588
        %v2959 = vunpack.c.l.b16 %v1589
        %v2960 = vunpack.c.h.b16 %v1589
        %v2961 = vunpack.c.l.b16 %v1590
        %v2962 = vunpack.c.h.b16 %v1590
        %v2963 = vunpack.c.l.b16 %v1591
        %v2964 = vunpack.c.h.b16 %v1591
        %v2965 = vunpack.c.l.b16 %v1592
        %v2966 = vunpack.c.h.b16 %v1592
        %v2967 = vunpack.c.l.b16 %v1593
        %v2968 = vunpack.c.h.b16 %v1593
        %v2969 = vunpack.c.l.b16 %v1594
        %v2970 = vunpack.c.h.b16 %v1594
        %v2971 = vunpack.c.l.b16 %v1595
        %v2972 = vunpack.c.h.b16 %v1595
        %v2973 = vunpack.c.l.b16 %v1596
        %v2974 = vunpack.c.h.b16 %v1596
        %v2975 = vunpack.c.l.b16 %v1597
        %v2976 = vunpack.c.h.b16 %v1597
        %v2977 = vunpack.c.l.b16 %v1598
        %v2978 = vunpack.c.h.b16 %v1598
        %v2979 = vunpack.c.l.b16 %v1599
        %v2980 = vunpack.c.h.b16 %v1599
        %v2981 = vunpack.c.l.b16 %v1600
        %v2982 = vunpack.c.h.b16 %v1600
        %v2983 = vunpack.c.l.b16 %v1601
        %v2984 = vunpack.c.h.b16 %v1601
        %v2985 = vunpack.c.l.b16 %v1602
        %v2986 = vunpack.c.h.b16 %v1602
        %v2987 = vunpack.c.l.b16 %v1603
        %v2988 = vunpack.c.h.b16 %v1603
        %v2989 = vunpack.c.l.b16 %v1604
        %v2990 = vunpack.c.h.b16 %v1604
        %v2991 = vunpack.c.l.b16 %v1605
        %v2992 = vunpack.c.h.b16 %v1605
        %v2993 = vunpack.c.l.b16 %v1606
        %v2994 = vunpack.c.h.b16 %v1606
        %v2995 = vunpack.c.l.b16 %v1607
        %v2996 = vunpack.c.h.b16 %v1607
        %v2997 = vunpack.c.l.b16 %v1608
        %v2998 = vunpack.c.h.b16 %v1608
        %v2999 = vunpack.c.l.b16 %v1609
        %v3000 = vunpack.c.h.b16 %v1609
        %v3001 = vunpack.c.l.b16 %v1610
        %v3002 = vunpack.c.h.b16 %v1610
        %v3003 = vunpack.c.l.b16 %v1611
        %v3004 = vunpack.c.h.b16 %v1611
        %v3005 = vunpack.c.l.b16 %v1612
        %v3006 = vunpack.c.h.b16 %v1612
        %v3007 = vunpack.c.l.b16 %v1613
        %v3008 = vunpack.c.h.b16 %v1613
        %v3009 = vunpack.c.l.b16 %v1614
        %v3010 = vunpack.c.h.b16 %v1614
        %v3011 = vunpack.c.l.b16 %v1615
        %v3012 = vunpack.c.h.b16 %v1615
        %v3013 = vunpack.c.l.b16 %v1616
        %v3014 = vunpack.c.h.b16 %v1616
        %v3015 = vunpack.c.l.b16 %v1617
        %v3016 = vunpack.c.h.b16 %v1617
        %v3017 = vunpack.c.l.b16 %v1618
        %v3018 = vunpack.c.h.b16 %v1618
        %v3019 = vunpack.c.l.b16 %v1619
        %v3020 = vunpack.c.h.b16 %v1619
        %v3021 = vunpack.c.l.b16 %v1620
        %v3022 = vunpack.c.h.b16 %v1620
        %v3023 = vunpack.c.l.b16 %v1621
        %v3024 = vunpack.c.h.b16 %v1621
        %v3025 = vunpack.c.l.b16 %v1622
        %v3026 = vunpack.c.h.b16 %v1622
        %v3027 = vunpack.c.l.b16 %v1623
        %v3028 = vunpack.c.h.b16 %v1623
        %v3029 = vunpack.c.l.b16 %v1624
        %v3030 = vunpack.c.h.b16 %v1624
        %v3031 = vunpack.c.l.b16 %v1625
        %v3032 = vunpack.c.h.b16 %v1625
        %v3033 = vunpack.c.l.b16 %v1626
        %v3034 = vunpack.c.h.b16 %v1626
        %v3035 = vunpack.c.l.b16 %v1627
        %v3036 = vunpack.c.h.b16 %v1627
        %v3037 = vunpack.c.l.b16 %v1628
        %v3038 = vunpack.c.h.b16 %v1628
        %v3039 = vunpack.c.l.b16 %v1629
        %v3040 = vunpack.c.h.b16 %v1629
        %v3041 = vunpack.c.l.b16 %v1630
        %v3042 = vunpack.c.h.b16 %v1630
        %v3043 = vunpack.c.l.b16 %v1631
        %v3044 = vunpack.c.h.b16 %v1631
        %v3045 = vunpack.c.l.b16 %v1632
        %v3046 = vunpack.c.h.b16 %v1632
        %v3047 = vunpack.c.l.b16 %v1633
        %v3048 = vunpack.c.h.b16 %v1633
        %v3049 = vunpack.c.l.b16 %v1634
        %v3050 = vunpack.c.h.b16 %v1634
        %v3051 = vunpack.c.l.b16 %v1635
        %v3052 = vunpack.c.h.b16 %v1635
        %v3053 = vunpack.c.l.b16 %v1636
        %v3054 = vunpack.c.h.b16 %v1636
        %v3055 = vunpack.c.l.b16 %v1637
        %v3056 = vunpack.c.h.b16 %v1637
        %v3057 = vunpack.c.l.b16 %v1638
        %v3058 = vunpack.c.h.b16 %v1638
        %v3059 = vunpack.c.l.b16 %v1639
        %v3060 = vunpack.c.h.b16 %v1639
        %v3061 = vunpack.c.l.b16 %v1640
        %v3062 = vunpack.c.h.b16 %v1640
        %v3063 = vunpack.c.l.b16 %v1641
        %v3064 = vunpack.c.h.b16 %v1641
        %v3065 = vunpack.c.l.b16 %v1642
        %v3066 = vunpack.c.h.b16 %v1642
        %v3067 = vunpack.c.l.b16 %v1643
        %v3068 = vunpack.c.h.b16 %v1643
        %v3069 = vunpack.c.l.b16 %v1644
        %v3070 = vunpack.c.h.b16 %v1644
        %v3071 = vunpack.c.l.b16 %v1645
        %v3072 = vunpack.c.h.b16 %v1645
        %v3073 = vunpack.c.l.b16 %v1646
        %v3074 = vunpack.c.h.b16 %v1646
        %v3075 = vunpack.c.l.b16 %v1647
        %v3076 = vunpack.c.h.b16 %v1647
        %v3077 = vunpack.c.l.b16 %v1648
        %v3078 = vunpack.c.h.b16 %v1648
        %v3079 = vunpack.c.l.b16 %v1649
        %v3080 = vunpack.c.h.b16 %v1649
        %v3081 = vunpack.c.l.b16 %v1650
        %v3082 = vunpack.c.h.b16 %v1650
        %v3083 = vunpack.c.l.b16 %v1651
        %v3084 = vunpack.c.h.b16 %v1651
        %v3085 = vunpack.c.l.b16 %v1652
        %v3086 = vunpack.c.h.b16 %v1652
        %v3087 = vunpack.c.l.b16 %v1653
        %v3088 = vunpack.c.h.b16 %v1653
        %v3089 = vunpack.c.l.b16 %v1654
        %v3090 = vunpack.c.h.b16 %v1654
        %v3091 = vunpack.c.l.b16 %v1655
        %v3092 = vunpack.c.h.b16 %v1655
        %v3093 = vunpack.c.l.b16 %v1656
        %v3094 = vunpack.c.h.b16 %v1656
        %v3095 = vunpack.c.l.b16 %v1657
        %v3096 = vunpack.c.h.b16 %v1657
        %v3097 = vunpack.c.l.b16 %v1658
        %v3098 = vunpack.c.h.b16 %v1658
        %v3099 = vunpack.c.l.b16 %v1659
        %v3100 = vunpack.c.h.b16 %v1659
        %v3101 = vunpack.c.l.b16 %v1660
        %v3102 = vunpack.c.h.b16 %v1660
        %v3103 = vunpack.c.l.b16 %v1661
        %v3104 = vunpack.c.h.b16 %v1661
        %v3105 = vunpack.c.l.b16 %v1662
        %v3106 = vunpack.c.h.b16 %v1662
        %v3107 = vunpack.c.l.b16 %v1663
        %v3108 = vunpack.c.h.b16 %v1663
        %v3109 = vunpack.c.l.b16 %v1664
        %v3110 = vunpack.c.h.b16 %v1664
        %v3111 = vunpack.c.l.b16 %v1665
        %v3112 = vunpack.c.h.b16 %v1665
        %v3113 = vunpack.c.l.b16 %v1666
        %v3114 = vunpack.c.h.b16 %v1666
        %v3115 = vunpack.c.l.b16 %v1667
        %v3116 = vunpack.c.h.b16 %v1667
        %v3117 = vunpack.c.l.b16 %v1668
        %v3118 = vunpack.c.h.b16 %v1668
        %v3119 = vunpack.c.l.b16 %v1669
        %v3120 = vunpack.c.h.b16 %v1669
        %v3121 = vunpack.c.l.b16 %v1670
        %v3122 = vunpack.c.h.b16 %v1670
        %v3123 = vunpack.c.l.b16 %v1671
        %v3124 = vunpack.c.h.b16 %v1671
        %v3125 = vunpack.c.l.b16 %v1672
        %v3126 = vunpack.c.h.b16 %v1672
        %v3127 = vunpack.c.l.b16 %v1673
        %v3128 = vunpack.c.h.b16 %v1673
        %v3129 = vunpack.c.l.b16 %v1674
        %v3130 = vunpack.c.h.b16 %v1674
        %v3131 = vunpack.c.l.b16 %v1675
        %v3132 = vunpack.c.h.b16 %v1675
        %v3133 = vunpack.c.l.b16 %v1676
        %v3134 = vunpack.c.h.b16 %v1676
        %v3135 = vunpack.c.l.b16 %v1677
        %v3136 = vunpack.c.h.b16 %v1677
        %v3137 = vunpack.c.l.b16 %v1678
        %v3138 = vunpack.c.h.b16 %v1678
        %v3139 = vunpack.c.l.b16 %v1679
        %v3140 = vunpack.c.h.b16 %v1679
        %v3141 = vunpack.c.l.b16 %v1680
        %v3142 = vunpack.c.h.b16 %v1680
        %v3143 = vunpack.c.l.b16 %v1681
        %v3144 = vunpack.c.h.b16 %v1681
        %v3145 = vunpack.c.l.b16 %v1682
        %v3146 = vunpack.c.h.b16 %v1682
        %v3147 = vunpack.c.l.b16 %v1683
        %v3148 = vunpack.c.h.b16 %v1683
        %v3149 = vunpack.c.l.b16 %v1684
        %v3150 = vunpack.c.h.b16 %v1684
        %v3151 = vunpack.c.l.b16 %v1685
        %v3152 = vunpack.c.h.b16 %v1685
        %v3153 = vunpack.c.l.b16 %v1686
        %v3154 = vunpack.c.h.b16 %v1686
        %v3155 = vunpack.c.l.b16 %v1687
        %v3156 = vunpack.c.h.b16 %v1687
        %v3157 = vunpack.c.l.b16 %v1688
        %v3158 = vunpack.c.h.b16 %v1688
        %v3159 = vunpack.c.l.b16 %v1689
        %v3160 = vunpack.c.h.b16 %v1689
        %v3161 = vunpack.c.l.b16 %v1690
        %v3162 = vunpack.c.h.b16 %v1690
        %v3163 = vunpack.c.l.b16 %v1691
        %v3164 = vunpack.c.h.b16 %v1691
        %v3165 = vunpack.c.l.b16 %v1692
        %v3166 = vunpack.c.h.b16 %v1692
        %v3167 = vunpack.c.l.b16 %v1693
        %v3168 = vunpack.c.h.b16 %v1693
        %v3169 = vunpack.c.l.b16 %v1694
        %v3170 = vunpack.c.h.b16 %v1694
        %v3171 = vunpack.c.l.b16 %v1695
        %v3172 = vunpack.c.h.b16 %v1695
        %v3173 = vunpack.c.l.b16 %v1696
        %v3174 = vunpack.c.h.b16 %v1696
        %v3175 = vunpack.c.l.b16 %v1697
        %v3176 = vunpack.c.h.b16 %v1697
        %v3177 = vunpack.c.l.b16 %v1698
        %v3178 = vunpack.c.h.b16 %v1698
        %v3179 = vunpack.c.l.b16 %v1699
        %v3180 = vunpack.c.h.b16 %v1699
        %v3181 = vunpack.c.l.b16 %v1700
        %v3182 = vunpack.c.h.b16 %v1700
        %v3183 = vunpack.c.l.b16 %v1701
        %v3184 = vunpack.c.h.b16 %v1701
        %v3185 = vunpack.c.l.b16 %v1702
        %v3186 = vunpack.c.h.b16 %v1702
        %v3187 = vunpack.c.l.b16 %v1703
        %v3188 = vunpack.c.h.b16 %v1703
        %v3189 = vunpack.c.l.b16 %v1704
        %v3190 = vunpack.c.h.b16 %v1704
        %v3191 = vunpack.c.l.b16 %v1705
        %v3192 = vunpack.c.h.b16 %v1705
        %v3193 = vunpack.c.l.b16 %v1706
        %v3194 = vunpack.c.h.b16 %v1706
        %v3195 = vunpack.c.l.b16 %v1707
        %v3196 = vunpack.c.h.b16 %v1707
        %v3197 = vunpack.c.l.b16 %v1708
        %v3198 = vunpack.c.h.b16 %v1708
        %v3199 = vunpack.c.l.b16 %v1709
        %v3200 = vunpack.c.h.b16 %v1709
        %v3201 = vunpack.c.l.b16 %v1710
        %v3202 = vunpack.c.h.b16 %v1710
        %v3203 = vunpack.c.l.b16 %v1711
        %v3204 = vunpack.c.h.b16 %v1711
        %v3205 = vunpack.c.l.b16 %v1712
        %v3206 = vunpack.c.h.b16 %v1712
        %v3207 = vunpack.c.l.b16 %v1713
        %v3208 = vunpack.c.h.b16 %v1713
        %v3209 = vunpack.c.l.b16 %v1714
        %v3210 = vunpack.c.h.b16 %v1714
        %v3211 = vunpack.c.l.b16 %v1715
        %v3212 = vunpack.c.h.b16 %v1715
        %v3213 = vunpack.c.l.b16 %v1716
        %v3214 = vunpack.c.h.b16 %v1716
        %v3215 = vunpack.c.l.b16 %v1717
        %v3216 = vunpack.c.h.b16 %v1717
        %v3217 = vunpack.c.l.b16 %v1718
        %v3218 = vunpack.c.h.b16 %v1718
        %v3219 = vunpack.c.l.b16 %v1719
        %v3220 = vunpack.c.h.b16 %v1719
        %v3221 = vunpack.c.l.b16 %v1720
        %v3222 = vunpack.c.h.b16 %v1720
        %v3223 = vunpack.c.l.b16 %v1721
        %v3224 = vunpack.c.h.b16 %v1721
        %v3225 = vunpack.c.l.b16 %v1722
        %v3226 = vunpack.c.h.b16 %v1722
        %v3227 = vunpack.c.l.b16 %v1723
        %v3228 = vunpack.c.h.b16 %v1723
        %v3229 = vunpack.c.l.b16 %v1724
        %v3230 = vunpack.c.h.b16 %v1724
        %v3231 = vunpack.c.l.b16 %v1725
        %v3232 = vunpack.c.h.b16 %v1725
        %v3233 = vunpack.c.l.b16 %v1726
        %v3234 = vunpack.c.h.b16 %v1726
        %v3235 = vunpack.c.l.b16 %v1727
        %v3236 = vunpack.c.h.b16 %v1727
        %v3237 = vunpack.c.l.b16 %v1728
        %v3238 = vunpack.c.h.b16 %v1728
        %v3239 = vunpack.c.l.b16 %v1729
        %v3240 = vunpack.c.h.b16 %v1729
        %v3241 = vunpack.c.l.b16 %v1730
        %v3242 = vunpack.c.h.b16 %v1730
        %v3243 = vunpack.c.l.b16 %v1731
        %v3244 = vunpack.c.h.b16 %v1731
        %v3245 = vunpack.c.l.b16 %v1732
        %v3246 = vunpack.c.h.b16 %v1732
        %v3247 = vunpack.c.l.b16 %v1733
        %v3248 = vunpack.c.h.b16 %v1733
        %v3249 = vunpack.c.l.b16 %v1734
        %v3250 = vunpack.c.h.b16 %v1734
        %v3251 = vunpack.c.l.b16 %v1735
        %v3252 = vunpack.c.h.b16 %v1735
        %v3253 = vunpack.c.l.b16 %v1736
        %v3254 = vunpack.c.h.b16 %v1736
        %v3255 = vunpack.c.l.b16 %v1737
        %v3256 = vunpack.c.h.b16 %v1737
        %v3257 = vunpack.c.l.b16 %v1738
        %v3258 = vunpack.c.h.b16 %v1738
        %v3259 = vunpack.c.l.b16 %v1739
        %v3260 = vunpack.c.h.b16 %v1739
        %v3261 = vunpack.c.l.b16 %v1740
        %v3262 = vunpack.c.h.b16 %v1740
        %v3263 = vunpack.c.l.b16 %v1741
        %v3264 = vunpack.c.h.b16 %v1741
        %v3265 = vunpack.c.l.b16 %v1742
        %v3266 = vunpack.c.h.b16 %v1742
        %v3267 = vunpack.c.l.b16 %v1743
        %v3268 = vunpack.c.h.b16 %v1743
        %v3269 = vunpack.c.l.b16 %v1744
        %v3270 = vunpack.c.h.b16 %v1744
        %v3271 = vunpack.c.l.b16 %v1745
        %v3272 = vunpack.c.h.b16 %v1745
        %v3273 = vunpack.c.l.b16 %v1746
        %v3274 = vunpack.c.h.b16 %v1746
        %v3275 = vunpack.c.l.b16 %v1747
        %v3276 = vunpack.c.h.b16 %v1747
        %v3277 = vunpack.c.l.b16 %v1748
        %v3278 = vunpack.c.h.b16 %v1748
        %v3279 = vunpack.c.l.b16 %v1749
        %v3280 = vunpack.c.h.b16 %v1749
        %v3281 = vunpack.c.l.b16 %v1750
        %v3282 = vunpack.c.h.b16 %v1750
        %v3283 = vunpack.c.l.b16 %v1751
        %v3284 = vunpack.c.h.b16 %v1751
        %v3285 = vunpack.c.l.b16 %v1752
        %v3286 = vunpack.c.h.b16 %v1752
        %v3287 = vunpack.c.l.b16 %v1753
        %v3288 = vunpack.c.h.b16 %v1753
        %v3289 = vunpack.c.l.b16 %v1754
        %v3290 = vunpack.c.h.b16 %v1754
        %v3291 = vunpack.c.l.b16 %v1755
        %v3292 = vunpack.c.h.b16 %v1755
        %v3293 = vunpack.c.l.b16 %v1756
        %v3294 = vunpack.c.h.b16 %v1756
        %v3295 = vunpack.c.l.b16 %v1757
        %v3296 = vunpack.c.h.b16 %v1757
        %v3297 = vunpack.c.l.b16 %v1758
        %v3298 = vunpack.c.h.b16 %v1758
        %v3299 = vunpack.c.l.b16 %v1759
        %v3300 = vunpack.c.h.b16 %v1759
        %v3301 = vunpack.c.l.b16 %v1760
        %v3302 = vunpack.c.h.b16 %v1760
        %v3303 = vunpack.c.l.b16 %v1761
        %v3304 = vunpack.c.h.b16 %v1761
        %v3305 = vunpack.c.l.b16 %v1762
        %v3306 = vunpack.c.h.b16 %v1762
        %v3307 = vunpack.c.l.b16 %v1763
        %v3308 = vunpack.c.h.b16 %v1763
        %v3309 = vunpack.c.l.b16 %v1764
        %v3310 = vunpack.c.h.b16 %v1764
        %v3311 = vunpack.c.l.b16 %v1765
        %v3312 = vunpack.c.h.b16 %v1765
        %v3313 = vunpack.c.l.b16 %v1766
        %v3314 = vunpack.c.h.b16 %v1766
        %v3315 = vunpack.c.l.b16 %v1767
        %v3316 = vunpack.c.h.b16 %v1767
        %v3317 = vunpack.c.l.b16 %v1768
        %v3318 = vunpack.c.h.b16 %v1768
        %v3319 = vunpack.c.l.b16 %v1769
        %v3320 = vunpack.c.h.b16 %v1769
        %v3321 = vunpack.c.l.b16 %v1770
        %v3322 = vunpack.c.h.b16 %v1770
        %v3323 = vunpack.c.l.b16 %v1771
        %v3324 = vunpack.c.h.b16 %v1771
        %v3325 = vunpack.c.l.b16 %v1772
        %v3326 = vunpack.c.h.b16 %v1772
        %v3327 = vunpack.c.l.b16 %v1773
        %v3328 = vunpack.c.h.b16 %v1773
        %v3329 = vunpack.c.l.b16 %v1774
        %v3330 = vunpack.c.h.b16 %v1774
        %v3331 = vunpack.c.l.b16 %v1775
        %v3332 = vunpack.c.h.b16 %v1775
        %v3333 = vunpack.c.l.b16 %v1776
        %v3334 = vunpack.c.h.b16 %v1776
        %v3335 = vunpack.c.l.b16 %v1777
        %v3336 = vunpack.c.h.b16 %v1777
        %v3337 = vunpack.c.l.b16 %v1778
        %v3338 = vunpack.c.h.b16 %v1778
        %v3339 = vunpack.c.l.b16 %v1779
        %v3340 = vunpack.c.h.b16 %v1779
        %v3341 = vunpack.c.l.b16 %v1780
        %v3342 = vunpack.c.h.b16 %v1780
        %v3343 = vunpack.c.l.b16 %v1781
        %v3344 = vunpack.c.h.b16 %v1781
        %v3345 = vunpack.c.l.b16 %v1782
        %v3346 = vunpack.c.h.b16 %v1782
        %v3347 = vunpack.c.l.b16 %v1783
        %v3348 = vunpack.c.h.b16 %v1783
        %v3349 = vunpack.c.l.b16 %v1784
        %v3350 = vunpack.c.h.b16 %v1784
        %v3351 = vunpack.c.l.b16 %v1785
        %v3352 = vunpack.c.h.b16 %v1785
        %v3353 = vunpack.c.l.b16 %v1786
        %v3354 = vunpack.c.h.b16 %v1786
        %v3355 = vunpack.c.l.b16 %v1787
        %v3356 = vunpack.c.h.b16 %v1787
        %v3357 = vunpack.c.l.b16 %v1788
        %v3358 = vunpack.c.h.b16 %v1788
        %v3359 = vunpack.c.l.b16 %v1789
        %v3360 = vunpack.c.h.b16 %v1789
        %v3361 = vunpack.c.l.b16 %v1790
        %v3362 = vunpack.c.h.b16 %v1790
        %v3363 = vunpack.c.l.b16 %v1791
        %v3364 = vunpack.c.h.b16 %v1791
        %v3365 = vunpack.c.l.b16 %v1792
        %v3366 = vunpack.c.h.b16 %v1792
        %v3367 = vunpack.c.l.b16 %v1793
        %v3368 = vunpack.c.h.b16 %v1793
        %v3369 = vunpack.c.l.b16 %v1794
        %v3370 = vunpack.c.h.b16 %v1794
        %v3371 = vunpack.c.l.b16 %v1795
        %v3372 = vunpack.c.h.b16 %v1795
        %v3373 = vunpack.c.l.b16 %v1796
        %v3374 = vunpack.c.h.b16 %v1796
        %v3375 = vunpack.c.l.b16 %v1797
        %v3376 = vunpack.c.h.b16 %v1797
        %v3377 = vunpack.c.l.b16 %v1798
        %v3378 = vunpack.c.h.b16 %v1798
        %v3379 = vunpack.c.l.b16 %v1799
        %v3380 = vunpack.c.h.b16 %v1799
        %v3381 = vunpack.c.l.b16 %v1800
        %v3382 = vunpack.c.h.b16 %v1800
        %v3383 = vunpack.c.l.b16 %v1801
        %v3384 = vunpack.c.h.b16 %v1801
        %v3385 = vunpack.c.l.b16 %v1802
        %v3386 = vunpack.c.h.b16 %v1802
        %v3387 = vunpack.c.l.b16 %v1803
        %v3388 = vunpack.c.h.b16 %v1803
        %v3389 = vunpack.c.l.b16 %v1804
        %v3390 = vunpack.c.h.b16 %v1804
        %v3391 = vunpack.c.l.b16 %v1805
        %v3392 = vunpack.c.h.b16 %v1805
        %v3393 = vunpack.c.l.b16 %v1806
        %v3394 = vunpack.c.h.b16 %v1806
        %v3395 = vunpack.c.l.b16 %v1807
        %v3396 = vunpack.c.h.b16 %v1807
        %v3397 = vunpack.c.l.b16 %v1808
        %v3398 = vunpack.c.h.b16 %v1808
        %v3399 = vunpack.c.l.b16 %v1809
        %v3400 = vunpack.c.h.b16 %v1809
        %v3401 = vunpack.c.l.b16 %v1810
        %v3402 = vunpack.c.h.b16 %v1810
        %v3403 = vunpack.c.l.b16 %v1811
        %v3404 = vunpack.c.h.b16 %v1811
        %v3405 = vunpack.c.l.b16 %v1812
        %v3406 = vunpack.c.h.b16 %v1812
        %v3407 = vunpack.c.l.b16 %v1813
        %v3408 = vunpack.c.h.b16 %v1813
        %v3409 = vunpack.c.l.b16 %v1814
        %v3410 = vunpack.c.h.b16 %v1814
        %v3411 = vunpack.c.l.b16 %v1815
        %v3412 = vunpack.c.h.b16 %v1815
        %v3413 = vunpack.c.l.b16 %v1816
        %v3414 = vunpack.c.h.b16 %v1816
        %v3415 = vunpack.c.l.b16 %v1817
        %v3416 = vunpack.c.h.b16 %v1817
        %v3417 = vunpack.c.l.b16 %v1818
        %v3418 = vunpack.c.h.b16 %v1818
        %v3419 = vunpack.c.l.b16 %v1819
        %v3420 = vunpack.c.h.b16 %v1819
        %v3421 = vunpack.c.l.b16 %v1820
        %v3422 = vunpack.c.h.b16 %v1820
        %v3423 = vunpack.c.l.b16 %v1821
        %v3424 = vunpack.c.h.b16 %v1821
        %v3425 = vunpack.c.l.b16 %v1822
        %v3426 = vunpack.c.h.b16 %v1822
        %v3427 = vunpack.c.l.b16 %v1823
        %v3428 = vunpack.c.h.b16 %v1823
        %v3429 = vunpack.c.l.b16 %v1824
        %v3430 = vunpack.c.h.b16 %v1824
        %v3431 = vunpack.c.l.b16 %v1825
        %v3432 = vunpack.c.h.b16 %v1825
        %v3433 = vunpack.c.l.b16 %v1826
        %v3434 = vunpack.c.h.b16 %v1826
        %v3435 = vunpack.c.l.b16 %v1827
        %v3436 = vunpack.c.h.b16 %v1827
        %v3437 = vunpack.c.l.b16 %v1828
        %v3438 = vunpack.c.h.b16 %v1828
        %v3439 = vunpack.c.l.b16 %v1829
        %v3440 = vunpack.c.h.b16 %v1829
        %v3441 = vunpack.c.l.b16 %v1830
        %v3442 = vunpack.c.h.b16 %v1830
        %v3443 = vunpack.c.l.b16 %v1831
        %v3444 = vunpack.c.h.b16 %v1831
        %v3445 = vunpack.c.l.b16 %v1832
        %v3446 = vunpack.c.h.b16 %v1832
        %v3447 = vunpack.c.l.b16 %v1833
        %v3448 = vunpack.c.h.b16 %v1833
        %v3449 = vunpack.c.l.b16 %v1834
        %v3450 = vunpack.c.h.b16 %v1834
        %v3451 = vunpack.c.l.b16 %v1835
        %v3452 = vunpack.c.h.b16 %v1835
        %v3453 = vunpack.c.l.b16 %v1836
        %v3454 = vunpack.c.h.b16 %v1836
        %v3455 = vunpack.c.l.b16 %v1837
        %v3456 = vunpack.c.h.b16 %v1837
        %v3457 = vunpack.c.l.b16 %v1838
        %v3458 = vunpack.c.h.b16 %v1838
        %v3459 = vunpack.c.l.b16 %v1839
        %v3460 = vunpack.c.h.b16 %v1839
        %v3461 = vunpack.c.l.b16 %v1840
        %v3462 = vunpack.c.h.b16 %v1840
        %v3463 = vunpack.c.l.b16 %v1841
        %v3464 = vunpack.c.h.b16 %v1841
        %v3465 = vunpack.c.l.b16 %v1842
        %v3466 = vunpack.c.h.b16 %v1842
        %v3467 = vunpack.c.l.b16 %v1843
        %v3468 = vunpack.c.h.b16 %v1843
        %v3469 = vunpack.c.l.b16 %v1844
        %v3470 = vunpack.c.h.b16 %v1844
        %v3471 = vunpack.c.l.b16 %v1845
        %v3472 = vunpack.c.h.b16 %v1845
        %v3473 = vunpack.c.l.b16 %v1846
        %v3474 = vunpack.c.h.b16 %v1846
        %v3475 = vunpack.c.l.b16 %v1847
        %v3476 = vunpack.c.h.b16 %v1847
        %v3477 = vunpack.c.l.b16 %v1848
        %v3478 = vunpack.c.h.b16 %v1848
        %v3479 = vunpack.c.l.b16 %v1849
        %v3480 = vunpack.c.h.b16 %v1849
        %v3481 = vunpack.c.l.b16 %v1850
        %v3482 = vunpack.c.h.b16 %v1850
        %v3483 = vunpack.c.l.b16 %v1851
        %v3484 = vunpack.c.h.b16 %v1851
        %v3485 = vunpack.c.l.b16 %v1852
        %v3486 = vunpack.c.h.b16 %v1852
        %v3487 = vunpack.c.l.b16 %v1853
        %v3488 = vunpack.c.h.b16 %v1853
        %v3489 = vunpack.c.l.b16 %v1854
        %v3490 = vunpack.c.h.b16 %v1854
        %v3491 = vpack.c.b16 %v2475, %v2467
        %v3492 = vpack.c.b16 %v2476, %v2468
        %v3493 = vpack.c.b16 %v2477, %v2469
        %v3494 = vpack.c.b16 %v2478, %v2470
        %v3495 = vpack.c.b16 %v2479, %v2471
        %v3496 = vpack.c.b16 %v2480, %v2472
        %v3497 = vpack.c.b16 %v2481, %v2473
        %v3498 = vpack.c.b16 %v2482, %v2474
        %v3499 = vpack.c.b16 %v2491, %v2483
        %v3500 = vpack.c.b16 %v2492, %v2484
        %v3501 = vpack.c.b16 %v2493, %v2485
        %v3502 = vpack.c.b16 %v2494, %v2486
        %v3503 = vpack.c.b16 %v2495, %v2487
        %v3504 = vpack.c.b16 %v2496, %v2488
        %v3505 = vpack.c.b16 %v2497, %v2489
        %v3506 = vpack.c.b16 %v2498, %v2490
        %v3507 = vpack.c.b16 %v2507, %v2499
        %v3508 = vpack.c.b16 %v2508, %v2500
        %v3509 = vpack.c.b16 %v2509, %v2501
        %v3510 = vpack.c.b16 %v2510, %v2502
        %v3511 = vpack.c.b16 %v2511, %v2503
        %v3512 = vpack.c.b16 %v2512, %v2504
        %v3513 = vpack.c.b16 %v2513, %v2505
        %v3514 = vpack.c.b16 %v2514, %v2506
        %v3515 = vpack.c.b16 %v2523, %v2515
        %v3516 = vpack.c.b16 %v2524, %v2516
        %v3517 = vpack.c.b16 %v2525, %v2517
        %v3518 = vpack.c.b16 %v2526, %v2518
        %v3519 = vpack.c.b16 %v2527, %v2519
        %v3520 = vpack.c.b16 %v2528, %v2520
        %v3521 = vpack.c.b16 %v2529, %v2521
        %v3522 = vpack.c.b16 %v2530, %v2522
        %v3523 = vpack.c.b16 %v2539, %v2531
        %v3524 = vpack.c.b16 %v2540, %v2532
        %v3525 = vpack.c.b16 %v2541, %v2533
        %v3526 = vpack.c.b16 %v2542, %v2534
        %v3527 = vpack.c.b16 %v2543, %v2535
        %v3528 = vpack.c.b16 %v2544, %v2536
        %v3529 = vpack.c.b16 %v2545, %v2537
        %v3530 = vpack.c.b16 %v2546, %v2538
        %v3531 = vpack.c.b16 %v2555, %v2547
        %v3532 = vpack.c.b16 %v2556, %v2548
        %v3533 = vpack.c.b16 %v2557, %v2549
        %v3534 = vpack.c.b16 %v2558, %v2550
        %v3535 = vpack.c.b16 %v2559, %v2551
        %v3536 = vpack.c.b16 %v2560, %v2552
        %v3537 = vpack.c.b16 %v2561, %v2553
        %v3538 = vpack.c.b16 %v2562, %v2554
        %v3539 = vpack.c.b16 %v2571, %v2563
        %v3540 = vpack.c.b16 %v2572, %v2564
        %v3541 = vpack.c.b16 %v2573, %v2565
        %v3542 = vpack.c.b16 %v2574, %v2566
        %v3543 = vpack.c.b16 %v2575, %v2567
        %v3544 = vpack.c.b16 %v2576, %v2568
        %v3545 = vpack.c.b16 %v2577, %v2569
        %v3546 = vpack.c.b16 %v2578, %v2570
        %v3547 = vpack.c.b16 %v2587, %v2579
        %v3548 = vpack.c.b16 %v2588, %v2580
        %v3549 = vpack.c.b16 %v2589, %v2581
        %v3550 = vpack.c.b16 %v2590, %v2582
        %v3551 = vpack.c.b16 %v2591, %v2583
        %v3552 = vpack.c.b16 %v2592, %v2584
        %v3553 = vpack.c.b16 %v2593, %v2585
        %v3554 = vpack.c.b16 %v2594, %v2586
        %v3555 = vpack.c.b16 %v2603, %v2595
        %v3556 = vpack.c.b16 %v2604, %v2596
        %v3557 = vpack.c.b16 %v2605, %v2597
        %v3558 = vpack.c.b16 %v2606, %v2598
        %v3559 = vpack.c.b16 %v2607, %v2599
        %v3560 = vpack.c.b16 %v2608, %v2600
        %v3561 = vpack.c.b16 %v2609, %v2601
        %v3562 = vpack.c.b16 %v2610, %v2602
        %v3563 = vpack.c.b16 %v2619, %v2611
        %v3564 = vpack.c.b16 %v2620, %v2612
        %v3565 = vpack.c.b16 %v2621, %v2613
        %v3566 = vpack.c.b16 %v2622, %v2614
        %v3567 = vpack.c.b16 %v2623, %v2615
        %v3568 = vpack.c.b16 %v2624, %v2616
        %v3569 = vpack.c.b16 %v2625, %v2617
        %v3570 = vpack.c.b16 %v2626, %v2618
        %v3571 = vpack.c.b16 %v2635, %v2627
        %v3572 = vpack.c.b16 %v2636, %v2628
        %v3573 = vpack.c.b16 %v2637, %v2629
        %v3574 = vpack.c.b16 %v2638, %v2630
        %v3575 = vpack.c.b16 %v2639, %v2631
        %v3576 = vpack.c.b16 %v2640, %v2632
        %v3577 = vpack.c.b16 %v2641, %v2633
        %v3578 = vpack.c.b16 %v2642, %v2634
        %v3579 = vpack.c.b16 %v2651, %v2643
        %v3580 = vpack.c.b16 %v2652, %v2644
        %v3581 = vpack.c.b16 %v2653, %v2645
        %v3582 = vpack.c.b16 %v2654, %v2646
        %v3583 = vpack.c.b16 %v2655, %v2647
        %v3584 = vpack.c.b16 %v2656, %v2648
        %v3585 = vpack.c.b16 %v2657, %v2649
        %v3586 = vpack.c.b16 %v2658, %v2650
        %v3587 = vpack.c.b16 %v2667, %v2659
        %v3588 = vpack.c.b16 %v2668, %v2660
        %v3589 = vpack.c.b16 %v2669, %v2661
        %v3590 = vpack.c.b16 %v2670, %v2662
        %v3591 = vpack.c.b16 %v2671, %v2663
        %v3592 = vpack.c.b16 %v2672, %v2664
        %v3593 = vpack.c.b16 %v2673, %v2665
        %v3594 = vpack.c.b16 %v2674, %v2666
        %v3595 = vpack.c.b16 %v2683, %v2675
        %v3596 = vpack.c.b16 %v2684, %v2676
        %v3597 = vpack.c.b16 %v2685, %v2677
        %v3598 = vpack.c.b16 %v2686, %v2678
        %v3599 = vpack.c.b16 %v2687, %v2679
        %v3600 = vpack.c.b16 %v2688, %v2680
        %v3601 = vpack.c.b16 %v2689, %v2681
        %v3602 = vpack.c.b16 %v2690, %v2682
        %v3603 = vpack.c.b16 %v2699, %v2691
        %v3604 = vpack.c.b16 %v2700, %v2692
        %v3605 = vpack.c.b16 %v2701, %v2693
        %v3606 = vpack.c.b16 %v2702, %v2694
        %v3607 = vpack.c.b16 %v2703, %v2695
        %v3608 = vpack.c.b16 %v2704, %v2696
        %v3609 = vpack.c.b16 %v2705, %v2697
        %v3610 = vpack.c.b16 %v2706, %v2698
        %v3611 = vpack.c.b16 %v2715, %v2707
        %v3612 = vpack.c.b16 %v2716, %v2708
        %v3613 = vpack.c.b16 %v2717, %v2709
        %v3614 = vpack.c.b16 %v2718, %v2710
        %v3615 = vpack.c.b16 %v2719, %v2711
        %v3616 = vpack.c.b16 %v2720, %v2712
        %v3617 = vpack.c.b16 %v2721, %v2713
        %v3618 = vpack.c.b16 %v2722, %v2714
        %v3619 = vpack.c.b16 %v2731, %v2723
        %v3620 = vpack.c.b16 %v2732, %v2724
        %v3621 = vpack.c.b16 %v2733, %v2725
        %v3622 = vpack.c.b16 %v2734, %v2726
        %v3623 = vpack.c.b16 %v2735, %v2727
        %v3624 = vpack.c.b16 %v2736, %v2728
        %v3625 = vpack.c.b16 %v2737, %v2729
        %v3626 = vpack.c.b16 %v2738, %v2730
        %v3627 = vpack.c.b16 %v2747, %v2739
        %v3628 = vpack.c.b16 %v2748, %v2740
        %v3629 = vpack.c.b16 %v2749, %v2741
        %v3630 = vpack.c.b16 %v2750, %v2742
        %v3631 = vpack.c.b16 %v2751, %v2743
        %v3632 = vpack.c.b16 %v2752, %v2744
        %v3633 = vpack.c.b16 %v2753, %v2745
        %v3634 = vpack.c.b16 %v2754, %v2746
        %v3635 = vpack.c.b16 %v2763, %v2755
        %v3636 = vpack.c.b16 %v2764, %v2756
        %v3637 = vpack.c.b16 %v2765, %v2757
        %v3638 = vpack.c.b16 %v2766, %v2758
        %v3639 = vpack.c.b16 %v2767, %v2759
        %v3640 = vpack.c.b16 %v2768, %v2760
        %v3641 = vpack.c.b16 %v2769, %v2761
        %v3642 = vpack.c.b16 %v2770, %v2762
        %v3643 = vpack.c.b16 %v2779, %v2771
        %v3644 = vpack.c.b16 %v2780, %v2772
        %v3645 = vpack.c.b16 %v2781, %v2773
        %v3646 = vpack.c.b16 %v2782, %v2774
        %v3647 = vpack.c.b16 %v2783, %v2775
        %v3648 = vpack.c.b16 %v2784, %v2776
        %v3649 = vpack.c.b16 %v2785, %v2777
        %v3650 = vpack.c.b16 %v2786, %v2778
        %v3651 = vpack.c.b16 %v2795, %v2787
        %v3652 = vpack.c.b16 %v2796, %v2788
        %v3653 = vpack.c.b16 %v2797, %v2789
        %v3654 = vpack.c.b16 %v2798, %v2790
        %v3655 = vpack.c.b16 %v2799, %v2791
        %v3656 = vpack.c.b16 %v2800, %v2792
        %v3657 = vpack.c.b16 %v2801, %v2793
        %v3658 = vpack.c.b16 %v2802, %v2794
        %v3659 = vpack.c.b16 %v2811, %v2803
        %v3660 = vpack.c.b16 %v2812, %v2804
        %v3661 = vpack.c.b16 %v2813, %v2805
        %v3662 = vpack.c.b16 %v2814, %v2806
        %v3663 = vpack.c.b16 %v2815, %v2807
        %v3664 = vpack.c.b16 %v2816, %v2808
        %v3665 = vpack.c.b16 %v2817, %v2809
        %v3666 = vpack.c.b16 %v2818, %v2810
        %v3667 = vpack.c.b16 %v2827, %v2819
        %v3668 = vpack.c.b16 %v2828, %v2820
        %v3669 = vpack.c.b16 %v2829, %v2821
        %v3670 = vpack.c.b16 %v2830, %v2822
        %v3671 = vpack.c.b16 %v2831, %v2823
        %v3672 = vpack.c.b16 %v2832, %v2824
        %v3673 = vpack.c.b16 %v2833, %v2825
        %v3674 = vpack.c.b16 %v2834, %v2826
        %v3675 = vpack.c.b16 %v2843, %v2835
        %v3676 = vpack.c.b16 %v2844, %v2836
        %v3677 = vpack.c.b16 %v2845, %v2837
        %v3678 = vpack.c.b16 %v2846, %v2838
        %v3679 = vpack.c.b16 %v2847, %v2839
        %v3680 = vpack.c.b16 %v2848, %v2840
        %v3681 = vpack.c.b16 %v2849, %v2841
        %v3682 = vpack.c.b16 %v2850, %v2842
        %v3683 = vpack.c.b16 %v2859, %v2851
        %v3684 = vpack.c.b16 %v2860, %v2852
        %v3685 = vpack.c.b16 %v2861, %v2853
        %v3686 = vpack.c.b16 %v2862, %v2854
        %v3687 = vpack.c.b16 %v2863, %v2855
        %v3688 = vpack.c.b16 %v2864, %v2856
        %v3689 = vpack.c.b16 %v2865, %v2857
        %v3690 = vpack.c.b16 %v2866, %v2858
        %v3691 = vpack.c.b16 %v2875, %v2867
        %v3692 = vpack.c.b16 %v2876, %v2868
        %v3693 = vpack.c.b16 %v2877, %v2869
        %v3694 = vpack.c.b16 %v2878, %v2870
        %v3695 = vpack.c.b16 %v2879, %v2871
        %v3696 = vpack.c.b16 %v2880, %v2872
        %v3697 = vpack.c.b16 %v2881, %v2873
        %v3698 = vpack.c.b16 %v2882, %v2874
        %v3699 = vpack.c.b16 %v2891, %v2883
        %v3700 = vpack.c.b16 %v2892, %v2884
        %v3701 = vpack.c.b16 %v2893, %v2885
        %v3702 = vpack.c.b16 %v2894, %v2886
        %v3703 = vpack.c.b16 %v2895, %v2887
        %v3704 = vpack.c.b16 %v2896, %v2888
        %v3705 = vpack.c.b16 %v2897, %v2889
        %v3706 = vpack.c.b16 %v2898, %v2890
        %v3707 = vpack.c.b16 %v2907, %v2899
        %v3708 = vpack.c.b16 %v2908, %v2900
        %v3709 = vpack.c.b16 %v2909, %v2901
        %v3710 = vpack.c.b16 %v2910, %v2902
        %v3711 = vpack.c.b16 %v2911, %v2903
        %v3712 = vpack.c.b16 %v2912, %v2904
        %v3713 = vpack.c.b16 %v2913, %v2905
        %v3714 = vpack.c.b16 %v2914, %v2906
        %v3715 = vpack.c.b16 %v2923, %v2915
        %v3716 = vpack.c.b16 %v2924, %v2916
        %v3717 = vpack.c.b16 %v2925, %v2917
        %v3718 = vpack.c.b16 %v2926, %v2918
        %v3719 = vpack.c.b16 %v2927, %v2919
        %v3720 = vpack.c.b16 %v2928, %v2920
        %v3721 = vpack.c.b16 %v2929, %v2921
        %v3722 = vpack.c.b16 %v2930, %v2922
        %v3723 = vpack.c.b16 %v2939, %v2931
        %v3724 = vpack.c.b16 %v2940, %v2932
        %v3725 = vpack.c.b16 %v2941, %v2933
        %v3726 = vpack.c.b16 %v2942, %v2934
        %v3727 = vpack.c.b16 %v2943, %v2935
        %v3728 = vpack.c.b16 %v2944, %v2936
        %v3729 = vpack.c.b16 %v2945, %v2937
        %v3730 = vpack.c.b16 %v2946, %v2938
        %v3731 = vpack.c.b16 %v2955, %v2947
        %v3732 = vpack.c.b16 %v2956, %v2948
        %v3733 = vpack.c.b16 %v2957, %v2949
        %v3734 = vpack.c.b16 %v2958, %v2950
        %v3735 = vpack.c.b16 %v2959, %v2951
        %v3736 = vpack.c.b16 %v2960, %v2952
        %v3737 = vpack.c.b16 %v2961, %v2953
        %v3738 = vpack.c.b16 %v2962, %v2954
        %v3739 = vpack.c.b16 %v2971, %v2963
        %v3740 = vpack.c.b16 %v2972, %v2964
        %v3741 = vpack.c.b16 %v2973, %v2965
        %v3742 = vpack.c.b16 %v2974, %v2966
        %v3743 = vpack.c.b16 %v2975, %v2967
        %v3744 = vpack.c.b16 %v2976, %v2968
        %v3745 = vpack.c.b16 %v2977, %v2969
        %v3746 = vpack.c.b16 %v2978, %v2970
        %v3747 = vpack.c.b16 %v2987, %v2979
        %v3748 = vpack.c.b16 %v2988, %v2980
        %v3749 = vpack.c.b16 %v2989, %v2981
        %v3750 = vpack.c.b16 %v2990, %v2982
        %v3751 = vpack.c.b16 %v2991, %v2983
        %v3752 = vpack.c.b16 %v2992, %v2984
        %v3753 = vpack.c.b16 %v2993, %v2985
        %v3754 = vpack.c.b16 %v2994, %v2986
        %v3755 = vpack.c.b16 %v3003, %v2995
        %v3756 = vpack.c.b16 %v3004, %v2996
        %v3757 = vpack.c.b16 %v3005, %v2997
        %v3758 = vpack.c.b16 %v3006, %v2998
        %v3759 = vpack.c.b16 %v3007, %v2999
        %v3760 = vpack.c.b16 %v3008, %v3000
        %v3761 = vpack.c.b16 %v3009, %v3001
        %v3762 = vpack.c.b16 %v3010, %v3002
        %v3763 = vpack.c.b16 %v3019, %v3011
        %v3764 = vpack.c.b16 %v3020, %v3012
        %v3765 = vpack.c.b16 %v3021, %v3013
        %v3766 = vpack.c.b16 %v3022, %v3014
        %v3767 = vpack.c.b16 %v3023, %v3015
        %v3768 = vpack.c.b16 %v3024, %v3016
        %v3769 = vpack.c.b16 %v3025, %v3017
        %v3770 = vpack.c.b16 %v3026, %v3018
        %v3771 = vpack.c.b16 %v3035, %v3027
        %v3772 = vpack.c.b16 %v3036, %v3028
        %v3773 = vpack.c.b16 %v3037, %v3029
        %v3774 = vpack.c.b16 %v3038, %v3030
        %v3775 = vpack.c.b16 %v3039, %v3031
        %v3776 = vpack.c.b16 %v3040, %v3032
        %v3777 = vpack.c.b16 %v3041, %v3033
        %v3778 = vpack.c.b16 %v3042, %v3034
        %v3779 = vpack.c.b16 %v3051, %v3043
        %v3780 = vpack.c.b16 %v3052, %v3044
        %v3781 = vpack.c.b16 %v3053, %v3045
        %v3782 = vpack.c.b16 %v3054, %v3046
        %v3783 = vpack.c.b16 %v3055, %v3047
        %v3784 = vpack.c.b16 %v3056, %v3048
        %v3785 = vpack.c.b16 %v3057, %v3049
        %v3786 = vpack.c.b16 %v3058, %v3050
        %v3787 = vpack.c.b16 %v3067, %v3059
        %v3788 = vpack.c.b16 %v3068, %v3060
        %v3789 = vpack.c.b16 %v3069, %v3061
        %v3790 = vpack.c.b16 %v3070, %v3062
        %v3791 = vpack.c.b16 %v3071, %v3063
        %v3792 = vpack.c.b16 %v3072, %v3064
        %v3793 = vpack.c.b16 %v3073, %v3065
        %v3794 = vpack.c.b16 %v3074, %v3066
        %v3795 = vpack.c.b16 %v3083, %v3075
        %v3796 = vpack.c.b16 %v3084, %v3076
        %v3797 = vpack.c.b16 %v3085, %v3077
        %v3798 = vpack.c.b16 %v3086, %v3078
        %v3799 = vpack.c.b16 %v3087, %v3079
        %v3800 = vpack.c.b16 %v3088, %v3080
        %v3801 = vpack.c.b16 %v3089, %v3081
        %v3802 = vpack.c.b16 %v3090, %v3082
        %v3803 = vpack.c.b16 %v3099, %v3091
        %v3804 = vpack.c.b16 %v3100, %v3092
        %v3805 = vpack.c.b16 %v3101, %v3093
        %v3806 = vpack.c.b16 %v3102, %v3094
        %v3807 = vpack.c.b16 %v3103, %v3095
        %v3808 = vpack.c.b16 %v3104, %v3096
        %v3809 = vpack.c.b16 %v3105, %v3097
        %v3810 = vpack.c.b16 %v3106, %v3098
        %v3811 = vpack.c.b16 %v3115, %v3107
        %v3812 = vpack.c.b16 %v3116, %v3108
        %v3813 = vpack.c.b16 %v3117, %v3109
        %v3814 = vpack.c.b16 %v3118, %v3110
        %v3815 = vpack.c.b16 %v3119, %v3111
        %v3816 = vpack.c.b16 %v3120, %v3112
        %v3817 = vpack.c.b16 %v3121, %v3113
        %v3818 = vpack.c.b16 %v3122, %v3114
        %v3819 = vpack.c.b16 %v3131, %v3123
        %v3820 = vpack.c.b16 %v3132, %v3124
        %v3821 = vpack.c.b16 %v3133, %v3125
        %v3822 = vpack.c.b16 %v3134, %v3126
        %v3823 = vpack.c.b16 %v3135, %v3127
        %v3824 = vpack.c.b16 %v3136, %v3128
        %v3825 = vpack.c.b16 %v3137, %v3129
        %v3826 = vpack.c.b16 %v3138, %v3130
        %v3827 = vpack.c.b16 %v3147, %v3139
        %v3828 = vpack.c.b16 %v3148, %v3140
        %v3829 = vpack.c.b16 %v3149, %v3141
        %v3830 = vpack.c.b16 %v3150, %v3142
        %v3831 = vpack.c.b16 %v3151, %v3143
        %v3832 = vpack.c.b16 %v3152, %v3144
        %v3833 = vpack.c.b16 %v3153, %v3145
        %v3834 = vpack.c.b16 %v3154, %v3146
        %v3835 = vpack.c.b16 %v3163, %v3155
        %v3836 = vpack.c.b16 %v3164, %v3156
        %v3837 = vpack.c.b16 %v3165, %v3157
        %v3838 = vpack.c.b16 %v3166, %v3158
        %v3839 = vpack.c.b16 %v3167, %v3159
        %v3840 = vpack.c.b16 %v3168, %v3160
        %v3841 = vpack.c.b16 %v3169, %v3161
        %v3842 = vpack.c.b16 %v3170, %v3162
        %v3843 = vpack.c.b16 %v3179, %v3171
        %v3844 = vpack.c.b16 %v3180, %v3172
        %v3845 = vpack.c.b16 %v3181, %v3173
        %v3846 = vpack.c.b16 %v3182, %v3174
        %v3847 = vpack.c.b16 %v3183, %v3175
        %v3848 = vpack.c.b16 %v3184, %v3176
        %v3849 = vpack.c.b16 %v3185, %v3177
        %v3850 = vpack.c.b16 %v3186, %v3178
        %v3851 = vpack.c.b16 %v3195, %v3187
        %v3852 = vpack.c.b16 %v3196, %v3188
        %v3853 = vpack.c.b16 %v3197, %v3189
        %v3854 = vpack.c.b16 %v3198, %v3190
        %v3855 = vpack.c.b16 %v3199, %v3191
        %v3856 = vpack.c.b16 %v3200, %v3192
        %v3857 = vpack.c.b16 %v3201, %v3193
        %v3858 = vpack.c.b16 %v3202, %v3194
        %v3859 = vpack.c.b16 %v3211, %v3203
        %v3860 = vpack.c.b16 %v3212, %v3204
        %v3861 = vpack.c.b16 %v3213, %v3205
        %v3862 = vpack.c.b16 %v3214, %v3206
        %v3863 = vpack.c.b16 %v3215, %v3207
        %v3864 = vpack.c.b16 %v3216, %v3208
        %v3865 = vpack.c.b16 %v3217, %v3209
        %v3866 = vpack.c.b16 %v3218, %v3210
        %v3867 = vpack.c.b16 %v3227, %v3219
        %v3868 = vpack.c.b16 %v3228, %v3220
        %v3869 = vpack.c.b16 %v3229, %v3221
        %v3870 = vpack.c.b16 %v3230, %v3222
        %v3871 = vpack.c.b16 %v3231, %v3223
        %v3872 = vpack.c.b16 %v3232, %v3224
        %v3873 = vpack.c.b16 %v3233, %v3225
        %v3874 = vpack.c.b16 %v3234, %v3226
        %v3875 = vpack.c.b16 %v3243, %v3235
        %v3876 = vpack.c.b16 %v3244, %v3236
        %v3877 = vpack.c.b16 %v3245, %v3237
        %v3878 = vpack.c.b16 %v3246, %v3238
        %v3879 = vpack.c.b16 %v3247, %v3239
        %v3880 = vpack.c.b16 %v3248, %v3240
        %v3881 = vpack.c.b16 %v3249, %v3241
        %v3882 = vpack.c.b16 %v3250, %v3242
        %v3883 = vpack.c.b16 %v3259, %v3251
        %v3884 = vpack.c.b16 %v3260, %v3252
        %v3885 = vpack.c.b16 %v3261, %v3253
        %v3886 = vpack.c.b16 %v3262, %v3254
        %v3887 = vpack.c.b16 %v3263, %v3255
        %v3888 = vpack.c.b16 %v3264, %v3256
        %v3889 = vpack.c.b16 %v3265, %v3257
        %v3890 = vpack.c.b16 %v3266, %v3258
        %v3891 = vpack.c.b16 %v3275, %v3267
        %v3892 = vpack.c.b16 %v3276, %v3268
        %v3893 = vpack.c.b16 %v3277, %v3269
        %v3894 = vpack.c.b16 %v3278, %v3270
        %v3895 = vpack.c.b16 %v3279, %v3271
        %v3896 = vpack.c.b16 %v3280, %v3272
        %v3897 = vpack.c.b16 %v3281, %v3273
        %v3898 = vpack.c.b16 %v3282, %v3274
        %v3899 = vpack.c.b16 %v3291, %v3283
        %v3900 = vpack.c.b16 %v3292, %v3284
        %v3901 = vpack.c.b16 %v3293, %v3285
        %v3902 = vpack.c.b16 %v3294, %v3286
        %v3903 = vpack.c.b16 %v3295, %v3287
        %v3904 = vpack.c.b16 %v3296, %v3288
        %v3905 = vpack.c.b16 %v3297, %v3289
        %v3906 = vpack.c.b16 %v3298, %v3290
        %v3907 = vpack.c.b16 %v3307, %v3299
        %v3908 = vpack.c.b16 %v3308, %v3300
        %v3909 = vpack.c.b16 %v3309, %v3301
        %v3910 = vpack.c.b16 %v3310, %v3302
        %v3911 = vpack.c.b16 %v3311, %v3303
        %v3912 = vpack.c.b16 %v3312, %v3304
        %v3913 = vpack.c.b16 %v3313, %v3305
        %v3914 = vpack.c.b16 %v3314, %v3306
        %v3915 = vpack.c.b16 %v3323, %v3315
        %v3916 = vpack.c.b16 %v3324, %v3316
        %v3917 = vpack.c.b16 %v3325, %v3317
        %v3918 = vpack.c.b16 %v3326, %v3318
        %v3919 = vpack.c.b16 %v3327, %v3319
        %v3920 = vpack.c.b16 %v3328, %v3320
        %v3921 = vpack.c.b16 %v3329, %v3321
        %v3922 = vpack.c.b16 %v3330, %v3322
        %v3923 = vpack.c.b16 %v3339, %v3331
        %v3924 = vpack.c.b16 %v3340, %v3332
        %v3925 = vpack.c.b16 %v3341, %v3333
        %v3926 = vpack.c.b16 %v3342, %v3334
        %v3927 = vpack.c.b16 %v3343, %v3335
        %v3928 = vpack.c.b16 %v3344, %v3336
        %v3929 = vpack.c.b16 %v3345, %v3337
        %v3930 = vpack.c.b16 %v3346, %v3338
        %v3931 = vpack.c.b16 %v3355, %v3347
        %v3932 = vpack.c.b16 %v3356, %v3348
        %v3933 = vpack.c.b16 %v3357, %v3349
        %v3934 = vpack.c.b16 %v3358, %v3350
        %v3935 = vpack.c.b16 %v3359, %v3351
        %v3936 = vpack.c.b16 %v3360, %v3352
        %v3937 = vpack.c.b16 %v3361, %v3353
        %v3938 = vpack.c.b16 %v3362, %v3354
        %v3939 = vpack.c.b16 %v3371, %v3363
        %v3940 = vpack.c.b16 %v3372, %v3364
        %v3941 = vpack.c.b16 %v3373, %v3365
        %v3942 = vpack.c.b16 %v3374, %v3366
        %v3943 = vpack.c.b16 %v3375, %v3367
        %v3944 = vpack.c.b16 %v3376, %v3368
        %v3945 = vpack.c.b16 %v3377, %v3369
        %v3946 = vpack.c.b16 %v3378, %v3370
        %v3947 = vpack.c.b16 %v3387, %v3379
        %v3948 = vpack.c.b16 %v3388, %v3380
        %v3949 = vpack.c.b16 %v3389, %v3381
        %v3950 = vpack.c.b16 %v3390, %v3382
        %v3951 = vpack.c.b16 %v3391, %v3383
        %v3952 = vpack.c.b16 %v3392, %v3384
        %v3953 = vpack.c.b16 %v3393, %v3385
        %v3954 = vpack.c.b16 %v3394, %v3386
        %v3955 = vpack.c.b16 %v3403, %v3395
        %v3956 = vpack.c.b16 %v3404, %v3396
        %v3957 = vpack.c.b16 %v3405, %v3397
        %v3958 = vpack.c.b16 %v3406, %v3398
        %v3959 = vpack.c.b16 %v3407, %v3399
        %v3960 = vpack.c.b16 %v3408, %v3400
        %v3961 = vpack.c.b16 %v3409, %v3401
        %v3962 = vpack.c.b16 %v3410, %v3402
        %v3963 = vpack.c.b16 %v3419, %v3411
        %v3964 = vpack.c.b16 %v3420, %v3412
        %v3965 = vpack.c.b16 %v3421, %v3413
        %v3966 = vpack.c.b16 %v3422, %v3414
        %v3967 = vpack.c.b16 %v3423, %v3415
        %v3968 = vpack.c.b16 %v3424, %v3416
        %v3969 = vpack.c.b16 %v3425, %v3417
        %v3970 = vpack.c.b16 %v3426, %v3418
        %v3971 = vpack.c.b16 %v3435, %v3427
        %v3972 = vpack.c.b16 %v3436, %v3428
        %v3973 = vpack.c.b16 %v3437, %v3429
        %v3974 = vpack.c.b16 %v3438, %v3430
        %v3975 = vpack.c.b16 %v3439, %v3431
        %v3976 = vpack.c.b16 %v3440, %v3432
        %v3977 = vpack.c.b16 %v3441, %v3433
        %v3978 = vpack.c.b16 %v3442, %v3434
        %v3979 = vpack.c.b16 %v3451, %v3443
        %v3980 = vpack.c.b16 %v3452, %v3444
        %v3981 = vpack.c.b16 %v3453, %v3445
        %v3982 = vpack.c.b16 %v3454, %v3446
        %v3983 = vpack.c.b16 %v3455, %v3447
        %v3984 = vpack.c.b16 %v3456, %v3448
        %v3985 = vpack.c.b16 %v3457, %v3449
        %v3986 = vpack.c.b16 %v3458, %v3450
        %v3987 = vpack.c.b16 %v3467, %v3459
        %v3988 = vpack.c.b16 %v3468, %v3460
        %v3989 = vpack.c.b16 %v3469, %v3461
        %v3990 = vpack.c.b16 %v3470, %v3462
        %v3991 = vpack.c.b16 %v3471, %v3463
        %v3992 = vpack.c.b16 %v3472, %v3464
        %v3993 = vpack.c.b16 %v3473, %v3465
        %v3994 = vpack.c.b16 %v3474, %v3466
        %v3995 = vpack.c.b16 %v3483, %v3475
        %v3996 = vpack.c.b16 %v3484, %v3476
        %v3997 = vpack.c.b16 %v3485, %v3477
        %v3998 = vpack.c.b16 %v3486, %v3478
        %v3999 = vpack.c.b16 %v3487, %v3479
        %v4000 = vpack.c.b16 %v3488, %v3480
        %v4001 = vpack.c.b16 %v3489, %v3481
        %v4002 = vpack.c.b16 %v3490, %v3482
        %4515 = vmatprep.subr.bf16.mxu0 %v3548
        %4516 = vmatpush1.bf16.msra.mxu0 %v3547
        %4517 = vmatprep.subr.bf16.mxu0 %v3540
        %4518 = vmatpush1.bf16.msra.mxu0 %v3539
        %4519 = vmatprep.subr.bf16.mxu0 %v3532
        %4520 = vmatpush1.bf16.msra.mxu0 %v3531
        %4521 = vmatprep.subr.bf16.mxu0 %v3524
        %4522 = vmatpush1.bf16.msra.mxu0 %v3523
        %4523 = vmatprep.subr.bf16.mxu0 %v3516
        %4524 = vmatpush1.bf16.msra.mxu0 %v3515
        %4525 = vmatprep.subr.bf16.mxu0 %v3508
        %4526 = vmatpush1.bf16.msra.mxu0 %v3507
        %4527 = vmatprep.subr.bf16.mxu0 %v3500
        %4528 = vmatpush1.bf16.msra.mxu0 %v3499
        %4529 = vmatprep.subr.bf16.mxu0 %v3492
        %4530 = vmatpush1.bf16.msra.mxu0 %v3491
        %4531 = vmatprep.subr.bf16.mxu0 %v3612
        %4532 = vmatpush2.bf16.msra.mxu0 %v3611
        %4533 = vmatprep.subr.bf16.mxu0 %v3604
        %4534 = vmatpush2.bf16.msra.mxu0 %v3603
        %4535 = vmatprep.subr.bf16.mxu0 %v3596
        %4536 = vmatpush2.bf16.msra.mxu0 %v3595
        %4537 = vmatprep.subr.bf16.mxu0 %v3588
        %4538 = vmatpush2.bf16.msra.mxu0 %v3587
        %4539 = vmatprep.subr.bf16.mxu0 %v3580
        %4540 = vmatpush2.bf16.msra.mxu0 %v3579
        %4541 = vmatprep.subr.bf16.mxu0 %v3572
        %4542 = vmatpush2.bf16.msra.mxu0 %v3571
        %4543 = vmatprep.subr.bf16.mxu0 %v3564
        %4544 = vmatpush2.bf16.msra.mxu0 %v3563
        %4545 = vmatprep.subr.bf16.mxu0 %v3556
        %4546 = vmatpush2.bf16.msra.mxu0 %v3555
        %4547 = vmatprep.mubr.bf16.mxu0 %v1935
        %4548 = vmatmul.mubr.bf16.gmra.mxu0 %v1921
        %v4549 = vpop.f32.mrf.mxu0
        %v4550 = vadd.f32 %v1860, %v4549
        %v4551 = vpop.f32.mrf.mxu0
        %v4552 = vadd.f32 %v1864, %v4551
        %v4553 = vpop.f32.mrf.mxu0
        %v4554 = vpop.f32.mrf.mxu0
        %4555 = vdwg.mxu0
        %4556 = vmatprep.subr.bf16.mxu0 %v3676
        %4557 = vmatpush1.bf16.msra.mxu0 %v3675
        %4558 = vmatprep.subr.bf16.mxu0 %v3668
        %4559 = vmatpush1.bf16.msra.mxu0 %v3667
        %4560 = vmatprep.subr.bf16.mxu0 %v3660
        %4561 = vmatpush1.bf16.msra.mxu0 %v3659
        %4562 = vmatprep.subr.bf16.mxu0 %v3652
        %4563 = vmatpush1.bf16.msra.mxu0 %v3651
        %4564 = vmatprep.subr.bf16.mxu0 %v3644
        %4565 = vmatpush1.bf16.msra.mxu0 %v3643
        %4566 = vmatprep.subr.bf16.mxu0 %v3636
        %4567 = vmatpush1.bf16.msra.mxu0 %v3635
        %4568 = vmatprep.subr.bf16.mxu0 %v3628
        %4569 = vmatpush1.bf16.msra.mxu0 %v3627
        %4570 = vmatprep.subr.bf16.mxu0 %v3620
        %4571 = vmatpush1.bf16.msra.mxu0 %v3619
        %4572 = vmatprep.subr.bf16.mxu0 %v3740
        %4573 = vmatpush2.bf16.msra.mxu0 %v3739
        %4574 = vmatprep.subr.bf16.mxu0 %v3732
        %4575 = vmatpush2.bf16.msra.mxu0 %v3731
        %4576 = vmatprep.subr.bf16.mxu0 %v3724
        %4577 = vmatpush2.bf16.msra.mxu0 %v3723
        %4578 = vmatprep.subr.bf16.mxu0 %v3716
        %4579 = vmatpush2.bf16.msra.mxu0 %v3715
        %4580 = vmatprep.subr.bf16.mxu0 %v3708
        %4581 = vmatpush2.bf16.msra.mxu0 %v3707
        %4582 = vmatprep.subr.bf16.mxu0 %v3700
        %4583 = vmatpush2.bf16.msra.mxu0 %v3699
        %4584 = vmatprep.subr.bf16.mxu0 %v3692
        %4585 = vmatpush2.bf16.msra.mxu0 %v3691
        %4586 = vmatprep.subr.bf16.mxu0 %v3684
        %4587 = vmatpush2.bf16.msra.mxu0 %v3683
        %4588 = vmatprep.mubr.bf16.mxu0 %v1945
        %4589 = vmatmul.mubr.bf16.gmra.mxu0 %v1943
        %v4590 = vpop.f32.mrf.mxu0
        %v4591 = vadd.f32 %v4550, %v4590
        %v4592 = vpop.f32.mrf.mxu0
        %v4593 = vadd.f32 %v4552, %v4592
        %v4594 = vpop.f32.mrf.mxu0
        %v4595 = vpop.f32.mrf.mxu0
        %4596 = vdwg.mxu0
        %4597 = vmatprep.subr.bf16.mxu0 %v3804
        %4598 = vmatpush1.bf16.msra.mxu0 %v3803
        %4599 = vmatprep.subr.bf16.mxu0 %v3796
        %4600 = vmatpush1.bf16.msra.mxu0 %v3795
        %4601 = vmatprep.subr.bf16.mxu0 %v3788
        %4602 = vmatpush1.bf16.msra.mxu0 %v3787
        %4603 = vmatprep.subr.bf16.mxu0 %v3780
        %4604 = vmatpush1.bf16.msra.mxu0 %v3779
        %4605 = vmatprep.subr.bf16.mxu0 %v3772
        %4606 = vmatpush1.bf16.msra.mxu0 %v3771
        %4607 = vmatprep.subr.bf16.mxu0 %v3764
        %4608 = vmatpush1.bf16.msra.mxu0 %v3763
        %4609 = vmatprep.subr.bf16.mxu0 %v3756
        %4610 = vmatpush1.bf16.msra.mxu0 %v3755
        %4611 = vmatprep.subr.bf16.mxu0 %v3748
        %4612 = vmatpush1.bf16.msra.mxu0 %v3747
        %4613 = vmatprep.subr.bf16.mxu0 %v3868
        %4614 = vmatpush2.bf16.msra.mxu0 %v3867
        %4615 = vmatprep.subr.bf16.mxu0 %v3860
        %4616 = vmatpush2.bf16.msra.mxu0 %v3859
        %4617 = vmatprep.subr.bf16.mxu0 %v3852
        %4618 = vmatpush2.bf16.msra.mxu0 %v3851
        %4619 = vmatprep.subr.bf16.mxu0 %v3844
        %4620 = vmatpush2.bf16.msra.mxu0 %v3843
        %4621 = vmatprep.subr.bf16.mxu0 %v3836
        %4622 = vmatpush2.bf16.msra.mxu0 %v3835
        %4623 = vmatprep.subr.bf16.mxu0 %v3828
        %4624 = vmatpush2.bf16.msra.mxu0 %v3827
        %4625 = vmatprep.subr.bf16.mxu0 %v3820
        %4626 = vmatpush2.bf16.msra.mxu0 %v3819
        %4627 = vmatprep.subr.bf16.mxu0 %v3812
        %4628 = vmatpush2.bf16.msra.mxu0 %v3811
        %4629 = vmatprep.mubr.bf16.mxu0 %v1942
        %4630 = vmatmul.mubr.bf16.gmra.mxu0 %v1928
        %v4631 = vpop.f32.mrf.mxu0
        %v4632 = vadd.f32 %v4591, %v4631
        %v4633 = vpop.f32.mrf.mxu0
        %v4634 = vadd.f32 %v4593, %v4633
        %v4635 = vpop.f32.mrf.mxu0
        %v4636 = vpop.f32.mrf.mxu0
        %4637 = vdwg.mxu0
        %4638 = vmatprep.subr.bf16.mxu0 %v3932
        %4639 = vmatpush1.bf16.msra.mxu0 %v3931
        %4640 = vmatprep.subr.bf16.mxu0 %v3924
        %4641 = vmatpush1.bf16.msra.mxu0 %v3923
        %4642 = vmatprep.subr.bf16.mxu0 %v3916
        %4643 = vmatpush1.bf16.msra.mxu0 %v3915
        %4644 = vmatprep.subr.bf16.mxu0 %v3908
        %4645 = vmatpush1.bf16.msra.mxu0 %v3907
        %4646 = vmatprep.subr.bf16.mxu0 %v3900
        %4647 = vmatpush1.bf16.msra.mxu0 %v3899
        %4648 = vmatprep.subr.bf16.mxu0 %v3892
        %4649 = vmatpush1.bf16.msra.mxu0 %v3891
        %4650 = vmatprep.subr.bf16.mxu0 %v3884
        %4651 = vmatpush1.bf16.msra.mxu0 %v3883
        %4652 = vmatprep.subr.bf16.mxu0 %v3876
        %4653 = vmatpush1.bf16.msra.mxu0 %v3875
        %4654 = vmatprep.subr.bf16.mxu0 %v3996
        %4655 = vmatpush2.bf16.msra.mxu0 %v3995
        %4656 = vmatprep.subr.bf16.mxu0 %v3988
        %4657 = vmatpush2.bf16.msra.mxu0 %v3987
        %4658 = vmatprep.subr.bf16.mxu0 %v3980
        %4659 = vmatpush2.bf16.msra.mxu0 %v3979
        %4660 = vmatprep.subr.bf16.mxu0 %v3972
        %4661 = vmatpush2.bf16.msra.mxu0 %v3971
        %4662 = vmatprep.subr.bf16.mxu0 %v3964
        %4663 = vmatpush2.bf16.msra.mxu0 %v3963
        %4664 = vmatprep.subr.bf16.mxu0 %v3956
        %4665 = vmatpush2.bf16.msra.mxu0 %v3955
        %4666 = vmatprep.subr.bf16.mxu0 %v3948
        %4667 = vmatpush2.bf16.msra.mxu0 %v3947
        %4668 = vmatprep.subr.bf16.mxu0 %v3940
        %4669 = vmatpush2.bf16.msra.mxu0 %v3939
        %4670 = vmatprep.mubr.bf16.mxu0 %v1946
        %4671 = vmatmul.mubr.bf16.gmra.mxu0 %v1944
        %v4672 = vpop.f32.mrf.mxu0
        %v4673 = vadd.f32 %v4632, %v4672
        %v4674 = vpop.f32.mrf.mxu0
        %v4675 = vadd.f32 %v4634, %v4674
        %v4676 = vpop.f32.mrf.mxu0
        %v4677 = vpop.f32.mrf.mxu0
        %4678 = vdwg.mxu0
        %4679 = vmatprep.subr.bf16.mxu0 %v3550
        %4680 = vmatpush1.bf16.msra.mxu0 %v3549
        %4681 = vmatprep.subr.bf16.mxu0 %v3542
        %4682 = vmatpush1.bf16.msra.mxu0 %v3541
        %4683 = vmatprep.subr.bf16.mxu0 %v3534
        %4684 = vmatpush1.bf16.msra.mxu0 %v3533
        %4685 = vmatprep.subr.bf16.mxu0 %v3526
        %4686 = vmatpush1.bf16.msra.mxu0 %v3525
        %4687 = vmatprep.subr.bf16.mxu0 %v3518
        %4688 = vmatpush1.bf16.msra.mxu0 %v3517
        %4689 = vmatprep.subr.bf16.mxu0 %v3510
        %4690 = vmatpush1.bf16.msra.mxu0 %v3509
        %4691 = vmatprep.subr.bf16.mxu0 %v3502
        %4692 = vmatpush1.bf16.msra.mxu0 %v3501
        %4693 = vmatprep.subr.bf16.mxu0 %v3494
        %4694 = vmatpush1.bf16.msra.mxu0 %v3493
        %4695 = vmatprep.subr.bf16.mxu0 %v3614
        %4696 = vmatpush2.bf16.msra.mxu0 %v3613
        %4697 = vmatprep.subr.bf16.mxu0 %v3606
        %4698 = vmatpush2.bf16.msra.mxu0 %v3605
        %4699 = vmatprep.subr.bf16.mxu0 %v3598
        %4700 = vmatpush2.bf16.msra.mxu0 %v3597
        %4701 = vmatprep.subr.bf16.mxu0 %v3590
        %4702 = vmatpush2.bf16.msra.mxu0 %v3589
        %4703 = vmatprep.subr.bf16.mxu0 %v3582
        %4704 = vmatpush2.bf16.msra.mxu0 %v3581
        %4705 = vmatprep.subr.bf16.mxu0 %v3574
        %4706 = vmatpush2.bf16.msra.mxu0 %v3573
        %4707 = vmatprep.subr.bf16.mxu0 %v3566
        %4708 = vmatpush2.bf16.msra.mxu0 %v3565
        %4709 = vmatprep.subr.bf16.mxu0 %v3558
        %4710 = vmatpush2.bf16.msra.mxu0 %v3557
        %4711 = vmatprep.mubr.bf16.mxu0 %v1935
        %4712 = vmatmul.mubr.bf16.gmra.mxu0 %v1921
        %v4713 = vpop.f32.mrf.mxu0
        %v4714 = vadd.f32 %v1868, %v4713
        %v4715 = vpop.f32.mrf.mxu0
        %v4716 = vadd.f32 %v1872, %v4715
        %v4717 = vpop.f32.mrf.mxu0
        %v4718 = vpop.f32.mrf.mxu0
        %4719 = vdwg.mxu0
        %4720 = vmatprep.subr.bf16.mxu0 %v3678
        %4721 = vmatpush1.bf16.msra.mxu0 %v3677
        %4722 = vmatprep.subr.bf16.mxu0 %v3670
        %4723 = vmatpush1.bf16.msra.mxu0 %v3669
        %4724 = vmatprep.subr.bf16.mxu0 %v3662
        %4725 = vmatpush1.bf16.msra.mxu0 %v3661
        %4726 = vmatprep.subr.bf16.mxu0 %v3654
        %4727 = vmatpush1.bf16.msra.mxu0 %v3653
        %4728 = vmatprep.subr.bf16.mxu0 %v3646
        %4729 = vmatpush1.bf16.msra.mxu0 %v3645
        %4730 = vmatprep.subr.bf16.mxu0 %v3638
        %4731 = vmatpush1.bf16.msra.mxu0 %v3637
        %4732 = vmatprep.subr.bf16.mxu0 %v3630
        %4733 = vmatpush1.bf16.msra.mxu0 %v3629
        %4734 = vmatprep.subr.bf16.mxu0 %v3622
        %4735 = vmatpush1.bf16.msra.mxu0 %v3621
        %4736 = vmatprep.subr.bf16.mxu0 %v3742
        %4737 = vmatpush2.bf16.msra.mxu0 %v3741
        %4738 = vmatprep.subr.bf16.mxu0 %v3734
        %4739 = vmatpush2.bf16.msra.mxu0 %v3733
        %4740 = vmatprep.subr.bf16.mxu0 %v3726
        %4741 = vmatpush2.bf16.msra.mxu0 %v3725
        %4742 = vmatprep.subr.bf16.mxu0 %v3718
        %4743 = vmatpush2.bf16.msra.mxu0 %v3717
        %4744 = vmatprep.subr.bf16.mxu0 %v3710
        %4745 = vmatpush2.bf16.msra.mxu0 %v3709
        %4746 = vmatprep.subr.bf16.mxu0 %v3702
        %4747 = vmatpush2.bf16.msra.mxu0 %v3701
        %4748 = vmatprep.subr.bf16.mxu0 %v3694
        %4749 = vmatpush2.bf16.msra.mxu0 %v3693
        %4750 = vmatprep.subr.bf16.mxu0 %v3686
        %4751 = vmatpush2.bf16.msra.mxu0 %v3685
        %4752 = vmatprep.mubr.bf16.mxu0 %v1945
        %4753 = vmatmul.mubr.bf16.gmra.mxu0 %v1943
        %v4754 = vpop.f32.mrf.mxu0
        %v4755 = vadd.f32 %v4714, %v4754
        %v4756 = vpop.f32.mrf.mxu0
        %v4757 = vadd.f32 %v4716, %v4756
        %v4758 = vpop.f32.mrf.mxu0
        %v4759 = vpop.f32.mrf.mxu0
        %4760 = vdwg.mxu0
        %4761 = vmatprep.subr.bf16.mxu0 %v3806
        %4762 = vmatpush1.bf16.msra.mxu0 %v3805
        %4763 = vmatprep.subr.bf16.mxu0 %v3798
        %4764 = vmatpush1.bf16.msra.mxu0 %v3797
        %4765 = vmatprep.subr.bf16.mxu0 %v3790
        %4766 = vmatpush1.bf16.msra.mxu0 %v3789
        %4767 = vmatprep.subr.bf16.mxu0 %v3782
        %4768 = vmatpush1.bf16.msra.mxu0 %v3781
        %4769 = vmatprep.subr.bf16.mxu0 %v3774
        %4770 = vmatpush1.bf16.msra.mxu0 %v3773
        %4771 = vmatprep.subr.bf16.mxu0 %v3766
        %4772 = vmatpush1.bf16.msra.mxu0 %v3765
        %4773 = vmatprep.subr.bf16.mxu0 %v3758
        %4774 = vmatpush1.bf16.msra.mxu0 %v3757
        %4775 = vmatprep.subr.bf16.mxu0 %v3750
        %4776 = vmatpush1.bf16.msra.mxu0 %v3749
        %4777 = vmatprep.subr.bf16.mxu0 %v3870
        %4778 = vmatpush2.bf16.msra.mxu0 %v3869
        %4779 = vmatprep.subr.bf16.mxu0 %v3862
        %4780 = vmatpush2.bf16.msra.mxu0 %v3861
        %4781 = vmatprep.subr.bf16.mxu0 %v3854
        %4782 = vmatpush2.bf16.msra.mxu0 %v3853
        %4783 = vmatprep.subr.bf16.mxu0 %v3846
        %4784 = vmatpush2.bf16.msra.mxu0 %v3845
        %4785 = vmatprep.subr.bf16.mxu0 %v3838
        %4786 = vmatpush2.bf16.msra.mxu0 %v3837
        %4787 = vmatprep.subr.bf16.mxu0 %v3830
        %4788 = vmatpush2.bf16.msra.mxu0 %v3829
        %4789 = vmatprep.subr.bf16.mxu0 %v3822
        %4790 = vmatpush2.bf16.msra.mxu0 %v3821
        %4791 = vmatprep.subr.bf16.mxu0 %v3814
        %4792 = vmatpush2.bf16.msra.mxu0 %v3813
        %4793 = vmatprep.mubr.bf16.mxu0 %v1942
        %4794 = vmatmul.mubr.bf16.gmra.mxu0 %v1928
        %v4795 = vpop.f32.mrf.mxu0
        %v4796 = vadd.f32 %v4755, %v4795
        %v4797 = vpop.f32.mrf.mxu0
        %v4798 = vadd.f32 %v4757, %v4797
        %v4799 = vpop.f32.mrf.mxu0
        %v4800 = vpop.f32.mrf.mxu0
        %4801 = vdwg.mxu0
        %4802 = vmatprep.subr.bf16.mxu0 %v3934
        %4803 = vmatpush1.bf16.msra.mxu0 %v3933
        %4804 = vmatprep.subr.bf16.mxu0 %v3926
        %4805 = vmatpush1.bf16.msra.mxu0 %v3925
        %4806 = vmatprep.subr.bf16.mxu0 %v3918
        %4807 = vmatpush1.bf16.msra.mxu0 %v3917
        %4808 = vmatprep.subr.bf16.mxu0 %v3910
        %4809 = vmatpush1.bf16.msra.mxu0 %v3909
        %4810 = vmatprep.subr.bf16.mxu0 %v3902
        %4811 = vmatpush1.bf16.msra.mxu0 %v3901
        %4812 = vmatprep.subr.bf16.mxu0 %v3894
        %4813 = vmatpush1.bf16.msra.mxu0 %v3893
        %4814 = vmatprep.subr.bf16.mxu0 %v3886
        %4815 = vmatpush1.bf16.msra.mxu0 %v3885
        %4816 = vmatprep.subr.bf16.mxu0 %v3878
        %4817 = vmatpush1.bf16.msra.mxu0 %v3877
        %4818 = vmatprep.subr.bf16.mxu0 %v3998
        %4819 = vmatpush2.bf16.msra.mxu0 %v3997
        %4820 = vmatprep.subr.bf16.mxu0 %v3990
        %4821 = vmatpush2.bf16.msra.mxu0 %v3989
        %4822 = vmatprep.subr.bf16.mxu0 %v3982
        %4823 = vmatpush2.bf16.msra.mxu0 %v3981
        %4824 = vmatprep.subr.bf16.mxu0 %v3974
        %4825 = vmatpush2.bf16.msra.mxu0 %v3973
        %4826 = vmatprep.subr.bf16.mxu0 %v3966
        %4827 = vmatpush2.bf16.msra.mxu0 %v3965
        %4828 = vmatprep.subr.bf16.mxu0 %v3958
        %4829 = vmatpush2.bf16.msra.mxu0 %v3957
        %4830 = vmatprep.subr.bf16.mxu0 %v3950
        %4831 = vmatpush2.bf16.msra.mxu0 %v3949
        %4832 = vmatprep.subr.bf16.mxu0 %v3942
        %4833 = vmatpush2.bf16.msra.mxu0 %v3941
        %4834 = vmatprep.mubr.bf16.mxu0 %v1946
        %4835 = vmatmul.mubr.bf16.gmra.mxu0 %v1944
        %v4836 = vpop.f32.mrf.mxu0
        %v4837 = vadd.f32 %v4796, %v4836
        %v4838 = vpop.f32.mrf.mxu0
        %v4839 = vadd.f32 %v4798, %v4838
        %v4840 = vpop.f32.mrf.mxu0
        %v4841 = vpop.f32.mrf.mxu0
        %4842 = vdwg.mxu0
        %4843 = vmatprep.subr.bf16.mxu0 %v3552
        %4844 = vmatpush1.bf16.msra.mxu0 %v3551
        %4845 = vmatprep.subr.bf16.mxu0 %v3544
        %4846 = vmatpush1.bf16.msra.mxu0 %v3543
        %4847 = vmatprep.subr.bf16.mxu0 %v3536
        %4848 = vmatpush1.bf16.msra.mxu0 %v3535
        %4849 = vmatprep.subr.bf16.mxu0 %v3528
        %4850 = vmatpush1.bf16.msra.mxu0 %v3527
        %4851 = vmatprep.subr.bf16.mxu0 %v3520
        %4852 = vmatpush1.bf16.msra.mxu0 %v3519
        %4853 = vmatprep.subr.bf16.mxu0 %v3512
        %4854 = vmatpush1.bf16.msra.mxu0 %v3511
        %4855 = vmatprep.subr.bf16.mxu0 %v3504
        %4856 = vmatpush1.bf16.msra.mxu0 %v3503
        %4857 = vmatprep.subr.bf16.mxu0 %v3496
        %4858 = vmatpush1.bf16.msra.mxu0 %v3495
        %4859 = vmatprep.subr.bf16.mxu0 %v3616
        %4860 = vmatpush2.bf16.msra.mxu0 %v3615
        %4861 = vmatprep.subr.bf16.mxu0 %v3608
        %4862 = vmatpush2.bf16.msra.mxu0 %v3607
        %4863 = vmatprep.subr.bf16.mxu0 %v3600
        %4864 = vmatpush2.bf16.msra.mxu0 %v3599
        %4865 = vmatprep.subr.bf16.mxu0 %v3592
        %4866 = vmatpush2.bf16.msra.mxu0 %v3591
        %4867 = vmatprep.subr.bf16.mxu0 %v3584
        %4868 = vmatpush2.bf16.msra.mxu0 %v3583
        %4869 = vmatprep.subr.bf16.mxu0 %v3576
        %4870 = vmatpush2.bf16.msra.mxu0 %v3575
        %4871 = vmatprep.subr.bf16.mxu0 %v3568
        %4872 = vmatpush2.bf16.msra.mxu0 %v3567
        %4873 = vmatprep.subr.bf16.mxu0 %v3560
        %4874 = vmatpush2.bf16.msra.mxu0 %v3559
        %4875 = vmatprep.mubr.bf16.mxu0 %v1935
        %4876 = vmatmul.mubr.bf16.gmra.mxu0 %v1921
        %v4877 = vpop.f32.mrf.mxu0
        %v4878 = vadd.f32 %v1876, %v4877
        %v4879 = vpop.f32.mrf.mxu0
        %v4880 = vadd.f32 %v1880, %v4879
        %v4881 = vpop.f32.mrf.mxu0
        %v4882 = vpop.f32.mrf.mxu0
        %4883 = vdwg.mxu0
        %4884 = vmatprep.subr.bf16.mxu0 %v3680
        %4885 = vmatpush1.bf16.msra.mxu0 %v3679
        %4886 = vmatprep.subr.bf16.mxu0 %v3672
        %4887 = vmatpush1.bf16.msra.mxu0 %v3671
        %4888 = vmatprep.subr.bf16.mxu0 %v3664
        %4889 = vmatpush1.bf16.msra.mxu0 %v3663
        %4890 = vmatprep.subr.bf16.mxu0 %v3656
        %4891 = vmatpush1.bf16.msra.mxu0 %v3655
        %4892 = vmatprep.subr.bf16.mxu0 %v3648
        %4893 = vmatpush1.bf16.msra.mxu0 %v3647
        %4894 = vmatprep.subr.bf16.mxu0 %v3640
        %4895 = vmatpush1.bf16.msra.mxu0 %v3639
        %4896 = vmatprep.subr.bf16.mxu0 %v3632
        %4897 = vmatpush1.bf16.msra.mxu0 %v3631
        %4898 = vmatprep.subr.bf16.mxu0 %v3624
        %4899 = vmatpush1.bf16.msra.mxu0 %v3623
        %4900 = vmatprep.subr.bf16.mxu0 %v3744
        %4901 = vmatpush2.bf16.msra.mxu0 %v3743
        %4902 = vmatprep.subr.bf16.mxu0 %v3736
        %4903 = vmatpush2.bf16.msra.mxu0 %v3735
        %4904 = vmatprep.subr.bf16.mxu0 %v3728
        %4905 = vmatpush2.bf16.msra.mxu0 %v3727
        %4906 = vmatprep.subr.bf16.mxu0 %v3720
        %4907 = vmatpush2.bf16.msra.mxu0 %v3719
        %4908 = vmatprep.subr.bf16.mxu0 %v3712
        %4909 = vmatpush2.bf16.msra.mxu0 %v3711
        %4910 = vmatprep.subr.bf16.mxu0 %v3704
        %4911 = vmatpush2.bf16.msra.mxu0 %v3703
        %4912 = vmatprep.subr.bf16.mxu0 %v3696
        %4913 = vmatpush2.bf16.msra.mxu0 %v3695
        %4914 = vmatprep.subr.bf16.mxu0 %v3688
        %4915 = vmatpush2.bf16.msra.mxu0 %v3687
        %4916 = vmatprep.mubr.bf16.mxu0 %v1945
        %4917 = vmatmul.mubr.bf16.gmra.mxu0 %v1943
        %v4918 = vpop.f32.mrf.mxu0
        %v4919 = vadd.f32 %v4878, %v4918
        %v4920 = vpop.f32.mrf.mxu0
        %v4921 = vadd.f32 %v4880, %v4920
        %v4922 = vpop.f32.mrf.mxu0
        %v4923 = vpop.f32.mrf.mxu0
        %4924 = vdwg.mxu0
        %4925 = vmatprep.subr.bf16.mxu0 %v3808
        %4926 = vmatpush1.bf16.msra.mxu0 %v3807
        %4927 = vmatprep.subr.bf16.mxu0 %v3800
        %4928 = vmatpush1.bf16.msra.mxu0 %v3799
        %4929 = vmatprep.subr.bf16.mxu0 %v3792
        %4930 = vmatpush1.bf16.msra.mxu0 %v3791
        %4931 = vmatprep.subr.bf16.mxu0 %v3784
        %4932 = vmatpush1.bf16.msra.mxu0 %v3783
        %4933 = vmatprep.subr.bf16.mxu0 %v3776
        %4934 = vmatpush1.bf16.msra.mxu0 %v3775
        %4935 = vmatprep.subr.bf16.mxu0 %v3768
        %4936 = vmatpush1.bf16.msra.mxu0 %v3767
        %4937 = vmatprep.subr.bf16.mxu0 %v3760
        %4938 = vmatpush1.bf16.msra.mxu0 %v3759
        %4939 = vmatprep.subr.bf16.mxu0 %v3752
        %4940 = vmatpush1.bf16.msra.mxu0 %v3751
        %4941 = vmatprep.subr.bf16.mxu0 %v3872
        %4942 = vmatpush2.bf16.msra.mxu0 %v3871
        %4943 = vmatprep.subr.bf16.mxu0 %v3864
        %4944 = vmatpush2.bf16.msra.mxu0 %v3863
        %4945 = vmatprep.subr.bf16.mxu0 %v3856
        %4946 = vmatpush2.bf16.msra.mxu0 %v3855
        %4947 = vmatprep.subr.bf16.mxu0 %v3848
        %4948 = vmatpush2.bf16.msra.mxu0 %v3847
        %4949 = vmatprep.subr.bf16.mxu0 %v3840
        %4950 = vmatpush2.bf16.msra.mxu0 %v3839
        %4951 = vmatprep.subr.bf16.mxu0 %v3832
        %4952 = vmatpush2.bf16.msra.mxu0 %v3831
        %4953 = vmatprep.subr.bf16.mxu0 %v3824
        %4954 = vmatpush2.bf16.msra.mxu0 %v3823
        %4955 = vmatprep.subr.bf16.mxu0 %v3816
        %4956 = vmatpush2.bf16.msra.mxu0 %v3815
        %4957 = vmatprep.mubr.bf16.mxu0 %v1942
        %4958 = vmatmul.mubr.bf16.gmra.mxu0 %v1928
        %v4959 = vpop.f32.mrf.mxu0
        %v4960 = vadd.f32 %v4919, %v4959
        %v4961 = vpop.f32.mrf.mxu0
        %v4962 = vadd.f32 %v4921, %v4961
        %v4963 = vpop.f32.mrf.mxu0
        %v4964 = vpop.f32.mrf.mxu0
        %4965 = vdwg.mxu0
        %4966 = vmatprep.subr.bf16.mxu0 %v3936
        %4967 = vmatpush1.bf16.msra.mxu0 %v3935
        %4968 = vmatprep.subr.bf16.mxu0 %v3928
        %4969 = vmatpush1.bf16.msra.mxu0 %v3927
        %4970 = vmatprep.subr.bf16.mxu0 %v3920
        %4971 = vmatpush1.bf16.msra.mxu0 %v3919
        %4972 = vmatprep.subr.bf16.mxu0 %v3912
        %4973 = vmatpush1.bf16.msra.mxu0 %v3911
        %4974 = vmatprep.subr.bf16.mxu0 %v3904
        %4975 = vmatpush1.bf16.msra.mxu0 %v3903
        %4976 = vmatprep.subr.bf16.mxu0 %v3896
        %4977 = vmatpush1.bf16.msra.mxu0 %v3895
        %4978 = vmatprep.subr.bf16.mxu0 %v3888
        %4979 = vmatpush1.bf16.msra.mxu0 %v3887
        %4980 = vmatprep.subr.bf16.mxu0 %v3880
        %4981 = vmatpush1.bf16.msra.mxu0 %v3879
        %4982 = vmatprep.subr.bf16.mxu0 %v4000
        %4983 = vmatpush2.bf16.msra.mxu0 %v3999
        %4984 = vmatprep.subr.bf16.mxu0 %v3992
        %4985 = vmatpush2.bf16.msra.mxu0 %v3991
        %4986 = vmatprep.subr.bf16.mxu0 %v3984
        %4987 = vmatpush2.bf16.msra.mxu0 %v3983
        %4988 = vmatprep.subr.bf16.mxu0 %v3976
        %4989 = vmatpush2.bf16.msra.mxu0 %v3975
        %4990 = vmatprep.subr.bf16.mxu0 %v3968
        %4991 = vmatpush2.bf16.msra.mxu0 %v3967
        %4992 = vmatprep.subr.bf16.mxu0 %v3960
        %4993 = vmatpush2.bf16.msra.mxu0 %v3959
        %4994 = vmatprep.subr.bf16.mxu0 %v3952
        %4995 = vmatpush2.bf16.msra.mxu0 %v3951
        %4996 = vmatprep.subr.bf16.mxu0 %v3944
        %4997 = vmatpush2.bf16.msra.mxu0 %v3943
        %4998 = vmatprep.mubr.bf16.mxu0 %v1946
        %4999 = vmatmul.mubr.bf16.gmra.mxu0 %v1944
        %v5000 = vpop.f32.mrf.mxu0
        %v5001 = vadd.f32 %v4960, %v5000
        %v5002 = vpop.f32.mrf.mxu0
        %v5003 = vadd.f32 %v4962, %v5002
        %v5004 = vpop.f32.mrf.mxu0
        %v5005 = vpop.f32.mrf.mxu0
        %5006 = vdwg.mxu0
        %5007 = vmatprep.subr.bf16.mxu0 %v3554
        %5008 = vmatpush1.bf16.msra.mxu0 %v3553
        %5009 = vmatprep.subr.bf16.mxu0 %v3546
        %5010 = vmatpush1.bf16.msra.mxu0 %v3545
        %5011 = vmatprep.subr.bf16.mxu0 %v3538
        %5012 = vmatpush1.bf16.msra.mxu0 %v3537
        %5013 = vmatprep.subr.bf16.mxu0 %v3530
        %5014 = vmatpush1.bf16.msra.mxu0 %v3529
        %5015 = vmatprep.subr.bf16.mxu0 %v3522
        %5016 = vmatpush1.bf16.msra.mxu0 %v3521
        %5017 = vmatprep.subr.bf16.mxu0 %v3514
        %5018 = vmatpush1.bf16.msra.mxu0 %v3513
        %5019 = vmatprep.subr.bf16.mxu0 %v3506
        %5020 = vmatpush1.bf16.msra.mxu0 %v3505
        %5021 = vmatprep.subr.bf16.mxu0 %v3498
        %5022 = vmatpush1.bf16.msra.mxu0 %v3497
        %5023 = vmatprep.subr.bf16.mxu0 %v3618
        %5024 = vmatpush2.bf16.msra.mxu0 %v3617
        %5025 = vmatprep.subr.bf16.mxu0 %v3610
        %5026 = vmatpush2.bf16.msra.mxu0 %v3609
        %5027 = vmatprep.subr.bf16.mxu0 %v3602
        %5028 = vmatpush2.bf16.msra.mxu0 %v3601
        %5029 = vmatprep.subr.bf16.mxu0 %v3594
        %5030 = vmatpush2.bf16.msra.mxu0 %v3593
        %5031 = vmatprep.subr.bf16.mxu0 %v3586
        %5032 = vmatpush2.bf16.msra.mxu0 %v3585
        %5033 = vmatprep.subr.bf16.mxu0 %v3578
        %5034 = vmatpush2.bf16.msra.mxu0 %v3577
        %5035 = vmatprep.subr.bf16.mxu0 %v3570
        %5036 = vmatpush2.bf16.msra.mxu0 %v3569
        %5037 = vmatprep.subr.bf16.mxu0 %v3562
        %5038 = vmatpush2.bf16.msra.mxu0 %v3561
        %5039 = vmatprep.mubr.bf16.mxu0 %v1935
        %5040 = vmatmul.mubr.bf16.gmra.mxu0 %v1921
        %v5041 = vpop.f32.mrf.mxu0
        %v5042 = vadd.f32 %v1884, %v5041
        %v5043 = vpop.f32.mrf.mxu0
        %v5044 = vadd.f32 %v1888, %v5043
        %v5045 = vpop.f32.mrf.mxu0
        %v5046 = vpop.f32.mrf.mxu0
        %5047 = vdwg.mxu0
        %5048 = vmatprep.subr.bf16.mxu0 %v3682
        %5049 = vmatpush1.bf16.msra.mxu0 %v3681
        %5050 = vmatprep.subr.bf16.mxu0 %v3674
        %5051 = vmatpush1.bf16.msra.mxu0 %v3673
        %5052 = vmatprep.subr.bf16.mxu0 %v3666
        %5053 = vmatpush1.bf16.msra.mxu0 %v3665
        %5054 = vmatprep.subr.bf16.mxu0 %v3658
        %5055 = vmatpush1.bf16.msra.mxu0 %v3657
        %5056 = vmatprep.subr.bf16.mxu0 %v3650
        %5057 = vmatpush1.bf16.msra.mxu0 %v3649
        %5058 = vmatprep.subr.bf16.mxu0 %v3642
        %5059 = vmatpush1.bf16.msra.mxu0 %v3641
        %5060 = vmatprep.subr.bf16.mxu0 %v3634
        %5061 = vmatpush1.bf16.msra.mxu0 %v3633
        %5062 = vmatprep.subr.bf16.mxu0 %v3626
        %5063 = vmatpush1.bf16.msra.mxu0 %v3625
        %5064 = vmatprep.subr.bf16.mxu0 %v3746
        %5065 = vmatpush2.bf16.msra.mxu0 %v3745
        %5066 = vmatprep.subr.bf16.mxu0 %v3738
        %5067 = vmatpush2.bf16.msra.mxu0 %v3737
        %5068 = vmatprep.subr.bf16.mxu0 %v3730
        %5069 = vmatpush2.bf16.msra.mxu0 %v3729
        %5070 = vmatprep.subr.bf16.mxu0 %v3722
        %5071 = vmatpush2.bf16.msra.mxu0 %v3721
        %5072 = vmatprep.subr.bf16.mxu0 %v3714
        %5073 = vmatpush2.bf16.msra.mxu0 %v3713
        %5074 = vmatprep.subr.bf16.mxu0 %v3706
        %5075 = vmatpush2.bf16.msra.mxu0 %v3705
        %5076 = vmatprep.subr.bf16.mxu0 %v3698
        %5077 = vmatpush2.bf16.msra.mxu0 %v3697
        %5078 = vmatprep.subr.bf16.mxu0 %v3690
        %5079 = vmatpush2.bf16.msra.mxu0 %v3689
        %5080 = vmatprep.mubr.bf16.mxu0 %v1945
        %5081 = vmatmul.mubr.bf16.gmra.mxu0 %v1943
        %v5082 = vpop.f32.mrf.mxu0
        %v5083 = vadd.f32 %v5042, %v5082
        %v5084 = vpop.f32.mrf.mxu0
        %v5085 = vadd.f32 %v5044, %v5084
        %v5086 = vpop.f32.mrf.mxu0
        %v5087 = vpop.f32.mrf.mxu0
        %5088 = vdwg.mxu0
        %5089 = vmatprep.subr.bf16.mxu0 %v3810
        %5090 = vmatpush1.bf16.msra.mxu0 %v3809
        %5091 = vmatprep.subr.bf16.mxu0 %v3802
        %5092 = vmatpush1.bf16.msra.mxu0 %v3801
        %5093 = vmatprep.subr.bf16.mxu0 %v3794
        %5094 = vmatpush1.bf16.msra.mxu0 %v3793
        %5095 = vmatprep.subr.bf16.mxu0 %v3786
        %5096 = vmatpush1.bf16.msra.mxu0 %v3785
        %5097 = vmatprep.subr.bf16.mxu0 %v3778
        %5098 = vmatpush1.bf16.msra.mxu0 %v3777
        %5099 = vmatprep.subr.bf16.mxu0 %v3770
        %5100 = vmatpush1.bf16.msra.mxu0 %v3769
        %5101 = vmatprep.subr.bf16.mxu0 %v3762
        %5102 = vmatpush1.bf16.msra.mxu0 %v3761
        %5103 = vmatprep.subr.bf16.mxu0 %v3754
        %5104 = vmatpush1.bf16.msra.mxu0 %v3753
        %5105 = vmatprep.subr.bf16.mxu0 %v3874
        %5106 = vmatpush2.bf16.msra.mxu0 %v3873
        %5107 = vmatprep.subr.bf16.mxu0 %v3866
        %5108 = vmatpush2.bf16.msra.mxu0 %v3865
        %5109 = vmatprep.subr.bf16.mxu0 %v3858
        %5110 = vmatpush2.bf16.msra.mxu0 %v3857
        %5111 = vmatprep.subr.bf16.mxu0 %v3850
        %5112 = vmatpush2.bf16.msra.mxu0 %v3849
        %5113 = vmatprep.subr.bf16.mxu0 %v3842
        %5114 = vmatpush2.bf16.msra.mxu0 %v3841
        %5115 = vmatprep.subr.bf16.mxu0 %v3834
        %5116 = vmatpush2.bf16.msra.mxu0 %v3833
        %5117 = vmatprep.subr.bf16.mxu0 %v3826
        %5118 = vmatpush2.bf16.msra.mxu0 %v3825
        %5119 = vmatprep.subr.bf16.mxu0 %v3818
        %5120 = vmatpush2.bf16.msra.mxu0 %v3817
        %5121 = vmatprep.mubr.bf16.mxu0 %v1942
        %5122 = vmatmul.mubr.bf16.gmra.mxu0 %v1928
        %v5123 = vpop.f32.mrf.mxu0
        %v5124 = vadd.f32 %v5083, %v5123
        %v5125 = vpop.f32.mrf.mxu0
        %v5126 = vadd.f32 %v5085, %v5125
        %v5127 = vpop.f32.mrf.mxu0
        %v5128 = vpop.f32.mrf.mxu0
        %5129 = vdwg.mxu0
        %5130 = vmatprep.subr.bf16.mxu0 %v3938
        %5131 = vmatpush1.bf16.msra.mxu0 %v3937
        %5132 = vmatprep.subr.bf16.mxu0 %v3930
        %5133 = vmatpush1.bf16.msra.mxu0 %v3929
        %5134 = vmatprep.subr.bf16.mxu0 %v3922
        %5135 = vmatpush1.bf16.msra.mxu0 %v3921
        %5136 = vmatprep.subr.bf16.mxu0 %v3914
        %5137 = vmatpush1.bf16.msra.mxu0 %v3913
        %5138 = vmatprep.subr.bf16.mxu0 %v3906
        %5139 = vmatpush1.bf16.msra.mxu0 %v3905
        %5140 = vmatprep.subr.bf16.mxu0 %v3898
        %5141 = vmatpush1.bf16.msra.mxu0 %v3897
        %5142 = vmatprep.subr.bf16.mxu0 %v3890
        %5143 = vmatpush1.bf16.msra.mxu0 %v3889
        %5144 = vmatprep.subr.bf16.mxu0 %v3882
        %5145 = vmatpush1.bf16.msra.mxu0 %v3881
        %5146 = vmatprep.subr.bf16.mxu0 %v4002
        %5147 = vmatpush2.bf16.msra.mxu0 %v4001
        %5148 = vmatprep.subr.bf16.mxu0 %v3994
        %5149 = vmatpush2.bf16.msra.mxu0 %v3993
        %5150 = vmatprep.subr.bf16.mxu0 %v3986
        %5151 = vmatpush2.bf16.msra.mxu0 %v3985
        %5152 = vmatprep.subr.bf16.mxu0 %v3978
        %5153 = vmatpush2.bf16.msra.mxu0 %v3977
        %5154 = vmatprep.subr.bf16.mxu0 %v3970
        %5155 = vmatpush2.bf16.msra.mxu0 %v3969
        %5156 = vmatprep.subr.bf16.mxu0 %v3962
        %5157 = vmatpush2.bf16.msra.mxu0 %v3961
        %5158 = vmatprep.subr.bf16.mxu0 %v3954
        %5159 = vmatpush2.bf16.msra.mxu0 %v3953
        %5160 = vmatprep.subr.bf16.mxu0 %v3946
        %5161 = vmatpush2.bf16.msra.mxu0 %v3945
        %5162 = vmatprep.mubr.bf16.mxu0 %v1946
        %5163 = vmatmul.mubr.bf16.gmra.mxu0 %v1944
        %v5164 = vpop.f32.mrf.mxu0
        %v5165 = vadd.f32 %v5124, %v5164
        %v5166 = vpop.f32.mrf.mxu0
        %v5167 = vadd.f32 %v5126, %v5166
        %v5168 = vpop.f32.mrf.mxu0
        %v5169 = vpop.f32.mrf.mxu0
        %5170 = vdwg.mxu0
        %v5171 = vxor.u32 %v4673, 2147483648
        %v5172 = vxor.u32 %v4675, 2147483648
        %v5173 = vxor.u32 %v4837, 2147483648
        %v5174 = vxor.u32 %v4839, 2147483648
        %v5175 = vxor.u32 %v5001, 2147483648
        %v5176 = vxor.u32 %v5003, 2147483648
        %v5177 = vxor.u32 %v5165, 2147483648
        %v5178 = vxor.u32 %v5167, 2147483648
        %v5179 = vmul.f32 %v5171, 1.442695
        %v5180 = vpow.pop %v5179
        %v5181 = vmul.f32 %v5172, 1.442695
        %v5182 = vpow.pop %v5181
        %v5183 = vmul.f32 %v5173, 1.442695
        %v5184 = vpow.pop %v5183
        %v5185 = vmul.f32 %v5174, 1.442695
        %v5186 = vpow.pop %v5185
        %v5187 = vmul.f32 %v5175, 1.442695
        %v5188 = vpow.pop %v5187
        %v5189 = vmul.f32 %v5176, 1.442695
        %v5190 = vpow.pop %v5189
        %v5191 = vmul.f32 %v5177, 1.442695
        %v5192 = vpow.pop %v5191
        %v5193 = vmul.f32 %v5178, 1.442695
        %v5194 = vpow.pop %v5193
        %v5195 = vadd.f32 %v5180, 1.0
        %v5196 = vadd.f32 %v5182, 1.0
        %v5197 = vadd.f32 %v5184, 1.0
        %v5198 = vadd.f32 %v5186, 1.0
        %v5199 = vadd.f32 %v5188, 1.0
        %v5200 = vadd.f32 %v5190, 1.0
        %v5201 = vadd.f32 %v5192, 1.0
        %v5202 = vadd.f32 %v5194, 1.0
        %v5203 = vrcp.pop %v5195
        %v5204 = vmul.f32 1.0, %v5203
        %v5205 = vrcp.pop %v5196
        %v5206 = vmul.f32 1.0, %v5205
        %v5207 = vrcp.pop %v5197
        %v5208 = vmul.f32 1.0, %v5207
        %v5209 = vrcp.pop %v5198
        %v5210 = vmul.f32 1.0, %v5209
        %v5211 = vrcp.pop %v5199
        %v5212 = vmul.f32 1.0, %v5211
        %v5213 = vrcp.pop %v5200
        %v5214 = vmul.f32 1.0, %v5213
        %v5215 = vrcp.pop %v5201
        %v5216 = vmul.f32 1.0, %v5215
        %v5217 = vrcp.pop %v5202
        %v5218 = vmul.f32 1.0, %v5217
        %v5219 = vmul.f32 %v4673, %v5204
        %v5220 = vmul.f32 %v4675, %v5206
        %v5221 = vmul.f32 %v4837, %v5208
        %v5222 = vmul.f32 %v4839, %v5210
        %v5223 = vmul.f32 %v5001, %v5212
        %v5224 = vmul.f32 %v5003, %v5214
        %v5225 = vmul.f32 %v5165, %v5216
        %v5226 = vmul.f32 %v5167, %v5218
        %v5227 = vld [vmem:[#allocation3] sm:$0x3]
        %v5228 = vld [vmem:[%s1327] sm:$0xff]
        %v5229 = vld [vmem:[%s1327 + $0x8] sm:$0xff]
        %v5230 = vld [vmem:[%s1327 + $0x10] sm:$0xff]
        %v5231 = vld [vmem:[%s1327 + $0x18] sm:$0xff]
        %v5232 = vld [vmem:[%s1327 + $0x20] sm:$0xff]
        %v5233 = vld [vmem:[%s1327 + $0x28] sm:$0xff]
        %v5234 = vld [vmem:[%s1327 + $0x30] sm:$0xff]
        %v5235 = vld [vmem:[%s1327 + $0x38] sm:$0xff]
        %v5236 = vld [vmem:[%s1327 + $0x40] sm:$0xff]
        %v5237 = vld [vmem:[%s1327 + $0x48] sm:$0xff]
        %v5238 = vld [vmem:[%s1327 + $0x50] sm:$0xff]
        %v5239 = vld [vmem:[%s1327 + $0x58] sm:$0xff]
        %v5240 = vld [vmem:[%s1327 + $0x60] sm:$0xff]
        %v5241 = vld [vmem:[%s1327 + $0x68] sm:$0xff]
        %v5242 = vld [vmem:[%s1327 + $0x70] sm:$0xff]
        %v5243 = vld [vmem:[%s1327 + $0x78] sm:$0xff]
        %v5244 = vld [vmem:[%s1327 + $0x80] sm:$0xff]
        %v5245 = vld [vmem:[%s1327 + $0x88] sm:$0xff]
        %v5246 = vld [vmem:[%s1327 + $0x90] sm:$0xff]
        %v5247 = vld [vmem:[%s1327 + $0x98] sm:$0xff]
        %v5248 = vld [vmem:[%s1327 + $0xa0] sm:$0xff]
        %v5249 = vld [vmem:[%s1327 + $0xa8] sm:$0xff]
        %v5250 = vld [vmem:[%s1327 + $0xb0] sm:$0xff]
        %v5251 = vld [vmem:[%s1327 + $0xb8] sm:$0xff]
        %v5252 = vld [vmem:[%s1327 + $0xc0] sm:$0xff]
        %v5253 = vld [vmem:[%s1327 + $0xc8] sm:$0xff]
        %v5254 = vld [vmem:[%s1327 + $0xd0] sm:$0xff]
        %v5255 = vld [vmem:[%s1327 + $0xd8] sm:$0xff]
        %v5256 = vld [vmem:[%s1327 + $0xe0] sm:$0xff]
        %v5257 = vld [vmem:[%s1327 + $0xe8] sm:$0xff]
        %v5258 = vld [vmem:[%s1327 + $0xf0] sm:$0xff]
        %v5259 = vld [vmem:[%s1327 + $0xf8] sm:$0xff]
        %v5260 = vld [vmem:[%s1327 + $0x100] sm:$0xff]
        %v5261 = vld [vmem:[%s1327 + $0x108] sm:$0xff]
        %v5262 = vld [vmem:[%s1327 + $0x110] sm:$0xff]
        %v5263 = vld [vmem:[%s1327 + $0x118] sm:$0xff]
        %v5264 = vld [vmem:[%s1327 + $0x120] sm:$0xff]
        %v5265 = vld [vmem:[%s1327 + $0x128] sm:$0xff]
        %v5266 = vld [vmem:[%s1327 + $0x130] sm:$0xff]
        %v5267 = vld [vmem:[%s1327 + $0x138] sm:$0xff]
        %v5268 = vld [vmem:[%s1327 + $0x140] sm:$0xff]
        %v5269 = vld [vmem:[%s1327 + $0x148] sm:$0xff]
        %v5270 = vld [vmem:[%s1327 + $0x150] sm:$0xff]
        %v5271 = vld [vmem:[%s1327 + $0x158] sm:$0xff]
        %v5272 = vld [vmem:[%s1327 + $0x160] sm:$0xff]
        %v5273 = vld [vmem:[%s1327 + $0x168] sm:$0xff]
        %v5274 = vld [vmem:[%s1327 + $0x170] sm:$0xff]
        %v5275 = vld [vmem:[%s1327 + $0x178] sm:$0xff]
        %v5276 = vld [vmem:[%s1327 + $0x180] sm:$0xff]
        %v5277 = vld [vmem:[%s1327 + $0x188] sm:$0xff]
        %v5278 = vld [vmem:[%s1327 + $0x190] sm:$0xff]
        %v5279 = vld [vmem:[%s1327 + $0x198] sm:$0xff]
        %v5280 = vld [vmem:[%s1327 + $0x1a0] sm:$0xff]
        %v5281 = vld [vmem:[%s1327 + $0x1a8] sm:$0xff]
        %v5282 = vld [vmem:[%s1327 + $0x1b0] sm:$0xff]
        %v5283 = vld [vmem:[%s1327 + $0x1b8] sm:$0xff]
        %v5284 = vld [vmem:[%s1327 + $0x1c0] sm:$0xff]
        %v5285 = vld [vmem:[%s1327 + $0x1c8] sm:$0xff]
        %v5286 = vld [vmem:[%s1327 + $0x1d0] sm:$0xff]
        %v5287 = vld [vmem:[%s1327 + $0x1d8] sm:$0xff]
        %v5288 = vld [vmem:[%s1327 + $0x1e0] sm:$0xff]
        %v5289 = vld [vmem:[%s1327 + $0x1e8] sm:$0xff]
        %v5290 = vld [vmem:[%s1327 + $0x1f0] sm:$0xff]
        %v5291 = vld [vmem:[%s1327 + $0x1f8] sm:$0xff]
        %v5292 = vld [vmem:[%s1327 + $0x200] sm:$0xff]
        %v5293 = vld [vmem:[%s1327 + $0x208] sm:$0xff]
        %v5294 = vld [vmem:[%s1327 + $0x210] sm:$0xff]
        %v5295 = vld [vmem:[%s1327 + $0x218] sm:$0xff]
        %v5296 = vld [vmem:[%s1327 + $0x220] sm:$0xff]
        %v5297 = vld [vmem:[%s1327 + $0x228] sm:$0xff]
        %v5298 = vld [vmem:[%s1327 + $0x230] sm:$0xff]
        %v5299 = vld [vmem:[%s1327 + $0x238] sm:$0xff]
        %v5300 = vld [vmem:[%s1327 + $0x240] sm:$0xff]
        %v5301 = vld [vmem:[%s1327 + $0x248] sm:$0xff]
        %v5302 = vld [vmem:[%s1327 + $0x250] sm:$0xff]
        %v5303 = vld [vmem:[%s1327 + $0x258] sm:$0xff]
        %v5304 = vld [vmem:[%s1327 + $0x260] sm:$0xff]
        %v5305 = vld [vmem:[%s1327 + $0x268] sm:$0xff]
        %v5306 = vld [vmem:[%s1327 + $0x270] sm:$0xff]
        %v5307 = vld [vmem:[%s1327 + $0x278] sm:$0xff]
        %v5308 = vld [vmem:[%s1327 + $0x280] sm:$0xff]
        %v5309 = vld [vmem:[%s1327 + $0x288] sm:$0xff]
        %v5310 = vld [vmem:[%s1327 + $0x290] sm:$0xff]
        %v5311 = vld [vmem:[%s1327 + $0x298] sm:$0xff]
        %v5312 = vld [vmem:[%s1327 + $0x2a0] sm:$0xff]
        %v5313 = vld [vmem:[%s1327 + $0x2a8] sm:$0xff]
        %v5314 = vld [vmem:[%s1327 + $0x2b0] sm:$0xff]
        %v5315 = vld [vmem:[%s1327 + $0x2b8] sm:$0xff]
        %v5316 = vld [vmem:[%s1327 + $0x2c0] sm:$0xff]
        %v5317 = vld [vmem:[%s1327 + $0x2c8] sm:$0xff]
        %v5318 = vld [vmem:[%s1327 + $0x2d0] sm:$0xff]
        %v5319 = vld [vmem:[%s1327 + $0x2d8] sm:$0xff]
        %v5320 = vld [vmem:[%s1327 + $0x2e0] sm:$0xff]
        %v5321 = vld [vmem:[%s1327 + $0x2e8] sm:$0xff]
        %v5322 = vld [vmem:[%s1327 + $0x2f0] sm:$0xff]
        %v5323 = vld [vmem:[%s1327 + $0x2f8] sm:$0xff]
        %v5324 = vld [vmem:[%s1327 + $0x300] sm:$0xff]
        %v5325 = vld [vmem:[%s1327 + $0x308] sm:$0xff]
        %v5326 = vld [vmem:[%s1327 + $0x310] sm:$0xff]
        %v5327 = vld [vmem:[%s1327 + $0x318] sm:$0xff]
        %v5328 = vld [vmem:[%s1327 + $0x320] sm:$0xff]
        %v5329 = vld [vmem:[%s1327 + $0x328] sm:$0xff]
        %v5330 = vld [vmem:[%s1327 + $0x330] sm:$0xff]
        %v5331 = vld [vmem:[%s1327 + $0x338] sm:$0xff]
        %v5332 = vld [vmem:[%s1327 + $0x340] sm:$0xff]
        %v5333 = vld [vmem:[%s1327 + $0x348] sm:$0xff]
        %v5334 = vld [vmem:[%s1327 + $0x350] sm:$0xff]
        %v5335 = vld [vmem:[%s1327 + $0x358] sm:$0xff]
        %v5336 = vld [vmem:[%s1327 + $0x360] sm:$0xff]
        %v5337 = vld [vmem:[%s1327 + $0x368] sm:$0xff]
        %v5338 = vld [vmem:[%s1327 + $0x370] sm:$0xff]
        %v5339 = vld [vmem:[%s1327 + $0x378] sm:$0xff]
        %v5340 = vld [vmem:[%s1327 + $0x380] sm:$0xff]
        %v5341 = vld [vmem:[%s1327 + $0x388] sm:$0xff]
        %v5342 = vld [vmem:[%s1327 + $0x390] sm:$0xff]
        %v5343 = vld [vmem:[%s1327 + $0x398] sm:$0xff]
        %v5344 = vld [vmem:[%s1327 + $0x3a0] sm:$0xff]
        %v5345 = vld [vmem:[%s1327 + $0x3a8] sm:$0xff]
        %v5346 = vld [vmem:[%s1327 + $0x3b0] sm:$0xff]
        %v5347 = vld [vmem:[%s1327 + $0x3b8] sm:$0xff]
        %v5348 = vld [vmem:[%s1327 + $0x3c0] sm:$0xff]
        %v5349 = vld [vmem:[%s1327 + $0x3c8] sm:$0xff]
        %v5350 = vld [vmem:[%s1327 + $0x3d0] sm:$0xff]
        %v5351 = vld [vmem:[%s1327 + $0x3d8] sm:$0xff]
        %v5352 = vld [vmem:[%s1327 + $0x3e0] sm:$0xff]
        %v5353 = vld [vmem:[%s1327 + $0x3e8] sm:$0xff]
        %v5354 = vld [vmem:[%s1327 + $0x3f0] sm:$0xff]
        %v5355 = vld [vmem:[%s1327 + $0x3f8] sm:$0xff]
        %5356 = vmatprep.subr.mxu0 0.0
        %5357 = vmatpush1.msra.mxu0 %v5243
        %5358 = vmatprep.subr.mxu0 0.0
        %5359 = vmatpush1.msra.mxu0 %v5242
        %5360 = vmatprep.subr.mxu0 0.0
        %5361 = vmatpush1.msra.mxu0 %v5241
        %5362 = vmatprep.subr.mxu0 0.0
        %5363 = vmatpush1.msra.mxu0 %v5240
        %5364 = vmatprep.subr.mxu0 0.0
        %5365 = vmatpush1.msra.mxu0 %v5239
        %5366 = vmatprep.subr.mxu0 0.0
        %5367 = vmatpush1.msra.mxu0 %v5238
        %5368 = vmatprep.subr.mxu0 0.0
        %5369 = vmatpush1.msra.mxu0 %v5237
        %5370 = vmatprep.subr.mxu0 0.0
        %5371 = vmatpush1.msra.mxu0 %v5236
        %5372 = vmatprep.subr.mxu0 0.0
        %5373 = vmatpush1.msra.mxu0 %v5235
        %5374 = vmatprep.subr.mxu0 0.0
        %5375 = vmatpush1.msra.mxu0 %v5234
        %5376 = vmatprep.subr.mxu0 0.0
        %5377 = vmatpush1.msra.mxu0 %v5233
        %5378 = vmatprep.subr.mxu0 0.0
        %5379 = vmatpush1.msra.mxu0 %v5232
        %5380 = vmatprep.subr.mxu0 0.0
        %5381 = vmatpush1.msra.mxu0 %v5231
        %5382 = vmatprep.subr.mxu0 0.0
        %5383 = vmatpush1.msra.mxu0 %v5230
        %5384 = vmatprep.subr.mxu0 0.0
        %5385 = vmatpush1.msra.mxu0 %v5229
        %5386 = vmatprep.subr.mxu0 0.0
        %5387 = vmatpush1.msra.mxu0 %v5228
        %5388 = vmatprep.subr.mxu0 0.0
        %5389 = vmatpush2.msra.mxu0 %v5259
        %5390 = vmatprep.subr.mxu0 0.0
        %5391 = vmatpush2.msra.mxu0 %v5258
        %5392 = vmatprep.subr.mxu0 0.0
        %5393 = vmatpush2.msra.mxu0 %v5257
        %5394 = vmatprep.subr.mxu0 0.0
        %5395 = vmatpush2.msra.mxu0 %v5256
        %5396 = vmatprep.subr.mxu0 0.0
        %5397 = vmatpush2.msra.mxu0 %v5255
        %5398 = vmatprep.subr.mxu0 0.0
        %5399 = vmatpush2.msra.mxu0 %v5254
        %5400 = vmatprep.subr.mxu0 0.0
        %5401 = vmatpush2.msra.mxu0 %v5253
        %5402 = vmatprep.subr.mxu0 0.0
        %5403 = vmatpush2.msra.mxu0 %v5252
        %5404 = vmatprep.subr.mxu0 0.0
        %5405 = vmatpush2.msra.mxu0 %v5251
        %5406 = vmatprep.subr.mxu0 0.0
        %5407 = vmatpush2.msra.mxu0 %v5250
        %5408 = vmatprep.subr.mxu0 0.0
        %5409 = vmatpush2.msra.mxu0 %v5249
        %5410 = vmatprep.subr.mxu0 0.0
        %5411 = vmatpush2.msra.mxu0 %v5248
        %5412 = vmatprep.subr.mxu0 0.0
        %5413 = vmatpush2.msra.mxu0 %v5247
        %5414 = vmatprep.subr.mxu0 0.0
        %5415 = vmatpush2.msra.mxu0 %v5246
        %5416 = vmatprep.subr.mxu0 0.0
        %5417 = vmatpush2.msra.mxu0 %v5245
        %5418 = vmatprep.subr.mxu0 0.0
        %5419 = vmatpush2.msra.mxu0 %v5244
        %5420 = vmatprep.mubr.f32.mxu0 %v5220
        %5421 = vmatmul.mubr.f32.gmra.mxu0 %v5219
        %v5422 = vpop.f32.mrf.mxu0
        %v5423 = vadd.f32 0.0, %v5422
        %v5424 = vpop.f32.mrf.mxu0
        %5425 = vdwg.mxu0
        %5426 = vmatprep.subr.mxu0 0.0
        %5427 = vmatpush1.msra.mxu0 %v5275
        %5428 = vmatprep.subr.mxu0 0.0
        %5429 = vmatpush1.msra.mxu0 %v5274
        %5430 = vmatprep.subr.mxu0 0.0
        %5431 = vmatpush1.msra.mxu0 %v5273
        %5432 = vmatprep.subr.mxu0 0.0
        %5433 = vmatpush1.msra.mxu0 %v5272
        %5434 = vmatprep.subr.mxu0 0.0
        %5435 = vmatpush1.msra.mxu0 %v5271
        %5436 = vmatprep.subr.mxu0 0.0
        %5437 = vmatpush1.msra.mxu0 %v5270
        %5438 = vmatprep.subr.mxu0 0.0
        %5439 = vmatpush1.msra.mxu0 %v5269
        %5440 = vmatprep.subr.mxu0 0.0
        %5441 = vmatpush1.msra.mxu0 %v5268
        %5442 = vmatprep.subr.mxu0 0.0
        %5443 = vmatpush1.msra.mxu0 %v5267
        %5444 = vmatprep.subr.mxu0 0.0
        %5445 = vmatpush1.msra.mxu0 %v5266
        %5446 = vmatprep.subr.mxu0 0.0
        %5447 = vmatpush1.msra.mxu0 %v5265
        %5448 = vmatprep.subr.mxu0 0.0
        %5449 = vmatpush1.msra.mxu0 %v5264
        %5450 = vmatprep.subr.mxu0 0.0
        %5451 = vmatpush1.msra.mxu0 %v5263
        %5452 = vmatprep.subr.mxu0 0.0
        %5453 = vmatpush1.msra.mxu0 %v5262
        %5454 = vmatprep.subr.mxu0 0.0
        %5455 = vmatpush1.msra.mxu0 %v5261
        %5456 = vmatprep.subr.mxu0 0.0
        %5457 = vmatpush1.msra.mxu0 %v5260
        %5458 = vmatprep.subr.mxu0 0.0
        %5459 = vmatpush2.msra.mxu0 %v5291
        %5460 = vmatprep.subr.mxu0 0.0
        %5461 = vmatpush2.msra.mxu0 %v5290
        %5462 = vmatprep.subr.mxu0 0.0
        %5463 = vmatpush2.msra.mxu0 %v5289
        %5464 = vmatprep.subr.mxu0 0.0
        %5465 = vmatpush2.msra.mxu0 %v5288
        %5466 = vmatprep.subr.mxu0 0.0
        %5467 = vmatpush2.msra.mxu0 %v5287
        %5468 = vmatprep.subr.mxu0 0.0
        %5469 = vmatpush2.msra.mxu0 %v5286
        %5470 = vmatprep.subr.mxu0 0.0
        %5471 = vmatpush2.msra.mxu0 %v5285
        %5472 = vmatprep.subr.mxu0 0.0
        %5473 = vmatpush2.msra.mxu0 %v5284
        %5474 = vmatprep.subr.mxu0 0.0
        %5475 = vmatpush2.msra.mxu0 %v5283
        %5476 = vmatprep.subr.mxu0 0.0
        %5477 = vmatpush2.msra.mxu0 %v5282
        %5478 = vmatprep.subr.mxu0 0.0
        %5479 = vmatpush2.msra.mxu0 %v5281
        %5480 = vmatprep.subr.mxu0 0.0
        %5481 = vmatpush2.msra.mxu0 %v5280
        %5482 = vmatprep.subr.mxu0 0.0
        %5483 = vmatpush2.msra.mxu0 %v5279
        %5484 = vmatprep.subr.mxu0 0.0
        %5485 = vmatpush2.msra.mxu0 %v5278
        %5486 = vmatprep.subr.mxu0 0.0
        %5487 = vmatpush2.msra.mxu0 %v5277
        %5488 = vmatprep.subr.mxu0 0.0
        %5489 = vmatpush2.msra.mxu0 %v5276
        %5490 = vmatprep.mubr.f32.mxu0 %v5222
        %5491 = vmatmul.mubr.f32.gmra.mxu0 %v5221
        %v5492 = vpop.f32.mrf.mxu0
        %v5493 = vadd.f32 %v5423, %v5492
        %v5494 = vpop.f32.mrf.mxu0
        %5495 = vdwg.mxu0
        %5496 = vmatprep.subr.mxu0 0.0
        %5497 = vmatpush1.msra.mxu0 %v5307
        %5498 = vmatprep.subr.mxu0 0.0
        %5499 = vmatpush1.msra.mxu0 %v5306
        %5500 = vmatprep.subr.mxu0 0.0
        %5501 = vmatpush1.msra.mxu0 %v5305
        %5502 = vmatprep.subr.mxu0 0.0
        %5503 = vmatpush1.msra.mxu0 %v5304
        %5504 = vmatprep.subr.mxu0 0.0
        %5505 = vmatpush1.msra.mxu0 %v5303
        %5506 = vmatprep.subr.mxu0 0.0
        %5507 = vmatpush1.msra.mxu0 %v5302
        %5508 = vmatprep.subr.mxu0 0.0
        %5509 = vmatpush1.msra.mxu0 %v5301
        %5510 = vmatprep.subr.mxu0 0.0
        %5511 = vmatpush1.msra.mxu0 %v5300
        %5512 = vmatprep.subr.mxu0 0.0
        %5513 = vmatpush1.msra.mxu0 %v5299
        %5514 = vmatprep.subr.mxu0 0.0
        %5515 = vmatpush1.msra.mxu0 %v5298
        %5516 = vmatprep.subr.mxu0 0.0
        %5517 = vmatpush1.msra.mxu0 %v5297
        %5518 = vmatprep.subr.mxu0 0.0
        %5519 = vmatpush1.msra.mxu0 %v5296
        %5520 = vmatprep.subr.mxu0 0.0
        %5521 = vmatpush1.msra.mxu0 %v5295
        %5522 = vmatprep.subr.mxu0 0.0
        %5523 = vmatpush1.msra.mxu0 %v5294
        %5524 = vmatprep.subr.mxu0 0.0
        %5525 = vmatpush1.msra.mxu0 %v5293
        %5526 = vmatprep.subr.mxu0 0.0
        %5527 = vmatpush1.msra.mxu0 %v5292
        %5528 = vmatprep.subr.mxu0 0.0
        %5529 = vmatpush2.msra.mxu0 %v5323
        %5530 = vmatprep.subr.mxu0 0.0
        %5531 = vmatpush2.msra.mxu0 %v5322
        %5532 = vmatprep.subr.mxu0 0.0
        %5533 = vmatpush2.msra.mxu0 %v5321
        %5534 = vmatprep.subr.mxu0 0.0
        %5535 = vmatpush2.msra.mxu0 %v5320
        %5536 = vmatprep.subr.mxu0 0.0
        %5537 = vmatpush2.msra.mxu0 %v5319
        %5538 = vmatprep.subr.mxu0 0.0
        %5539 = vmatpush2.msra.mxu0 %v5318
        %5540 = vmatprep.subr.mxu0 0.0
        %5541 = vmatpush2.msra.mxu0 %v5317
        %5542 = vmatprep.subr.mxu0 0.0
        %5543 = vmatpush2.msra.mxu0 %v5316
        %5544 = vmatprep.subr.mxu0 0.0
        %5545 = vmatpush2.msra.mxu0 %v5315
        %5546 = vmatprep.subr.mxu0 0.0
        %5547 = vmatpush2.msra.mxu0 %v5314
        %5548 = vmatprep.subr.mxu0 0.0
        %5549 = vmatpush2.msra.mxu0 %v5313
        %5550 = vmatprep.subr.mxu0 0.0
        %5551 = vmatpush2.msra.mxu0 %v5312
        %5552 = vmatprep.subr.mxu0 0.0
        %5553 = vmatpush2.msra.mxu0 %v5311
        %5554 = vmatprep.subr.mxu0 0.0
        %5555 = vmatpush2.msra.mxu0 %v5310
        %5556 = vmatprep.subr.mxu0 0.0
        %5557 = vmatpush2.msra.mxu0 %v5309
        %5558 = vmatprep.subr.mxu0 0.0
        %5559 = vmatpush2.msra.mxu0 %v5308
        %5560 = vmatprep.mubr.f32.mxu0 %v5224
        %5561 = vmatmul.mubr.f32.gmra.mxu0 %v5223
        %v5562 = vpop.f32.mrf.mxu0
        %v5563 = vadd.f32 %v5493, %v5562
        %v5564 = vpop.f32.mrf.mxu0
        %5565 = vdwg.mxu0
        %5566 = vmatprep.subr.mxu0 0.0
        %5567 = vmatpush1.msra.mxu0 %v5339
        %5568 = vmatprep.subr.mxu0 0.0
        %5569 = vmatpush1.msra.mxu0 %v5338
        %5570 = vmatprep.subr.mxu0 0.0
        %5571 = vmatpush1.msra.mxu0 %v5337
        %5572 = vmatprep.subr.mxu0 0.0
        %5573 = vmatpush1.msra.mxu0 %v5336
        %5574 = vmatprep.subr.mxu0 0.0
        %5575 = vmatpush1.msra.mxu0 %v5335
        %5576 = vmatprep.subr.mxu0 0.0
        %5577 = vmatpush1.msra.mxu0 %v5334
        %5578 = vmatprep.subr.mxu0 0.0
        %5579 = vmatpush1.msra.mxu0 %v5333
        %5580 = vmatprep.subr.mxu0 0.0
        %5581 = vmatpush1.msra.mxu0 %v5332
        %5582 = vmatprep.subr.mxu0 0.0
        %5583 = vmatpush1.msra.mxu0 %v5331
        %5584 = vmatprep.subr.mxu0 0.0
        %5585 = vmatpush1.msra.mxu0 %v5330
        %5586 = vmatprep.subr.mxu0 0.0
        %5587 = vmatpush1.msra.mxu0 %v5329
        %5588 = vmatprep.subr.mxu0 0.0
        %5589 = vmatpush1.msra.mxu0 %v5328
        %5590 = vmatprep.subr.mxu0 0.0
        %5591 = vmatpush1.msra.mxu0 %v5327
        %5592 = vmatprep.subr.mxu0 0.0
        %5593 = vmatpush1.msra.mxu0 %v5326
        %5594 = vmatprep.subr.mxu0 0.0
        %5595 = vmatpush1.msra.mxu0 %v5325
        %5596 = vmatprep.subr.mxu0 0.0
        %5597 = vmatpush1.msra.mxu0 %v5324
        %5598 = vmatprep.subr.mxu0 0.0
        %5599 = vmatpush2.msra.mxu0 %v5355
        %5600 = vmatprep.subr.mxu0 0.0
        %5601 = vmatpush2.msra.mxu0 %v5354
        %5602 = vmatprep.subr.mxu0 0.0
        %5603 = vmatpush2.msra.mxu0 %v5353
        %5604 = vmatprep.subr.mxu0 0.0
        %5605 = vmatpush2.msra.mxu0 %v5352
        %5606 = vmatprep.subr.mxu0 0.0
        %5607 = vmatpush2.msra.mxu0 %v5351
        %5608 = vmatprep.subr.mxu0 0.0
        %5609 = vmatpush2.msra.mxu0 %v5350
        %5610 = vmatprep.subr.mxu0 0.0
        %5611 = vmatpush2.msra.mxu0 %v5349
        %5612 = vmatprep.subr.mxu0 0.0
        %5613 = vmatpush2.msra.mxu0 %v5348
        %5614 = vmatprep.subr.mxu0 0.0
        %5615 = vmatpush2.msra.mxu0 %v5347
        %5616 = vmatprep.subr.mxu0 0.0
        %5617 = vmatpush2.msra.mxu0 %v5346
        %5618 = vmatprep.subr.mxu0 0.0
        %5619 = vmatpush2.msra.mxu0 %v5345
        %5620 = vmatprep.subr.mxu0 0.0
        %5621 = vmatpush2.msra.mxu0 %v5344
        %5622 = vmatprep.subr.mxu0 0.0
        %5623 = vmatpush2.msra.mxu0 %v5343
        %5624 = vmatprep.subr.mxu0 0.0
        %5625 = vmatpush2.msra.mxu0 %v5342
        %5626 = vmatprep.subr.mxu0 0.0
        %5627 = vmatpush2.msra.mxu0 %v5341
        %5628 = vmatprep.subr.mxu0 0.0
        %5629 = vmatpush2.msra.mxu0 %v5340
        %5630 = vmatprep.mubr.f32.mxu0 %v5226
        %5631 = vmatmul.mubr.f32.gmra.mxu0 %v5225
        %v5632 = vpop.f32.mrf.mxu0
        %v5633 = vadd.f32 %v5563, %v5632
        %v5634 = vpop.f32.mrf.mxu0
        %5635 = vdwg.mxu0
        %v5636 = vadd.f32 %v5227, %v5633
        %vm5637 = vcmask 25600
        %5638 = vst.msk [vmem:[#allocation3] sm:$0x3] %vm5637, %v5636
        // Predicated region
        $region68: #{new_temporal_classifier_forward.1} parent=58 // pred_check
          %p5639 = pneg %p172
        $region69: #{new_temporal_classifier_forward.1} parent=58 // pred_check_branch
          %5641 = sbr.rel (%p5639) target = $region71
        $region70: #{new_temporal_classifier_forward.1} parent=58 // pred_region
          %s5643 = ssub.s32 32, 32
          %5644 = vsyncadd [#allocation4], %s5643
          %s5645 = smul.addr %s21, 32
          %s5646 = scalar_lea.hbm %s5, %s5645
          %s5648 = sshll.u32 [#allocation3], 4
          %s5649 = int_to_ptr.vmem [resolvable:$true] %s5648
          %5651 = dma.vmem_to_hbm [thread:$0]  %s5649, 32, %s5646, [#allocation4]
        $region71: #{new_temporal_classifier_forward.1} parent=58 // pred_fallthru
          _
        // Predicated region
        $region72: #{new_temporal_classifier_forward.1} parent=58 // pred_check
          %p5652 = pneg %p172
        $region73: #{new_temporal_classifier_forward.1} parent=58 // pred_check_branch
          %5654 = sbr.rel (%p5652) target = $region75
        $region74: #{new_temporal_classifier_forward.1} parent=58 // pred_region
          %5655 = dma.done [#allocation4], 32
        $region75: #{new_temporal_classifier_forward.1} parent=58 // pred_fallthru
          _
      $region59: #{new_temporal_classifier_forward.1} parent=5 // pred_fallthru
        _
      %p5656 = scmp.le.s32.totalorder 2, %s12
      // Predicated region
      $region76: #{new_temporal_classifier_forward.1} parent=5 // pred_check
        %p5657 = pneg %p5656
      $region77: #{new_temporal_classifier_forward.1} parent=5 // pred_check_branch
        %5659 = sbr.rel (%p5657) target = $region79
      $region78: #{new_temporal_classifier_forward.1} parent=5 // pred_region
        %s5660 = ssub.s32 %s12, 2
      $region79: #{new_temporal_classifier_forward.1} parent=5 // pred_fallthru
        _
    $region6: #{new_temporal_classifier_forward.1} parent=1 // loop_footer
      %s16 = sadd.s32 1, %s12
    $region7: #{new_temporal_classifier_forward.1} parent=1 // loop_footer_branch
      %11 = sbr.rel target = $region3
    $region8: #{new_temporal_classifier_forward.1} parent=1 // loop_exit
      _
    %5661 = vsyncpa [#allocation4], 1
    %s5662 = scalar_lea.sflag [#allocation4], 1
    %5663 = vsyncpa %s5662, 1

</llo_original>
